<compile_context>
chip_gen: v6e
topology: v6e:2x2x1
jax: 0.10.0
libtpu: 0.0.40
codegen_flags: <defaults>
</compile_context>

<pallas_src>
import math

import jax
import jax.numpy as jnp
from jax import lax
from jax.experimental import pallas as pl
from jax.experimental.pallas import tpu as pltpu


def _round_up(x, m):
    return ((x + m - 1) // m) * m


def _gelu_erf(y):
    """Exact (erf) GELU via A&S 7.1.26 (~1.5e-7 abs err on erf).  The divide is
    seeded with pl.reciprocal(approx=True) on the EUP + one Newton step."""
    a1, a2, a3, a4, a5 = (0.254829592, -0.284496736, 1.421413741,
                          -1.453152027, 1.061405429)
    p = 0.3275911
    z = y * 0.7071067811865476
    sgn = jnp.where(z >= 0.0, 1.0, -1.0)
    az = jnp.abs(z)
    den = 1.0 + p * az
    t = pl.reciprocal(den, approx=True)
    t = t * (2.0 - den * t)                     # Newton step -> ~f32 accuracy
    poly = ((((a5 * t + a4) * t + a3) * t + a2) * t + a1) * t
    erf = sgn * (1.0 - poly * jnp.exp(-az * az))
    return 0.5 * y * (1.0 + erf)


def basic_conv3d(x, weight, gamma, beta, running_mean, running_var,
                 *, stride=1, padding=0, eps=1e-3, depth_tile=8):
    """Fused Conv3d(bias=False) + BatchNorm3d(eval) + exact GELU.

    x: (N, Cin, D, H, W) f32, weight: (Cout, Cin, kD, kH, kW) f32.
    Returns (N, Cout, Do, Ho, Wo) f32 (PyTorch NCDHW convention).
    Compute uses bf16 MXU operands with f32 accumulation.
    """
    N, C, D, H, W = x.shape
    Cout, Cin, kD, kH, kW = weight.shape
    assert Cin == C
    s = int(stride)
    p = int(padding)

    Dp, Hp, Wp = D + 2 * p, H + 2 * p, W + 2 * p
    Do = (Dp - kD) // s + 1
    Ho = (Hp - kH) // s + 1
    Wo = (Wp - kW) // s + 1

    P = Hp * Wp                                   # flattened padded plane size
    Pout = _round_up(P, 128)                      # lane-dense output plane width
    max_off = (kH - 1) * Wp + (kW - 1)            # largest in-plane tap shift
    Pin = _round_up(Pout + max_off, 128)          # input plane width (+shift room)
    K2 = kH * kW * Cin                            # fused (kh,kw,cin) contraction

    # Output-depth rows per grid step; clamp so per-step VMEM stays modest.
    TD = max(1, min(int(depth_tile), Do))

    def _vmem_est(td):
        dwin = (td - 1) * s + kD
        return (dwin * Cin * Pin * 2              # bf16 depth window (1 buffer)
                + dwin * K2 * Pout * 4            # f32 patch slab
                + 2 * td * Cout * Pout * 4        # double-buffered output block
                + 2 * kD * Cout * K2 * 2          # bf16 weights (2 buffers)
                + 2 * Cout * 4 + (1 << 16))       # bias + slack

    while TD > 1 and _vmem_est(TD) > (24 << 20):
        TD -= 1

    NDt = pl.cdiv(Do, TD)
    Do_pad = NDt * TD
    Dwin = (TD - 1) * s + kD                      # input depth planes per step
    Dp_need = max(Dp, (Do_pad - 1) * s + kD)      # depth extent the taps may read

    # ---- input layout: (N, Dp_need, Cin, Pin) bf16, zero padded ----
    xb = x.astype(jnp.bfloat16)
    xp = jnp.pad(xb, ((0, 0), (0, 0), (p, p), (p, p), (p, p)))
    xp = xp.transpose(0, 2, 1, 3, 4).reshape(N, Dp, Cin, P)
    xp = jnp.pad(xp, ((0, 0), (0, Dp_need - Dp), (0, 0), (0, Pin - P)))

    # ---- fold BatchNorm (eval mode) into the weights + a bias shift ----
    scale = (gamma / jnp.sqrt(running_var + eps)).astype(jnp.float32)       # (Cout,)
    bias = (beta - running_mean * scale).reshape(Cout, 1).astype(jnp.float32)
    w_fused = weight.astype(jnp.float32) * scale[:, None, None, None, None]
    # (Cout, Cin, kD, kH, kW) -> (kD, Cout, kH, kW, Cin) -> (kD, Cout, K2), bf16
    w_fused = w_fused.transpose(2, 0, 3, 4, 1).reshape(kD, Cout, K2)
    w_fused = w_fused.astype(jnp.bfloat16)

    def kernel(x_hbm, w_ref, b_ref, o_ref, win_ref, patch_ref, sem):
        # x_hbm    : (N, Dp_need, Cin, Pin) bf16, HBM (pl.ANY)
        # w_ref    : (kD, Cout, K2) bf16      BN-scaled, tap-fused weights
        # b_ref    : (Cout, 1) f32            BN shift
        # o_ref    : (1, TD, Cout, Pout) f32  lane-dense output tile (also the acc)
        # win_ref  : (Dwin, Cin, Pin) bf16    manually DMA'd depth window
        # patch_ref: (Dwin, K2, Pout) f32     (kh,kw,cin)-fused patch slab
        n = pl.program_id(0)
        d0 = pl.program_id(1) * (TD * s)

        # Single-buffered windowed copy: only the Dwin planes this step needs.
        cp = pltpu.make_async_copy(
            x_hbm.at[n, pl.ds(d0, Dwin), :, :], win_ref, sem.at[0])
        cp.start()
        cp.wait()

        # Build the patch slab once per step; each input plane is reused by up
        # to kD output rows.  Row ordering (kh, kw, cin) matches w_fused.
        for d in range(Dwin):                                   # static unroll
            plane = win_ref[d]                                  # (Cin, Pin) bf16
            for kh in range(kH):
                for kw in range(kW):
                    off = kh * Wp + kw                          # static lane shift
                    r0 = (kh * kW + kw) * Cin
                    patch_ref[d, r0:r0 + Cin, :] = (
                        plane[:, off:off + Pout].astype(jnp.float32))

        w_kd = [w_ref[k] for k in range(kD)]                    # (Cout, K2) bf16

        # kD wide-K dots per output row, accumulated in f32 into the out block.
        for t in range(TD):                                     # static unroll
            acc = jnp.zeros((Cout, Pout), jnp.float32)
            for k in range(kD):
                rhs = patch_ref[t * s + k].astype(jnp.bfloat16)  # (K2, Pout)
                acc = acc + jnp.dot(w_kd[k], rhs,
                                    preferred_element_type=jnp.float32)
            o_ref[0, t] = acc                                    # pre-activation

        # One fused bias + GELU epilogue over the whole (TD, Cout, Pout) block.
        o_ref[...] = _gelu_erf(o_ref[...] + b_ref[...])

    vmem_limit = int(min(max(2 * _vmem_est(TD), 32 << 20), 100 << 20))

    out = pl.pallas_call(
        kernel,
        out_shape=jax.ShapeDtypeStruct((N, Do_pad, Cout, Pout), jnp.float32),
        grid_spec=pltpu.PrefetchScalarGridSpec(
            num_scalar_prefetch=0,
            grid=(N, NDt),
            in_specs=[
                pl.BlockSpec(memory_space=pl.ANY),                       # raw HBM
                pl.BlockSpec((kD, Cout, K2), lambda n, j: (0, 0, 0)),
                pl.BlockSpec((Cout, 1), lambda n, j: (0, 0)),
            ],
            out_specs=pl.BlockSpec((1, TD, Cout, Pout),
                                   lambda n, j: (n, j, 0, 0)),
            scratch_shapes=[
                pltpu.VMEM((Dwin, Cin, Pin), jnp.bfloat16),
                pltpu.VMEM((Dwin, K2, Pout), jnp.float32),
                pltpu.SemaphoreType.DMA((1,)),
            ],
        ),
        compiler_params=pltpu.CompilerParams(
            dimension_semantics=("parallel", "parallel"),
            vmem_limit_bytes=vmem_limit),
    )(xp, w_fused, bias)

    # Drop depth padding, lane padding and the (stride-subsampled) plane border.
    # This transpose fuses with the mandatory unflatten/stride-slice pass.
    out = out[:, :Do, :, :P].reshape(N, Do, Cout, Hp, Wp)
    out = out[:, :, :, 0:(Ho - 1) * s + 1:s, 0:(Wo - 1) * s + 1:s]
    return out.transpose(0, 2, 1, 3, 4)            # (N, Cout, Do, Ho, Wo)


if __name__ == "__main__":
    key = jax.random.PRNGKey(0)
    k1, k2, k3, k4, k5, k6 = jax.random.split(key, 6)

    # BasicConv3d(in_planes=4, out_planes=8, kernel_size=3, stride=1, padding=1)
    N, Cin, D, H, W = 2, 4, 8, 8, 8
    Cout, ks, stride, padding = 8, 3, 1, 1
    eps = 1e-3

    x = jax.random.normal(k1, (N, Cin, D, H, W), jnp.float32)
    fan_in = Cin * ks ** 3
    weight = jax.random.normal(k2, (Cout, Cin, ks, ks, ks), jnp.float32) / math.sqrt(fan_in)
    gamma = 1.0 + 0.1 * jax.random.normal(k3, (Cout,), jnp.float32)
    beta = 0.1 * jax.random.normal(k4, (Cout,), jnp.float32)
    running_mean = 0.1 * jax.random.normal(k5, (Cout,), jnp.float32)
    running_var = 1.0 + 0.1 * jnp.abs(jax.random.normal(k6, (Cout,), jnp.float32))

    fn = jax.jit(lambda *a: basic_conv3d(*a, stride=stride, padding=padding, eps=eps))
    y = jax.block_until_ready(fn(x, weight, gamma, beta, running_mean, running_var))

    dn = ("NCDHW", "OIDHW", "NCDHW")
    scale = gamma / jnp.sqrt(running_var + eps)
    shift = (beta - running_mean * scale).reshape(1, Cout, 1, 1, 1)

    # (a) Exact f32 module semantics (conv -> BN(eval) -> exact GELU).
    ref = lax.conv_general_dilated(
        x, weight, (stride,) * 3, [(padding, padding)] * 3,
        dimension_numbers=dn, precision=lax.Precision.HIGHEST)
    ref = jax.nn.gelu(ref * scale.reshape(1, Cout, 1, 1, 1) + shift,
                      approximate=False)

    # (b) Matched-rounding reference: identical bf16-rounded operands as the
    #     kernel (f32 accumulation), isolating the kernel logic itself.
    x_r = x.astype(jnp.bfloat16).astype(jnp.float32)
    w_r = (weight * scale[:, None, None, None, None]
           ).astype(jnp.bfloat16).astype(jnp.float32)
    ref_m = lax.conv_general_dilated(
        x_r, w_r, (stride,) * 3, [(padding, padding)] * 3,
        dimension_numbers=dn, precision=lax.Precision.HIGHEST)
    ref_m = jax.nn.gelu(ref_m + shift, approximate=False)

    assert y.shape == ref.shape == (N, Cout, D, H, W)
    err_matched = float(jnp.max(jnp.abs(y - ref_m)))   # kernel-logic error
    err_f32 = float(jnp.max(jnp.abs(y - ref)))         # bf16-operand rounding
    assert err_matched < 1.5e-3, ("matched-rounding mismatch", err_matched)
    assert err_f32 < 6e-2, ("f32 module-reference mismatch", err_f32)
    print("KERNEL_OK")
</pallas_src>

<mosaic_0001>
module attributes {stable_mosaic.version = 11 : i64} {
  func.func @kernel(%arg0: i32, %arg1: i32, %arg2: memref<2x10x4x256xbf16, #tpu.memory_space<any>>, %arg3: memref<3x8x36xbf16, #tpu.memory_space<vmem>>, %arg4: memref<8x1xf32, #tpu.memory_space<vmem>>, %arg5: memref<1x8x8x128xf32, #tpu.memory_space<vmem>>, %arg6: memref<10x4x256xbf16, #tpu.memory_space<vmem>>, %arg7: memref<10x36x128xf32, #tpu.memory_space<vmem>>, %arg8: memref<1x!tpu.dma_semaphore, #tpu.memory_space<semaphore_mem>>) attributes {dimension_semantics = [#tpu.dimension_semantics<parallel>, #tpu.dimension_semantics<parallel>], iteration_bounds = array<i64: 2, 1>, scalar_prefetch = 0 : i64, scratch_operands = 3 : i64, tpu.core_type = #tpu.core_type<tc>, window_params = [{}, {pipeline_mode = #tpu.pipeline_mode<synchronous>, transform_indices = @transform_1, window_bounds = array<i64: 3, 8, 36>}, {pipeline_mode = #tpu.pipeline_mode<synchronous>, transform_indices = @transform_2, window_bounds = array<i64: 8, 1>}, {transform_indices = @transform_3, window_bounds = array<i64: 1, 8, 8, 128>}]} {
    %c8_i32 = arith.constant 8 : i32
    %0 = arith.muli %arg1, %c8_i32 : i32
    %c0_i32 = arith.constant 0 : i32
    %c0_i32_0 = arith.constant 0 : i32
    %c0_i32_1 = arith.constant 0 : i32
    %1 = tpu.memref_slice %arg2[%arg0, %0, %c0_i32_0, %c0_i32_1] : memref<2x10x4x256xbf16, #tpu.memory_space<any>> -> memref<1x10x4x256xbf16, #tpu.memory_space<any>>
    %2 = tpu.memref_squeeze %1 : memref<1x10x4x256xbf16, #tpu.memory_space<any>> -> memref<10x4x256xbf16, #tpu.memory_space<any>>
    %3 = tpu.memref_slice %arg8[%c0_i32] : memref<1x!tpu.dma_semaphore, #tpu.memory_space<semaphore_mem>> -> memref<1x!tpu.dma_semaphore, #tpu.memory_space<semaphore_mem>>
    %4 = tpu.memref_squeeze %3 : memref<1x!tpu.dma_semaphore, #tpu.memory_space<semaphore_mem>> -> memref<!tpu.dma_semaphore, #tpu.memory_space<semaphore_mem>>
    tpu.enqueue_dma source(%2 : memref<10x4x256xbf16, #tpu.memory_space<any>>) target(%arg6 : memref<10x4x256xbf16, #tpu.memory_space<vmem>>) target_semaphore(%4 : memref<!tpu.dma_semaphore, #tpu.memory_space<semaphore_mem>>)
    %c0_i32_2 = arith.constant 0 : i32
    %c0_i32_3 = arith.constant 0 : i32
    %c0_i32_4 = arith.constant 0 : i32
    %5 = tpu.memref_slice %arg2[%arg0, %0, %c0_i32_3, %c0_i32_4] : memref<2x10x4x256xbf16, #tpu.memory_space<any>> -> memref<1x10x4x256xbf16, #tpu.memory_space<any>>
    %6 = tpu.memref_squeeze %5 : memref<1x10x4x256xbf16, #tpu.memory_space<any>> -> memref<10x4x256xbf16, #tpu.memory_space<any>>
    %7 = tpu.memref_slice %arg8[%c0_i32_2] : memref<1x!tpu.dma_semaphore, #tpu.memory_space<semaphore_mem>> -> memref<1x!tpu.dma_semaphore, #tpu.memory_space<semaphore_mem>>
    %8 = tpu.memref_squeeze %7 : memref<1x!tpu.dma_semaphore, #tpu.memory_space<semaphore_mem>> -> memref<!tpu.dma_semaphore, #tpu.memory_space<semaphore_mem>>
    tpu.wait_dma2 semaphore(%8 : memref<!tpu.dma_semaphore, #tpu.memory_space<semaphore_mem>>) src(%6 : memref<10x4x256xbf16, #tpu.memory_space<any>>) dst(%arg6 : memref<10x4x256xbf16, #tpu.memory_space<vmem>>)
    %c0 = arith.constant 0 : index
    %c0_5 = arith.constant 0 : index
    %c0_6 = arith.constant 0 : index
    %9 = vector.load %arg6[%c0, %c0_5, %c0_6] : memref<10x4x256xbf16, #tpu.memory_space<vmem>>, vector<1x4x256xbf16>
    %10 = vector.shape_cast %9 : vector<1x4x256xbf16> to vector<4x256xbf16>
    %11 = vector.extract_strided_slice %10 {offsets = [0, 0], sizes = [4, 128], strides = [1, 1]} : vector<4x256xbf16> to vector<4x128xbf16>
    %12 = arith.extf %11 : vector<4x128xbf16> to vector<4x128xf32>
    %c0_7 = arith.constant 0 : index
    %c0_8 = arith.constant 0 : index
    %c0_9 = arith.constant 0 : index
    %13 = vector.load %arg7[%c0_7, %c0_8, %c0_9] : memref<10x36x128xf32, #tpu.memory_space<vmem>>, vector<1x4x128xf32>
    %14 = vector.shape_cast %13 : vector<1x4x128xf32> to vector<4x128xf32>
    %15 = vector.shape_cast %12 : vector<4x128xf32> to vector<1x4x128xf32>
    tpu.vector_store %arg7[%c0_7, %c0_8, %c0_9], %15 {strides = array<i32>} : memref<10x36x128xf32, #tpu.memory_space<vmem>>, vector<1x4x128xf32>,
    %16 = vector.extract_strided_slice %10 {offsets = [0, 1], sizes = [4, 128], strides = [1, 1]} : vector<4x256xbf16> to vector<4x128xbf16>
    %17 = arith.extf %16 : vector<4x128xbf16> to vector<4x128xf32>
    %c0_10 = arith.constant 0 : index
    %c4 = arith.constant 4 : index
    %c0_11 = arith.constant 0 : index
    %18 = vector.load %arg7[%c0_10, %c4, %c0_11] : memref<10x36x128xf32, #tpu.memory_space<vmem>>, vector<1x4x128xf32>
    %19 = vector.shape_cast %18 : vector<1x4x128xf32> to vector<4x128xf32>
    %20 = vector.shape_cast %17 : vector<4x128xf32> to vector<1x4x128xf32>
    tpu.vector_store %arg7[%c0_10, %c4, %c0_11], %20 {strides = array<i32>} : memref<10x36x128xf32, #tpu.memory_space<vmem>>, vector<1x4x128xf32>,
    %21 = vector.extract_strided_slice %10 {offsets = [0, 2], sizes = [4, 128], strides = [1, 1]} : vector<4x256xbf16> to vector<4x128xbf16>
    %22 = arith.extf %21 : vector<4x128xbf16> to vector<4x128xf32>
    %c0_12 = arith.constant 0 : index
    %c8 = arith.constant 8 : index
    %c0_13 = arith.constant 0 : index
    %23 = vector.load %arg7[%c0_12, %c8, %c0_13] : memref<10x36x128xf32, #tpu.memory_space<vmem>>, vector<1x4x128xf32>
    %24 = vector.shape_cast %23 : vector<1x4x128xf32> to vector<4x128xf32>
    %25 = vector.shape_cast %22 : vector<4x128xf32> to vector<1x4x128xf32>
    tpu.vector_store %arg7[%c0_12, %c8, %c0_13], %25 {strides = array<i32>} : memref<10x36x128xf32, #tpu.memory_space<vmem>>, vector<1x4x128xf32>,
    %26 = vector.extract_strided_slice %10 {offsets = [0, 10], sizes = [4, 128], strides = [1, 1]} : vector<4x256xbf16> to vector<4x128xbf16>
    %27 = arith.extf %26 : vector<4x128xbf16> to vector<4x128xf32>
    %c0_14 = arith.constant 0 : index
    %c12 = arith.constant 12 : index
    %c0_15 = arith.constant 0 : index
    %28 = vector.load %arg7[%c0_14, %c12, %c0_15] : memref<10x36x128xf32, #tpu.memory_space<vmem>>, vector<1x4x128xf32>
    %29 = vector.shape_cast %28 : vector<1x4x128xf32> to vector<4x128xf32>
    %30 = vector.shape_cast %27 : vector<4x128xf32> to vector<1x4x128xf32>
    tpu.vector_store %arg7[%c0_14, %c12, %c0_15], %30 {strides = array<i32>} : memref<10x36x128xf32, #tpu.memory_space<vmem>>, vector<1x4x128xf32>,
    %31 = vector.extract_strided_slice %10 {offsets = [0, 11], sizes = [4, 128], strides = [1, 1]} : vector<4x256xbf16> to vector<4x128xbf16>
    %32 = arith.extf %31 : vector<4x128xbf16> to vector<4x128xf32>
    %c0_16 = arith.constant 0 : index
    %c16 = arith.constant 16 : index
    %c0_17 = arith.constant 0 : index
    %33 = vector.load %arg7[%c0_16, %c16, %c0_17] : memref<10x36x128xf32, #tpu.memory_space<vmem>>, vector<1x4x128xf32>
    %34 = vector.shape_cast %33 : vector<1x4x128xf32> to vector<4x128xf32>
    %35 = vector.shape_cast %32 : vector<4x128xf32> to vector<1x4x128xf32>
    tpu.vector_store %arg7[%c0_16, %c16, %c0_17], %35 {strides = array<i32>} : memref<10x36x128xf32, #tpu.memory_space<vmem>>, vector<1x4x128xf32>,
    %36 = vector.extract_strided_slice %10 {offsets = [0, 12], sizes = [4, 128], strides = [1, 1]} : vector<4x256xbf16> to vector<4x128xbf16>
    %37 = arith.extf %36 : vector<4x128xbf16> to vector<4x128xf32>
    %c0_18 = arith.constant 0 : index
    %c20 = arith.constant 20 : index
    %c0_19 = arith.constant 0 : index
    %38 = vector.load %arg7[%c0_18, %c20, %c0_19] : memref<10x36x128xf32, #tpu.memory_space<vmem>>, vector<1x4x128xf32>
    %39 = vector.shape_cast %38 : vector<1x4x128xf32> to vector<4x128xf32>
    %40 = vector.shape_cast %37 : vector<4x128xf32> to vector<1x4x128xf32>
    tpu.vector_store %arg7[%c0_18, %c20, %c0_19], %40 {strides = array<i32>} : memref<10x36x128xf32, #tpu.memory_space<vmem>>, vector<1x4x128xf32>,
    %41 = vector.extract_strided_slice %10 {offsets = [0, 20], sizes = [4, 128], strides = [1, 1]} : vector<4x256xbf16> to vector<4x128xbf16>
    %42 = arith.extf %41 : vector<4x128xbf16> to vector<4x128xf32>
    %c0_20 = arith.constant 0 : index
    %c24 = arith.constant 24 : index
    %c0_21 = arith.constant 0 : index
    %43 = vector.load %arg7[%c0_20, %c24, %c0_21] : memref<10x36x128xf32, #tpu.memory_space<vmem>>, vector<1x4x128xf32>
    %44 = vector.shape_cast %43 : vector<1x4x128xf32> to vector<4x128xf32>
    %45 = vector.shape_cast %42 : vector<4x128xf32> to vector<1x4x128xf32>
    tpu.vector_store %arg7[%c0_20, %c24, %c0_21], %45 {strides = array<i32>} : memref<10x36x128xf32, #tpu.memory_space<vmem>>, vector<1x4x128xf32>,
    %46 = vector.extract_strided_slice %10 {offsets = [0, 21], sizes = [4, 128], strides = [1, 1]} : vector<4x256xbf16> to vector<4x128xbf16>
    %47 = arith.extf %46 : vector<4x128xbf16> to vector<4x128xf32>
    %c0_22 = arith.constant 0 : index
    %c28 = arith.constant 28 : index
    %c0_23 = arith.constant 0 : index
    %48 = vector.load %arg7[%c0_22, %c28, %c0_23] : memref<10x36x128xf32, #tpu.memory_space<vmem>>, vector<1x4x128xf32>
    %49 = vector.shape_cast %48 : vector<1x4x128xf32> to vector<4x128xf32>
    %50 = vector.shape_cast %47 : vector<4x128xf32> to vector<1x4x128xf32>
    tpu.vector_store %arg7[%c0_22, %c28, %c0_23], %50 {strides = array<i32>} : memref<10x36x128xf32, #tpu.memory_space<vmem>>, vector<1x4x128xf32>,
    %51 = vector.extract_strided_slice %10 {offsets = [0, 22], sizes = [4, 128], strides = [1, 1]} : vector<4x256xbf16> to vector<4x128xbf16>
    %52 = arith.extf %51 : vector<4x128xbf16> to vector<4x128xf32>
    %c0_24 = arith.constant 0 : index
    %c32 = arith.constant 32 : index
    %c0_25 = arith.constant 0 : index
    %53 = vector.load %arg7[%c0_24, %c32, %c0_25] : memref<10x36x128xf32, #tpu.memory_space<vmem>>, vector<1x4x128xf32>
    %54 = vector.shape_cast %53 : vector<1x4x128xf32> to vector<4x128xf32>
    %55 = vector.shape_cast %52 : vector<4x128xf32> to vector<1x4x128xf32>
    tpu.vector_store %arg7[%c0_24, %c32, %c0_25], %55 {strides = array<i32>} : memref<10x36x128xf32, #tpu.memory_space<vmem>>, vector<1x4x128xf32>,
    %c1 = arith.constant 1 : index
    %c0_26 = arith.constant 0 : index
    %c0_27 = arith.constant 0 : index
    %56 = vector.load %arg6[%c1, %c0_26, %c0_27] : memref<10x4x256xbf16, #tpu.memory_space<vmem>>, vector<1x4x256xbf16>
    %57 = vector.shape_cast %56 : vector<1x4x256xbf16> to vector<4x256xbf16>
    %58 = vector.extract_strided_slice %57 {offsets = [0, 0], sizes = [4, 128], strides = [1, 1]} : vector<4x256xbf16> to vector<4x128xbf16>
    %59 = arith.extf %58 : vector<4x128xbf16> to vector<4x128xf32>
    %c1_28 = arith.constant 1 : index
    %c0_29 = arith.constant 0 : index
    %c0_30 = arith.constant 0 : index
    %60 = vector.load %arg7[%c1_28, %c0_29, %c0_30] : memref<10x36x128xf32, #tpu.memory_space<vmem>>, vector<1x4x128xf32>
    %61 = vector.shape_cast %60 : vector<1x4x128xf32> to vector<4x128xf32>
    %62 = vector.shape_cast %59 : vector<4x128xf32> to vector<1x4x128xf32>
    tpu.vector_store %arg7[%c1_28, %c0_29, %c0_30], %62 {strides = array<i32>} : memref<10x36x128xf32, #tpu.memory_space<vmem>>, vector<1x4x128xf32>,
    %63 = vector.extract_strided_slice %57 {offsets = [0, 1], sizes = [4, 128], strides = [1, 1]} : vector<4x256xbf16> to vector<4x128xbf16>
    %64 = arith.extf %63 : vector<4x128xbf16> to vector<4x128xf32>
    %c1_31 = arith.constant 1 : index
    %c4_32 = arith.constant 4 : index
    %c0_33 = arith.constant 0 : index
    %65 = vector.load %arg7[%c1_31, %c4_32, %c0_33] : memref<10x36x128xf32, #tpu.memory_space<vmem>>, vector<1x4x128xf32>
    %66 = vector.shape_cast %65 : vector<1x4x128xf32> to vector<4x128xf32>
    %67 = vector.shape_cast %64 : vector<4x128xf32> to vector<1x4x128xf32>
    tpu.vector_store %arg7[%c1_31, %c4_32, %c0_33], %67 {strides = array<i32>} : memref<10x36x128xf32, #tpu.memory_space<vmem>>, vector<1x4x128xf32>,
    %68 = vector.extract_strided_slice %57 {offsets = [0, 2], sizes = [4, 128], strides = [1, 1]} : vector<4x256xbf16> to vector<4x128xbf16>
    %69 = arith.extf %68 : vector<4x128xbf16> to vector<4x128xf32>
    %c1_34 = arith.constant 1 : index
    %c8_35 = arith.constant 8 : index
    %c0_36 = arith.constant 0 : index
    %70 = vector.load %arg7[%c1_34, %c8_35, %c0_36] : memref<10x36x128xf32, #tpu.memory_space<vmem>>, vector<1x4x128xf32>
    %71 = vector.shape_cast %70 : vector<1x4x128xf32> to vector<4x128xf32>
    %72 = vector.shape_cast %69 : vector<4x128xf32> to vector<1x4x128xf32>
    tpu.vector_store %arg7[%c1_34, %c8_35, %c0_36], %72 {strides = array<i32>} : memref<10x36x128xf32, #tpu.memory_space<vmem>>, vector<1x4x128xf32>,
    %73 = vector.extract_strided_slice %57 {offsets = [0, 10], sizes = [4, 128], strides = [1, 1]} : vector<4x256xbf16> to vector<4x128xbf16>
    %74 = arith.extf %73 : vector<4x128xbf16> to vector<4x128xf32>
    %c1_37 = arith.constant 1 : index
    %c12_38 = arith.constant 12 : index
    %c0_39 = arith.constant 0 : index
    %75 = vector.load %arg7[%c1_37, %c12_38, %c0_39] : memref<10x36x128xf32, #tpu.memory_space<vmem>>, vector<1x4x128xf32>
    %76 = vector.shape_cast %75 : vector<1x4x128xf32> to vector<4x128xf32>
    %77 = vector.shape_cast %74 : vector<4x128xf32> to vector<1x4x128xf32>
    tpu.vector_store %arg7[%c1_37, %c12_38, %c0_39], %77 {strides = array<i32>} : memref<10x36x128xf32, #tpu.memory_space<vmem>>, vector<1x4x128xf32>,
    %78 = vector.extract_strided_slice %57 {offsets = [0, 11], sizes = [4, 128], strides = [1, 1]} : vector<4x256xbf16> to vector<4x128xbf16>
    %79 = arith.extf %78 : vector<4x128xbf16> to vector<4x128xf32>
    %c1_40 = arith.constant 1 : index
    %c16_41 = arith.constant 16 : index
    %c0_42 = arith.constant 0 : index
    %80 = vector.load %arg7[%c1_40, %c16_41, %c0_42] : memref<10x36x128xf32, #tpu.memory_space<vmem>>, vector<1x4x128xf32>
    %81 = vector.shape_cast %80 : vector<1x4x128xf32> to vector<4x128xf32>
    %82 = vector.shape_cast %79 : vector<4x128xf32> to vector<1x4x128xf32>
    tpu.vector_store %arg7[%c1_40, %c16_41, %c0_42], %82 {strides = array<i32>} : memref<10x36x128xf32, #tpu.memory_space<vmem>>, vector<1x4x128xf32>,
    %83 = vector.extract_strided_slice %57 {offsets = [0, 12], sizes = [4, 128], strides = [1, 1]} : vector<4x256xbf16> to vector<4x128xbf16>
    %84 = arith.extf %83 : vector<4x128xbf16> to vector<4x128xf32>
    %c1_43 = arith.constant 1 : index
    %c20_44 = arith.constant 20 : index
    %c0_45 = arith.constant 0 : index
    %85 = vector.load %arg7[%c1_43, %c20_44, %c0_45] : memref<10x36x128xf32, #tpu.memory_space<vmem>>, vector<1x4x128xf32>
    %86 = vector.shape_cast %85 : vector<1x4x128xf32> to vector<4x128xf32>
    %87 = vector.shape_cast %84 : vector<4x128xf32> to vector<1x4x128xf32>
    tpu.vector_store %arg7[%c1_43, %c20_44, %c0_45], %87 {strides = array<i32>} : memref<10x36x128xf32, #tpu.memory_space<vmem>>, vector<1x4x128xf32>,
    %88 = vector.extract_strided_slice %57 {offsets = [0, 20], sizes = [4, 128], strides = [1, 1]} : vector<4x256xbf16> to vector<4x128xbf16>
    %89 = arith.extf %88 : vector<4x128xbf16> to vector<4x128xf32>
    %c1_46 = arith.constant 1 : index
    %c24_47 = arith.constant 24 : index
    %c0_48 = arith.constant 0 : index
    %90 = vector.load %arg7[%c1_46, %c24_47, %c0_48] : memref<10x36x128xf32, #tpu.memory_space<vmem>>, vector<1x4x128xf32>
    %91 = vector.shape_cast %90 : vector<1x4x128xf32> to vector<4x128xf32>
    %92 = vector.shape_cast %89 : vector<4x128xf32> to vector<1x4x128xf32>
    tpu.vector_store %arg7[%c1_46, %c24_47, %c0_48], %92 {strides = array<i32>} : memref<10x36x128xf32, #tpu.memory_space<vmem>>, vector<1x4x128xf32>,
    %93 = vector.extract_strided_slice %57 {offsets = [0, 21], sizes = [4, 128], strides = [1, 1]} : vector<4x256xbf16> to vector<4x128xbf16>
    %94 = arith.extf %93 : vector<4x128xbf16> to vector<4x128xf32>
    %c1_49 = arith.constant 1 : index
    %c28_50 = arith.constant 28 : index
    %c0_51 = arith.constant 0 : index
    %95 = vector.load %arg7[%c1_49, %c28_50, %c0_51] : memref<10x36x128xf32, #tpu.memory_space<vmem>>, vector<1x4x128xf32>
    %96 = vector.shape_cast %95 : vector<1x4x128xf32> to vector<4x128xf32>
    %97 = vector.shape_cast %94 : vector<4x128xf32> to vector<1x4x128xf32>
    tpu.vector_store %arg7[%c1_49, %c28_50, %c0_51], %97 {strides = array<i32>} : memref<10x36x128xf32, #tpu.memory_space<vmem>>, vector<1x4x128xf32>,
    %98 = vector.extract_strided_slice %57 {offsets = [0, 22], sizes = [4, 128], strides = [1, 1]} : vector<4x256xbf16> to vector<4x128xbf16>
    %99 = arith.extf %98 : vector<4x128xbf16> to vector<4x128xf32>
    %c1_52 = arith.constant 1 : index
    %c32_53 = arith.constant 32 : index
    %c0_54 = arith.constant 0 : index
    %100 = vector.load %arg7[%c1_52, %c32_53, %c0_54] : memref<10x36x128xf32, #tpu.memory_space<vmem>>, vector<1x4x128xf32>
    %101 = vector.shape_cast %100 : vector<1x4x128xf32> to vector<4x128xf32>
    %102 = vector.shape_cast %99 : vector<4x128xf32> to vector<1x4x128xf32>
    tpu.vector_store %arg7[%c1_52, %c32_53, %c0_54], %102 {strides = array<i32>} : memref<10x36x128xf32, #tpu.memory_space<vmem>>, vector<1x4x128xf32>,
    %c2 = arith.constant 2 : index
    %c0_55 = arith.constant 0 : index
    %c0_56 = arith.constant 0 : index
    %103 = vector.load %arg6[%c2, %c0_55, %c0_56] : memref<10x4x256xbf16, #tpu.memory_space<vmem>>, vector<1x4x256xbf16>
    %104 = vector.shape_cast %103 : vector<1x4x256xbf16> to vector<4x256xbf16>
    %105 = vector.extract_strided_slice %104 {offsets = [0, 0], sizes = [4, 128], strides = [1, 1]} : vector<4x256xbf16> to vector<4x128xbf16>
    %106 = arith.extf %105 : vector<4x128xbf16> to vector<4x128xf32>
    %c2_57 = arith.constant 2 : index
    %c0_58 = arith.constant 0 : index
    %c0_59 = arith.constant 0 : index
    %107 = vector.load %arg7[%c2_57, %c0_58, %c0_59] : memref<10x36x128xf32, #tpu.memory_space<vmem>>, vector<1x4x128xf32>
    %108 = vector.shape_cast %107 : vector<1x4x128xf32> to vector<4x128xf32>
    %109 = vector.shape_cast %106 : vector<4x128xf32> to vector<1x4x128xf32>
    tpu.vector_store %arg7[%c2_57, %c0_58, %c0_59], %109 {strides = array<i32>} : memref<10x36x128xf32, #tpu.memory_space<vmem>>, vector<1x4x128xf32>,
    %110 = vector.extract_strided_slice %104 {offsets = [0, 1], sizes = [4, 128], strides = [1, 1]} : vector<4x256xbf16> to vector<4x128xbf16>
    %111 = arith.extf %110 : vector<4x128xbf16> to vector<4x128xf32>
    %c2_60 = arith.constant 2 : index
    %c4_61 = arith.constant 4 : index
    %c0_62 = arith.constant 0 : index
    %112 = vector.load %arg7[%c2_60, %c4_61, %c0_62] : memref<10x36x128xf32, #tpu.memory_space<vmem>>, vector<1x4x128xf32>
    %113 = vector.shape_cast %112 : vector<1x4x128xf32> to vector<4x128xf32>
    %114 = vector.shape_cast %111 : vector<4x128xf32> to vector<1x4x128xf32>
    tpu.vector_store %arg7[%c2_60, %c4_61, %c0_62], %114 {strides = array<i32>} : memref<10x36x128xf32, #tpu.memory_space<vmem>>, vector<1x4x128xf32>,
    %115 = vector.extract_strided_slice %104 {offsets = [0, 2], sizes = [4, 128], strides = [1, 1]} : vector<4x256xbf16> to vector<4x128xbf16>
    %116 = arith.extf %115 : vector<4x128xbf16> to vector<4x128xf32>
    %c2_63 = arith.constant 2 : index
    %c8_64 = arith.constant 8 : index
    %c0_65 = arith.constant 0 : index
    %117 = vector.load %arg7[%c2_63, %c8_64, %c0_65] : memref<10x36x128xf32, #tpu.memory_space<vmem>>, vector<1x4x128xf32>
    %118 = vector.shape_cast %117 : vector<1x4x128xf32> to vector<4x128xf32>
    %119 = vector.shape_cast %116 : vector<4x128xf32> to vector<1x4x128xf32>
    tpu.vector_store %arg7[%c2_63, %c8_64, %c0_65], %119 {strides = array<i32>} : memref<10x36x128xf32, #tpu.memory_space<vmem>>, vector<1x4x128xf32>,
    %120 = vector.extract_strided_slice %104 {offsets = [0, 10], sizes = [4, 128], strides = [1, 1]} : vector<4x256xbf16> to vector<4x128xbf16>
    %121 = arith.extf %120 : vector<4x128xbf16> to vector<4x128xf32>
    %c2_66 = arith.constant 2 : index
    %c12_67 = arith.constant 12 : index
    %c0_68 = arith.constant 0 : index
    %122 = vector.load %arg7[%c2_66, %c12_67, %c0_68] : memref<10x36x128xf32, #tpu.memory_space<vmem>>, vector<1x4x128xf32>
    %123 = vector.shape_cast %122 : vector<1x4x128xf32> to vector<4x128xf32>
    %124 = vector.shape_cast %121 : vector<4x128xf32> to vector<1x4x128xf32>
    tpu.vector_store %arg7[%c2_66, %c12_67, %c0_68], %124 {strides = array<i32>} : memref<10x36x128xf32, #tpu.memory_space<vmem>>, vector<1x4x128xf32>,
    %125 = vector.extract_strided_slice %104 {offsets = [0, 11], sizes = [4, 128], strides = [1, 1]} : vector<4x256xbf16> to vector<4x128xbf16>
    %126 = arith.extf %125 : vector<4x128xbf16> to vector<4x128xf32>
    %c2_69 = arith.constant 2 : index
    %c16_70 = arith.constant 16 : index
    %c0_71 = arith.constant 0 : index
    %127 = vector.load %arg7[%c2_69, %c16_70, %c0_71] : memref<10x36x128xf32, #tpu.memory_space<vmem>>, vector<1x4x128xf32>
    %128 = vector.shape_cast %127 : vector<1x4x128xf32> to vector<4x128xf32>
    %129 = vector.shape_cast %126 : vector<4x128xf32> to vector<1x4x128xf32>
    tpu.vector_store %arg7[%c2_69, %c16_70, %c0_71], %129 {strides = array<i32>} : memref<10x36x128xf32, #tpu.memory_space<vmem>>, vector<1x4x128xf32>,
    %130 = vector.extract_strided_slice %104 {offsets = [0, 12], sizes = [4, 128], strides = [1, 1]} : vector<4x256xbf16> to vector<4x128xbf16>
    %131 = arith.extf %130 : vector<4x128xbf16> to vector<4x128xf32>
    %c2_72 = arith.constant 2 : index
    %c20_73 = arith.constant 20 : index
    %c0_74 = arith.constant 0 : index
    %132 = vector.load %arg7[%c2_72, %c20_73, %c0_74] : memref<10x36x128xf32, #tpu.memory_space<vmem>>, vector<1x4x128xf32>
    %133 = vector.shape_cast %132 : vector<1x4x128xf32> to vector<4x128xf32>
    %134 = vector.shape_cast %131 : vector<4x128xf32> to vector<1x4x128xf32>
    tpu.vector_store %arg7[%c2_72, %c20_73, %c0_74], %134 {strides = array<i32>} : memref<10x36x128xf32, #tpu.memory_space<vmem>>, vector<1x4x128xf32>,
    %135 = vector.extract_strided_slice %104 {offsets = [0, 20], sizes = [4, 128], strides = [1, 1]} : vector<4x256xbf16> to vector<4x128xbf16>
    %136 = arith.extf %135 : vector<4x128xbf16> to vector<4x128xf32>
    %c2_75 = arith.constant 2 : index
    %c24_76 = arith.constant 24 : index
    %c0_77 = arith.constant 0 : index
    %137 = vector.load %arg7[%c2_75, %c24_76, %c0_77] : memref<10x36x128xf32, #tpu.memory_space<vmem>>, vector<1x4x128xf32>
    %138 = vector.shape_cast %137 : vector<1x4x128xf32> to vector<4x128xf32>
    %139 = vector.shape_cast %136 : vector<4x128xf32> to vector<1x4x128xf32>
    tpu.vector_store %arg7[%c2_75, %c24_76, %c0_77], %139 {strides = array<i32>} : memref<10x36x128xf32, #tpu.memory_space<vmem>>, vector<1x4x128xf32>,
    %140 = vector.extract_strided_slice %104 {offsets = [0, 21], sizes = [4, 128], strides = [1, 1]} : vector<4x256xbf16> to vector<4x128xbf16>
    %141 = arith.extf %140 : vector<4x128xbf16> to vector<4x128xf32>
    %c2_78 = arith.constant 2 : index
    %c28_79 = arith.constant 28 : index
    %c0_80 = arith.constant 0 : index
    %142 = vector.load %arg7[%c2_78, %c28_79, %c0_80] : memref<10x36x128xf32, #tpu.memory_space<vmem>>, vector<1x4x128xf32>
    %143 = vector.shape_cast %142 : vector<1x4x128xf32> to vector<4x128xf32>
    %144 = vector.shape_cast %141 : vector<4x128xf32> to vector<1x4x128xf32>
    tpu.vector_store %arg7[%c2_78, %c28_79, %c0_80], %144 {strides = array<i32>} : memref<10x36x128xf32, #tpu.memory_space<vmem>>, vector<1x4x128xf32>,
    %145 = vector.extract_strided_slice %104 {offsets = [0, 22], sizes = [4, 128], strides = [1, 1]} : vector<4x256xbf16> to vector<4x128xbf16>
    %146 = arith.extf %145 : vector<4x128xbf16> to vector<4x128xf32>
    %c2_81 = arith.constant 2 : index
    %c32_82 = arith.constant 32 : index
    %c0_83 = arith.constant 0 : index
    %147 = vector.load %arg7[%c2_81, %c32_82, %c0_83] : memref<10x36x128xf32, #tpu.memory_space<vmem>>, vector<1x4x128xf32>
    %148 = vector.shape_cast %147 : vector<1x4x128xf32> to vector<4x128xf32>
    %149 = vector.shape_cast %146 : vector<4x128xf32> to vector<1x4x128xf32>
    tpu.vector_store %arg7[%c2_81, %c32_82, %c0_83], %149 {strides = array<i32>} : memref<10x36x128xf32, #tpu.memory_space<vmem>>, vector<1x4x128xf32>,
    %c3 = arith.constant 3 : index
    %c0_84 = arith.constant 0 : index
    %c0_85 = arith.constant 0 : index
    %150 = vector.load %arg6[%c3, %c0_84, %c0_85] : memref<10x4x256xbf16, #tpu.memory_space<vmem>>, vector<1x4x256xbf16>
    %151 = vector.shape_cast %150 : vector<1x4x256xbf16> to vector<4x256xbf16>
    %152 = vector.extract_strided_slice %151 {offsets = [0, 0], sizes = [4, 128], strides = [1, 1]} : vector<4x256xbf16> to vector<4x128xbf16>
    %153 = arith.extf %152 : vector<4x128xbf16> to vector<4x128xf32>
    %c3_86 = arith.constant 3 : index
    %c0_87 = arith.constant 0 : index
    %c0_88 = arith.constant 0 : index
    %154 = vector.load %arg7[%c3_86, %c0_87, %c0_88] : memref<10x36x128xf32, #tpu.memory_space<vmem>>, vector<1x4x128xf32>
    %155 = vector.shape_cast %154 : vector<1x4x128xf32> to vector<4x128xf32>
    %156 = vector.shape_cast %153 : vector<4x128xf32> to vector<1x4x128xf32>
    tpu.vector_store %arg7[%c3_86, %c0_87, %c0_88], %156 {strides = array<i32>} : memref<10x36x128xf32, #tpu.memory_space<vmem>>, vector<1x4x128xf32>,
    %157 = vector.extract_strided_slice %151 {offsets = [0, 1], sizes = [4, 128], strides = [1, 1]} : vector<4x256xbf16> to vector<4x128xbf16>
    %158 = arith.extf %157 : vector<4x128xbf16> to vector<4x128xf32>
    %c3_89 = arith.constant 3 : index
    %c4_90 = arith.constant 4 : index
    %c0_91 = arith.constant 0 : index
    %159 = vector.load %arg7[%c3_89, %c4_90, %c0_91] : memref<10x36x128xf32, #tpu.memory_space<vmem>>, vector<1x4x128xf32>
    %160 = vector.shape_cast %159 : vector<1x4x128xf32> to vector<4x128xf32>
    %161 = vector.shape_cast %158 : vector<4x128xf32> to vector<1x4x128xf32>
    tpu.vector_store %arg7[%c3_89, %c4_90, %c0_91], %161 {strides = array<i32>} : memref<10x36x128xf32, #tpu.memory_space<vmem>>, vector<1x4x128xf32>,
    %162 = vector.extract_strided_slice %151 {offsets = [0, 2], sizes = [4, 128], strides = [1, 1]} : vector<4x256xbf16> to vector<4x128xbf16>
    %163 = arith.extf %162 : vector<4x128xbf16> to vector<4x128xf32>
    %c3_92 = arith.constant 3 : index
    %c8_93 = arith.constant 8 : index
    %c0_94 = arith.constant 0 : index
    %164 = vector.load %arg7[%c3_92, %c8_93, %c0_94] : memref<10x36x128xf32, #tpu.memory_space<vmem>>, vector<1x4x128xf32>
    %165 = vector.shape_cast %164 : vector<1x4x128xf32> to vector<4x128xf32>
    %166 = vector.shape_cast %163 : vector<4x128xf32> to vector<1x4x128xf32>
    tpu.vector_store %arg7[%c3_92, %c8_93, %c0_94], %166 {strides = array<i32>} : memref<10x36x128xf32, #tpu.memory_space<vmem>>, vector<1x4x128xf32>,
    %167 = vector.extract_strided_slice %151 {offsets = [0, 10], sizes = [4, 128], strides = [1, 1]} : vector<4x256xbf16> to vector<4x128xbf16>
    %168 = arith.extf %167 : vector<4x128xbf16> to vector<4x128xf32>
    %c3_95 = arith.constant 3 : index
    %c12_96 = arith.constant 12 : index
    %c0_97 = arith.constant 0 : index
    %169 = vector.load %arg7[%c3_95, %c12_96, %c0_97] : memref<10x36x128xf32, #tpu.memory_space<vmem>>, vector<1x4x128xf32>
    %170 = vector.shape_cast %169 : vector<1x4x128xf32> to vector<4x128xf32>
    %171 = vector.shape_cast %168 : vector<4x128xf32> to vector<1x4x128xf32>
    tpu.vector_store %arg7[%c3_95, %c12_96, %c0_97], %171 {strides = array<i32>} : memref<10x36x128xf32, #tpu.memory_space<vmem>>, vector<1x4x128xf32>,
    %172 = vector.extract_strided_slice %151 {offsets = [0, 11], sizes = [4, 128], strides = [1, 1]} : vector<4x256xbf16> to vector<4x128xbf16>
    %173 = arith.extf %172 : vector<4x128xbf16> to vector<4x128xf32>
    %c3_98 = arith.constant 3 : index
    %c16_99 = arith.constant 16 : index
    %c0_100 = arith.constant 0 : index
    %174 = vector.load %arg7[%c3_98, %c16_99, %c0_100] : memref<10x36x128xf32, #tpu.memory_space<vmem>>, vector<1x4x128xf32>
    %175 = vector.shape_cast %174 : vector<1x4x128xf32> to vector<4x128xf32>
    %176 = vector.shape_cast %173 : vector<4x128xf32> to vector<1x4x128xf32>
    tpu.vector_store %arg7[%c3_98, %c16_99, %c0_100], %176 {strides = array<i32>} : memref<10x36x128xf32, #tpu.memory_space<vmem>>, vector<1x4x128xf32>,
    %177 = vector.extract_strided_slice %151 {offsets = [0, 12], sizes = [4, 128], strides = [1, 1]} : vector<4x256xbf16> to vector<4x128xbf16>
    %178 = arith.extf %177 : vector<4x128xbf16> to vector<4x128xf32>
    %c3_101 = arith.constant 3 : index
    %c20_102 = arith.constant 20 : index
    %c0_103 = arith.constant 0 : index
    %179 = vector.load %arg7[%c3_101, %c20_102, %c0_103] : memref<10x36x128xf32, #tpu.memory_space<vmem>>, vector<1x4x128xf32>
    %180 = vector.shape_cast %179 : vector<1x4x128xf32> to vector<4x128xf32>
    %181 = vector.shape_cast %178 : vector<4x128xf32> to vector<1x4x128xf32>
    tpu.vector_store %arg7[%c3_101, %c20_102, %c0_103], %181 {strides = array<i32>} : memref<10x36x128xf32, #tpu.memory_space<vmem>>, vector<1x4x128xf32>,
    %182 = vector.extract_strided_slice %151 {offsets = [0, 20], sizes = [4, 128], strides = [1, 1]} : vector<4x256xbf16> to vector<4x128xbf16>
    %183 = arith.extf %182 : vector<4x128xbf16> to vector<4x128xf32>
    %c3_104 = arith.constant 3 : index
    %c24_105 = arith.constant 24 : index
    %c0_106 = arith.constant 0 : index
    %184 = vector.load %arg7[%c3_104, %c24_105, %c0_106] : memref<10x36x128xf32, #tpu.memory_space<vmem>>, vector<1x4x128xf32>
    %185 = vector.shape_cast %184 : vector<1x4x128xf32> to vector<4x128xf32>
    %186 = vector.shape_cast %183 : vector<4x128xf32> to vector<1x4x128xf32>
    tpu.vector_store %arg7[%c3_104, %c24_105, %c0_106], %186 {strides = array<i32>} : memref<10x36x128xf32, #tpu.memory_space<vmem>>, vector<1x4x128xf32>,
    %187 = vector.extract_strided_slice %151 {offsets = [0, 21], sizes = [4, 128], strides = [1, 1]} : vector<4x256xbf16> to vector<4x128xbf16>
    %188 = arith.extf %187 : vector<4x128xbf16> to vector<4x128xf32>
    %c3_107 = arith.constant 3 : index
    %c28_108 = arith.constant 28 : index
    %c0_109 = arith.constant 0 : index
    %189 = vector.load %arg7[%c3_107, %c28_108, %c0_109] : memref<10x36x128xf32, #tpu.memory_space<vmem>>, vector<1x4x128xf32>
    %190 = vector.shape_cast %189 : vector<1x4x128xf32> to vector<4x128xf32>
    %191 = vector.shape_cast %188 : vector<4x128xf32> to vector<1x4x128xf32>
    tpu.vector_store %arg7[%c3_107, %c28_108, %c0_109], %191 {strides = array<i32>} : memref<10x36x128xf32, #tpu.memory_space<vmem>>, vector<1x4x128xf32>,
    %192 = vector.extract_strided_slice %151 {offsets = [0, 22], sizes = [4, 128], strides = [1, 1]} : vector<4x256xbf16> to vector<4x128xbf16>
    %193 = arith.extf %192 : vector<4x128xbf16> to vector<4x128xf32>
    %c3_110 = arith.constant 3 : index
    %c32_111 = arith.constant 32 : index
    %c0_112 = arith.constant 0 : index
    %194 = vector.load %arg7[%c3_110, %c32_111, %c0_112] : memref<10x36x128xf32, #tpu.memory_space<vmem>>, vector<1x4x128xf32>
    %195 = vector.shape_cast %194 : vector<1x4x128xf32> to vector<4x128xf32>
    %196 = vector.shape_cast %193 : vector<4x128xf32> to vector<1x4x128xf32>
    tpu.vector_store %arg7[%c3_110, %c32_111, %c0_112], %196 {strides = array<i32>} : memref<10x36x128xf32, #tpu.memory_space<vmem>>, vector<1x4x128xf32>,
    %c4_113 = arith.constant 4 : index
    %c0_114 = arith.constant 0 : index
    %c0_115 = arith.constant 0 : index
    %197 = vector.load %arg6[%c4_113, %c0_114, %c0_115] : memref<10x4x256xbf16, #tpu.memory_space<vmem>>, vector<1x4x256xbf16>
    %198 = vector.shape_cast %197 : vector<1x4x256xbf16> to vector<4x256xbf16>
    %199 = vector.extract_strided_slice %198 {offsets = [0, 0], sizes = [4, 128], strides = [1, 1]} : vector<4x256xbf16> to vector<4x128xbf16>
    %200 = arith.extf %199 : vector<4x128xbf16> to vector<4x128xf32>
    %c4_116 = arith.constant 4 : index
    %c0_117 = arith.constant 0 : index
    %c0_118 = arith.constant 0 : index
    %201 = vector.load %arg7[%c4_116, %c0_117, %c0_118] : memref<10x36x128xf32, #tpu.memory_space<vmem>>, vector<1x4x128xf32>
    %202 = vector.shape_cast %201 : vector<1x4x128xf32> to vector<4x128xf32>
    %203 = vector.shape_cast %200 : vector<4x128xf32> to vector<1x4x128xf32>
    tpu.vector_store %arg7[%c4_116, %c0_117, %c0_118], %203 {strides = array<i32>} : memref<10x36x128xf32, #tpu.memory_space<vmem>>, vector<1x4x128xf32>,
    %204 = vector.extract_strided_slice %198 {offsets = [0, 1], sizes = [4, 128], strides = [1, 1]} : vector<4x256xbf16> to vector<4x128xbf16>
    %205 = arith.extf %204 : vector<4x128xbf16> to vector<4x128xf32>
    %c4_119 = arith.constant 4 : index
    %c4_120 = arith.constant 4 : index
    %c0_121 = arith.constant 0 : index
    %206 = vector.load %arg7[%c4_119, %c4_120, %c0_121] : memref<10x36x128xf32, #tpu.memory_space<vmem>>, vector<1x4x128xf32>
    %207 = vector.shape_cast %206 : vector<1x4x128xf32> to vector<4x128xf32>
    %208 = vector.shape_cast %205 : vector<4x128xf32> to vector<1x4x128xf32>
    tpu.vector_store %arg7[%c4_119, %c4_120, %c0_121], %208 {strides = array<i32>} : memref<10x36x128xf32, #tpu.memory_space<vmem>>, vector<1x4x128xf32>,
    %209 = vector.extract_strided_slice %198 {offsets = [0, 2], sizes = [4, 128], strides = [1, 1]} : vector<4x256xbf16> to vector<4x128xbf16>
    %210 = arith.extf %209 : vector<4x128xbf16> to vector<4x128xf32>
    %c4_122 = arith.constant 4 : index
    %c8_123 = arith.constant 8 : index
    %c0_124 = arith.constant 0 : index
    %211 = vector.load %arg7[%c4_122, %c8_123, %c0_124] : memref<10x36x128xf32, #tpu.memory_space<vmem>>, vector<1x4x128xf32>
    %212 = vector.shape_cast %211 : vector<1x4x128xf32> to vector<4x128xf32>
    %213 = vector.shape_cast %210 : vector<4x128xf32> to vector<1x4x128xf32>
    tpu.vector_store %arg7[%c4_122, %c8_123, %c0_124], %213 {strides = array<i32>} : memref<10x36x128xf32, #tpu.memory_space<vmem>>, vector<1x4x128xf32>,
    %214 = vector.extract_strided_slice %198 {offsets = [0, 10], sizes = [4, 128], strides = [1, 1]} : vector<4x256xbf16> to vector<4x128xbf16>
    %215 = arith.extf %214 : vector<4x128xbf16> to vector<4x128xf32>
    %c4_125 = arith.constant 4 : index
    %c12_126 = arith.constant 12 : index
    %c0_127 = arith.constant 0 : index
    %216 = vector.load %arg7[%c4_125, %c12_126, %c0_127] : memref<10x36x128xf32, #tpu.memory_space<vmem>>, vector<1x4x128xf32>
    %217 = vector.shape_cast %216 : vector<1x4x128xf32> to vector<4x128xf32>
    %218 = vector.shape_cast %215 : vector<4x128xf32> to vector<1x4x128xf32>
    tpu.vector_store %arg7[%c4_125, %c12_126, %c0_127], %218 {strides = array<i32>} : memref<10x36x128xf32, #tpu.memory_space<vmem>>, vector<1x4x128xf32>,
    %219 = vector.extract_strided_slice %198 {offsets = [0, 11], sizes = [4, 128], strides = [1, 1]} : vector<4x256xbf16> to vector<4x128xbf16>
    %220 = arith.extf %219 : vector<4x128xbf16> to vector<4x128xf32>
    %c4_128 = arith.constant 4 : index
    %c16_129 = arith.constant 16 : index
    %c0_130 = arith.constant 0 : index
    %221 = vector.load %arg7[%c4_128, %c16_129, %c0_130] : memref<10x36x128xf32, #tpu.memory_space<vmem>>, vector<1x4x128xf32>
    %222 = vector.shape_cast %221 : vector<1x4x128xf32> to vector<4x128xf32>
    %223 = vector.shape_cast %220 : vector<4x128xf32> to vector<1x4x128xf32>
    tpu.vector_store %arg7[%c4_128, %c16_129, %c0_130], %223 {strides = array<i32>} : memref<10x36x128xf32, #tpu.memory_space<vmem>>, vector<1x4x128xf32>,
    %224 = vector.extract_strided_slice %198 {offsets = [0, 12], sizes = [4, 128], strides = [1, 1]} : vector<4x256xbf16> to vector<4x128xbf16>
    %225 = arith.extf %224 : vector<4x128xbf16> to vector<4x128xf32>
    %c4_131 = arith.constant 4 : index
    %c20_132 = arith.constant 20 : index
    %c0_133 = arith.constant 0 : index
    %226 = vector.load %arg7[%c4_131, %c20_132, %c0_133] : memref<10x36x128xf32, #tpu.memory_space<vmem>>, vector<1x4x128xf32>
    %227 = vector.shape_cast %226 : vector<1x4x128xf32> to vector<4x128xf32>
    %228 = vector.shape_cast %225 : vector<4x128xf32> to vector<1x4x128xf32>
    tpu.vector_store %arg7[%c4_131, %c20_132, %c0_133], %228 {strides = array<i32>} : memref<10x36x128xf32, #tpu.memory_space<vmem>>, vector<1x4x128xf32>,
    %229 = vector.extract_strided_slice %198 {offsets = [0, 20], sizes = [4, 128], strides = [1, 1]} : vector<4x256xbf16> to vector<4x128xbf16>
    %230 = arith.extf %229 : vector<4x128xbf16> to vector<4x128xf32>
    %c4_134 = arith.constant 4 : index
    %c24_135 = arith.constant 24 : index
    %c0_136 = arith.constant 0 : index
    %231 = vector.load %arg7[%c4_134, %c24_135, %c0_136] : memref<10x36x128xf32, #tpu.memory_space<vmem>>, vector<1x4x128xf32>
    %232 = vector.shape_cast %231 : vector<1x4x128xf32> to vector<4x128xf32>
    %233 = vector.shape_cast %230 : vector<4x128xf32> to vector<1x4x128xf32>
    tpu.vector_store %arg7[%c4_134, %c24_135, %c0_136], %233 {strides = array<i32>} : memref<10x36x128xf32, #tpu.memory_space<vmem>>, vector<1x4x128xf32>,
    %234 = vector.extract_strided_slice %198 {offsets = [0, 21], sizes = [4, 128], strides = [1, 1]} : vector<4x256xbf16> to vector<4x128xbf16>
    %235 = arith.extf %234 : vector<4x128xbf16> to vector<4x128xf32>
    %c4_137 = arith.constant 4 : index
    %c28_138 = arith.constant 28 : index
    %c0_139 = arith.constant 0 : index
    %236 = vector.load %arg7[%c4_137, %c28_138, %c0_139] : memref<10x36x128xf32, #tpu.memory_space<vmem>>, vector<1x4x128xf32>
    %237 = vector.shape_cast %236 : vector<1x4x128xf32> to vector<4x128xf32>
    %238 = vector.shape_cast %235 : vector<4x128xf32> to vector<1x4x128xf32>
    tpu.vector_store %arg7[%c4_137, %c28_138, %c0_139], %238 {strides = array<i32>} : memref<10x36x128xf32, #tpu.memory_space<vmem>>, vector<1x4x128xf32>,
    %239 = vector.extract_strided_slice %198 {offsets = [0, 22], sizes = [4, 128], strides = [1, 1]} : vector<4x256xbf16> to vector<4x128xbf16>
    %240 = arith.extf %239 : vector<4x128xbf16> to vector<4x128xf32>
    %c4_140 = arith.constant 4 : index
    %c32_141 = arith.constant 32 : index
    %c0_142 = arith.constant 0 : index
    %241 = vector.load %arg7[%c4_140, %c32_141, %c0_142] : memref<10x36x128xf32, #tpu.memory_space<vmem>>, vector<1x4x128xf32>
    %242 = vector.shape_cast %241 : vector<1x4x128xf32> to vector<4x128xf32>
    %243 = vector.shape_cast %240 : vector<4x128xf32> to vector<1x4x128xf32>
    tpu.vector_store %arg7[%c4_140, %c32_141, %c0_142], %243 {strides = array<i32>} : memref<10x36x128xf32, #tpu.memory_space<vmem>>, vector<1x4x128xf32>,
    %c5 = arith.constant 5 : index
    %c0_143 = arith.constant 0 : index
    %c0_144 = arith.constant 0 : index
    %244 = vector.load %arg6[%c5, %c0_143, %c0_144] : memref<10x4x256xbf16, #tpu.memory_space<vmem>>, vector<1x4x256xbf16>
    %245 = vector.shape_cast %244 : vector<1x4x256xbf16> to vector<4x256xbf16>
    %246 = vector.extract_strided_slice %245 {offsets = [0, 0], sizes = [4, 128], strides = [1, 1]} : vector<4x256xbf16> to vector<4x128xbf16>
    %247 = arith.extf %246 : vector<4x128xbf16> to vector<4x128xf32>
    %c5_145 = arith.constant 5 : index
    %c0_146 = arith.constant 0 : index
    %c0_147 = arith.constant 0 : index
    %248 = vector.load %arg7[%c5_145, %c0_146, %c0_147] : memref<10x36x128xf32, #tpu.memory_space<vmem>>, vector<1x4x128xf32>
    %249 = vector.shape_cast %248 : vector<1x4x128xf32> to vector<4x128xf32>
    %250 = vector.shape_cast %247 : vector<4x128xf32> to vector<1x4x128xf32>
    tpu.vector_store %arg7[%c5_145, %c0_146, %c0_147], %250 {strides = array<i32>} : memref<10x36x128xf32, #tpu.memory_space<vmem>>, vector<1x4x128xf32>,
    %251 = vector.extract_strided_slice %245 {offsets = [0, 1], sizes = [4, 128], strides = [1, 1]} : vector<4x256xbf16> to vector<4x128xbf16>
    %252 = arith.extf %251 : vector<4x128xbf16> to vector<4x128xf32>
    %c5_148 = arith.constant 5 : index
    %c4_149 = arith.constant 4 : index
    %c0_150 = arith.constant 0 : index
    %253 = vector.load %arg7[%c5_148, %c4_149, %c0_150] : memref<10x36x128xf32, #tpu.memory_space<vmem>>, vector<1x4x128xf32>
    %254 = vector.shape_cast %253 : vector<1x4x128xf32> to vector<4x128xf32>
    %255 = vector.shape_cast %252 : vector<4x128xf32> to vector<1x4x128xf32>
    tpu.vector_store %arg7[%c5_148, %c4_149, %c0_150], %255 {strides = array<i32>} : memref<10x36x128xf32, #tpu.memory_space<vmem>>, vector<1x4x128xf32>,
    %256 = vector.extract_strided_slice %245 {offsets = [0, 2], sizes = [4, 128], strides = [1, 1]} : vector<4x256xbf16> to vector<4x128xbf16>
    %257 = arith.extf %256 : vector<4x128xbf16> to vector<4x128xf32>
    %c5_151 = arith.constant 5 : index
    %c8_152 = arith.constant 8 : index
    %c0_153 = arith.constant 0 : index
    %258 = vector.load %arg7[%c5_151, %c8_152, %c0_153] : memref<10x36x128xf32, #tpu.memory_space<vmem>>, vector<1x4x128xf32>
    %259 = vector.shape_cast %258 : vector<1x4x128xf32> to vector<4x128xf32>
    %260 = vector.shape_cast %257 : vector<4x128xf32> to vector<1x4x128xf32>
    tpu.vector_store %arg7[%c5_151, %c8_152, %c0_153], %260 {strides = array<i32>} : memref<10x36x128xf32, #tpu.memory_space<vmem>>, vector<1x4x128xf32>,
    %261 = vector.extract_strided_slice %245 {offsets = [0, 10], sizes = [4, 128], strides = [1, 1]} : vector<4x256xbf16> to vector<4x128xbf16>
    %262 = arith.extf %261 : vector<4x128xbf16> to vector<4x128xf32>
    %c5_154 = arith.constant 5 : index
    %c12_155 = arith.constant 12 : index
    %c0_156 = arith.constant 0 : index
    %263 = vector.load %arg7[%c5_154, %c12_155, %c0_156] : memref<10x36x128xf32, #tpu.memory_space<vmem>>, vector<1x4x128xf32>
    %264 = vector.shape_cast %263 : vector<1x4x128xf32> to vector<4x128xf32>
    %265 = vector.shape_cast %262 : vector<4x128xf32> to vector<1x4x128xf32>
    tpu.vector_store %arg7[%c5_154, %c12_155, %c0_156], %265 {strides = array<i32>} : memref<10x36x128xf32, #tpu.memory_space<vmem>>, vector<1x4x128xf32>,
    %266 = vector.extract_strided_slice %245 {offsets = [0, 11], sizes = [4, 128], strides = [1, 1]} : vector<4x256xbf16> to vector<4x128xbf16>
    %267 = arith.extf %266 : vector<4x128xbf16> to vector<4x128xf32>
    %c5_157 = arith.constant 5 : index
    %c16_158 = arith.constant 16 : index
    %c0_159 = arith.constant 0 : index
    %268 = vector.load %arg7[%c5_157, %c16_158, %c0_159] : memref<10x36x128xf32, #tpu.memory_space<vmem>>, vector<1x4x128xf32>
    %269 = vector.shape_cast %268 : vector<1x4x128xf32> to vector<4x128xf32>
    %270 = vector.shape_cast %267 : vector<4x128xf32> to vector<1x4x128xf32>
    tpu.vector_store %arg7[%c5_157, %c16_158, %c0_159], %270 {strides = array<i32>} : memref<10x36x128xf32, #tpu.memory_space<vmem>>, vector<1x4x128xf32>,
    %271 = vector.extract_strided_slice %245 {offsets = [0, 12], sizes = [4, 128], strides = [1, 1]} : vector<4x256xbf16> to vector<4x128xbf16>
    %272 = arith.extf %271 : vector<4x128xbf16> to vector<4x128xf32>
    %c5_160 = arith.constant 5 : index
    %c20_161 = arith.constant 20 : index
    %c0_162 = arith.constant 0 : index
    %273 = vector.load %arg7[%c5_160, %c20_161, %c0_162] : memref<10x36x128xf32, #tpu.memory_space<vmem>>, vector<1x4x128xf32>
    %274 = vector.shape_cast %273 : vector<1x4x128xf32> to vector<4x128xf32>
    %275 = vector.shape_cast %272 : vector<4x128xf32> to vector<1x4x128xf32>
    tpu.vector_store %arg7[%c5_160, %c20_161, %c0_162], %275 {strides = array<i32>} : memref<10x36x128xf32, #tpu.memory_space<vmem>>, vector<1x4x128xf32>,
    %276 = vector.extract_strided_slice %245 {offsets = [0, 20], sizes = [4, 128], strides = [1, 1]} : vector<4x256xbf16> to vector<4x128xbf16>
    %277 = arith.extf %276 : vector<4x128xbf16> to vector<4x128xf32>
    %c5_163 = arith.constant 5 : index
    %c24_164 = arith.constant 24 : index
    %c0_165 = arith.constant 0 : index
    %278 = vector.load %arg7[%c5_163, %c24_164, %c0_165] : memref<10x36x128xf32, #tpu.memory_space<vmem>>, vector<1x4x128xf32>
    %279 = vector.shape_cast %278 : vector<1x4x128xf32> to vector<4x128xf32>
    %280 = vector.shape_cast %277 : vector<4x128xf32> to vector<1x4x128xf32>
    tpu.vector_store %arg7[%c5_163, %c24_164, %c0_165], %280 {strides = array<i32>} : memref<10x36x128xf32, #tpu.memory_space<vmem>>, vector<1x4x128xf32>,
    %281 = vector.extract_strided_slice %245 {offsets = [0, 21], sizes = [4, 128], strides = [1, 1]} : vector<4x256xbf16> to vector<4x128xbf16>
    %282 = arith.extf %281 : vector<4x128xbf16> to vector<4x128xf32>
    %c5_166 = arith.constant 5 : index
    %c28_167 = arith.constant 28 : index
    %c0_168 = arith.constant 0 : index
    %283 = vector.load %arg7[%c5_166, %c28_167, %c0_168] : memref<10x36x128xf32, #tpu.memory_space<vmem>>, vector<1x4x128xf32>
    %284 = vector.shape_cast %283 : vector<1x4x128xf32> to vector<4x128xf32>
    %285 = vector.shape_cast %282 : vector<4x128xf32> to vector<1x4x128xf32>
    tpu.vector_store %arg7[%c5_166, %c28_167, %c0_168], %285 {strides = array<i32>} : memref<10x36x128xf32, #tpu.memory_space<vmem>>, vector<1x4x128xf32>,
    %286 = vector.extract_strided_slice %245 {offsets = [0, 22], sizes = [4, 128], strides = [1, 1]} : vector<4x256xbf16> to vector<4x128xbf16>
    %287 = arith.extf %286 : vector<4x128xbf16> to vector<4x128xf32>
    %c5_169 = arith.constant 5 : index
    %c32_170 = arith.constant 32 : index
    %c0_171 = arith.constant 0 : index
    %288 = vector.load %arg7[%c5_169, %c32_170, %c0_171] : memref<10x36x128xf32, #tpu.memory_space<vmem>>, vector<1x4x128xf32>
    %289 = vector.shape_cast %288 : vector<1x4x128xf32> to vector<4x128xf32>
    %290 = vector.shape_cast %287 : vector<4x128xf32> to vector<1x4x128xf32>
    tpu.vector_store %arg7[%c5_169, %c32_170, %c0_171], %290 {strides = array<i32>} : memref<10x36x128xf32, #tpu.memory_space<vmem>>, vector<1x4x128xf32>,
    %c6 = arith.constant 6 : index
    %c0_172 = arith.constant 0 : index
    %c0_173 = arith.constant 0 : index
    %291 = vector.load %arg6[%c6, %c0_172, %c0_173] : memref<10x4x256xbf16, #tpu.memory_space<vmem>>, vector<1x4x256xbf16>
    %292 = vector.shape_cast %291 : vector<1x4x256xbf16> to vector<4x256xbf16>
    %293 = vector.extract_strided_slice %292 {offsets = [0, 0], sizes = [4, 128], strides = [1, 1]} : vector<4x256xbf16> to vector<4x128xbf16>
    %294 = arith.extf %293 : vector<4x128xbf16> to vector<4x128xf32>
    %c6_174 = arith.constant 6 : index
    %c0_175 = arith.constant 0 : index
    %c0_176 = arith.constant 0 : index
    %295 = vector.load %arg7[%c6_174, %c0_175, %c0_176] : memref<10x36x128xf32, #tpu.memory_space<vmem>>, vector<1x4x128xf32>
    %296 = vector.shape_cast %295 : vector<1x4x128xf32> to vector<4x128xf32>
    %297 = vector.shape_cast %294 : vector<4x128xf32> to vector<1x4x128xf32>
    tpu.vector_store %arg7[%c6_174, %c0_175, %c0_176], %297 {strides = array<i32>} : memref<10x36x128xf32, #tpu.memory_space<vmem>>, vector<1x4x128xf32>,
    %298 = vector.extract_strided_slice %292 {offsets = [0, 1], sizes = [4, 128], strides = [1, 1]} : vector<4x256xbf16> to vector<4x128xbf16>
    %299 = arith.extf %298 : vector<4x128xbf16> to vector<4x128xf32>
    %c6_177 = arith.constant 6 : index
    %c4_178 = arith.constant 4 : index
    %c0_179 = arith.constant 0 : index
    %300 = vector.load %arg7[%c6_177, %c4_178, %c0_179] : memref<10x36x128xf32, #tpu.memory_space<vmem>>, vector<1x4x128xf32>
    %301 = vector.shape_cast %300 : vector<1x4x128xf32> to vector<4x128xf32>
    %302 = vector.shape_cast %299 : vector<4x128xf32> to vector<1x4x128xf32>
    tpu.vector_store %arg7[%c6_177, %c4_178, %c0_179], %302 {strides = array<i32>} : memref<10x36x128xf32, #tpu.memory_space<vmem>>, vector<1x4x128xf32>,
    %303 = vector.extract_strided_slice %292 {offsets = [0, 2], sizes = [4, 128], strides = [1, 1]} : vector<4x256xbf16> to vector<4x128xbf16>
    %304 = arith.extf %303 : vector<4x128xbf16> to vector<4x128xf32>
    %c6_180 = arith.constant 6 : index
    %c8_181 = arith.constant 8 : index
    %c0_182 = arith.constant 0 : index
    %305 = vector.load %arg7[%c6_180, %c8_181, %c0_182] : memref<10x36x128xf32, #tpu.memory_space<vmem>>, vector<1x4x128xf32>
    %306 = vector.shape_cast %305 : vector<1x4x128xf32> to vector<4x128xf32>
    %307 = vector.shape_cast %304 : vector<4x128xf32> to vector<1x4x128xf32>
    tpu.vector_store %arg7[%c6_180, %c8_181, %c0_182], %307 {strides = array<i32>} : memref<10x36x128xf32, #tpu.memory_space<vmem>>, vector<1x4x128xf32>,
    %308 = vector.extract_strided_slice %292 {offsets = [0, 10], sizes = [4, 128], strides = [1, 1]} : vector<4x256xbf16> to vector<4x128xbf16>
    %309 = arith.extf %308 : vector<4x128xbf16> to vector<4x128xf32>
    %c6_183 = arith.constant 6 : index
    %c12_184 = arith.constant 12 : index
    %c0_185 = arith.constant 0 : index
    %310 = vector.load %arg7[%c6_183, %c12_184, %c0_185] : memref<10x36x128xf32, #tpu.memory_space<vmem>>, vector<1x4x128xf32>
    %311 = vector.shape_cast %310 : vector<1x4x128xf32> to vector<4x128xf32>
    %312 = vector.shape_cast %309 : vector<4x128xf32> to vector<1x4x128xf32>
    tpu.vector_store %arg7[%c6_183, %c12_184, %c0_185], %312 {strides = array<i32>} : memref<10x36x128xf32, #tpu.memory_space<vmem>>, vector<1x4x128xf32>,
    %313 = vector.extract_strided_slice %292 {offsets = [0, 11], sizes = [4, 128], strides = [1, 1]} : vector<4x256xbf16> to vector<4x128xbf16>
    %314 = arith.extf %313 : vector<4x128xbf16> to vector<4x128xf32>
    %c6_186 = arith.constant 6 : index
    %c16_187 = arith.constant 16 : index
    %c0_188 = arith.constant 0 : index
    %315 = vector.load %arg7[%c6_186, %c16_187, %c0_188] : memref<10x36x128xf32, #tpu.memory_space<vmem>>, vector<1x4x128xf32>
    %316 = vector.shape_cast %315 : vector<1x4x128xf32> to vector<4x128xf32>
    %317 = vector.shape_cast %314 : vector<4x128xf32> to vector<1x4x128xf32>
    tpu.vector_store %arg7[%c6_186, %c16_187, %c0_188], %317 {strides = array<i32>} : memref<10x36x128xf32, #tpu.memory_space<vmem>>, vector<1x4x128xf32>,
    %318 = vector.extract_strided_slice %292 {offsets = [0, 12], sizes = [4, 128], strides = [1, 1]} : vector<4x256xbf16> to vector<4x128xbf16>
    %319 = arith.extf %318 : vector<4x128xbf16> to vector<4x128xf32>
    %c6_189 = arith.constant 6 : index
    %c20_190 = arith.constant 20 : index
    %c0_191 = arith.constant 0 : index
    %320 = vector.load %arg7[%c6_189, %c20_190, %c0_191] : memref<10x36x128xf32, #tpu.memory_space<vmem>>, vector<1x4x128xf32>
    %321 = vector.shape_cast %320 : vector<1x4x128xf32> to vector<4x128xf32>
    %322 = vector.shape_cast %319 : vector<4x128xf32> to vector<1x4x128xf32>
    tpu.vector_store %arg7[%c6_189, %c20_190, %c0_191], %322 {strides = array<i32>} : memref<10x36x128xf32, #tpu.memory_space<vmem>>, vector<1x4x128xf32>,
    %323 = vector.extract_strided_slice %292 {offsets = [0, 20], sizes = [4, 128], strides = [1, 1]} : vector<4x256xbf16> to vector<4x128xbf16>
    %324 = arith.extf %323 : vector<4x128xbf16> to vector<4x128xf32>
    %c6_192 = arith.constant 6 : index
    %c24_193 = arith.constant 24 : index
    %c0_194 = arith.constant 0 : index
    %325 = vector.load %arg7[%c6_192, %c24_193, %c0_194] : memref<10x36x128xf32, #tpu.memory_space<vmem>>, vector<1x4x128xf32>
    %326 = vector.shape_cast %325 : vector<1x4x128xf32> to vector<4x128xf32>
    %327 = vector.shape_cast %324 : vector<4x128xf32> to vector<1x4x128xf32>
    tpu.vector_store %arg7[%c6_192, %c24_193, %c0_194], %327 {strides = array<i32>} : memref<10x36x128xf32, #tpu.memory_space<vmem>>, vector<1x4x128xf32>,
    %328 = vector.extract_strided_slice %292 {offsets = [0, 21], sizes = [4, 128], strides = [1, 1]} : vector<4x256xbf16> to vector<4x128xbf16>
    %329 = arith.extf %328 : vector<4x128xbf16> to vector<4x128xf32>
    %c6_195 = arith.constant 6 : index
    %c28_196 = arith.constant 28 : index
    %c0_197 = arith.constant 0 : index
    %330 = vector.load %arg7[%c6_195, %c28_196, %c0_197] : memref<10x36x128xf32, #tpu.memory_space<vmem>>, vector<1x4x128xf32>
    %331 = vector.shape_cast %330 : vector<1x4x128xf32> to vector<4x128xf32>
    %332 = vector.shape_cast %329 : vector<4x128xf32> to vector<1x4x128xf32>
    tpu.vector_store %arg7[%c6_195, %c28_196, %c0_197], %332 {strides = array<i32>} : memref<10x36x128xf32, #tpu.memory_space<vmem>>, vector<1x4x128xf32>,
    %333 = vector.extract_strided_slice %292 {offsets = [0, 22], sizes = [4, 128], strides = [1, 1]} : vector<4x256xbf16> to vector<4x128xbf16>
    %334 = arith.extf %333 : vector<4x128xbf16> to vector<4x128xf32>
    %c6_198 = arith.constant 6 : index
    %c32_199 = arith.constant 32 : index
    %c0_200 = arith.constant 0 : index
    %335 = vector.load %arg7[%c6_198, %c32_199, %c0_200] : memref<10x36x128xf32, #tpu.memory_space<vmem>>, vector<1x4x128xf32>
    %336 = vector.shape_cast %335 : vector<1x4x128xf32> to vector<4x128xf32>
    %337 = vector.shape_cast %334 : vector<4x128xf32> to vector<1x4x128xf32>
    tpu.vector_store %arg7[%c6_198, %c32_199, %c0_200], %337 {strides = array<i32>} : memref<10x36x128xf32, #tpu.memory_space<vmem>>, vector<1x4x128xf32>,
    %c7 = arith.constant 7 : index
    %c0_201 = arith.constant 0 : index
    %c0_202 = arith.constant 0 : index
    %338 = vector.load %arg6[%c7, %c0_201, %c0_202] : memref<10x4x256xbf16, #tpu.memory_space<vmem>>, vector<1x4x256xbf16>
    %339 = vector.shape_cast %338 : vector<1x4x256xbf16> to vector<4x256xbf16>
    %340 = vector.extract_strided_slice %339 {offsets = [0, 0], sizes = [4, 128], strides = [1, 1]} : vector<4x256xbf16> to vector<4x128xbf16>
    %341 = arith.extf %340 : vector<4x128xbf16> to vector<4x128xf32>
    %c7_203 = arith.constant 7 : index
    %c0_204 = arith.constant 0 : index
    %c0_205 = arith.constant 0 : index
    %342 = vector.load %arg7[%c7_203, %c0_204, %c0_205] : memref<10x36x128xf32, #tpu.memory_space<vmem>>, vector<1x4x128xf32>
    %343 = vector.shape_cast %342 : vector<1x4x128xf32> to vector<4x128xf32>
    %344 = vector.shape_cast %341 : vector<4x128xf32> to vector<1x4x128xf32>
    tpu.vector_store %arg7[%c7_203, %c0_204, %c0_205], %344 {strides = array<i32>} : memref<10x36x128xf32, #tpu.memory_space<vmem>>, vector<1x4x128xf32>,
    %345 = vector.extract_strided_slice %339 {offsets = [0, 1], sizes = [4, 128], strides = [1, 1]} : vector<4x256xbf16> to vector<4x128xbf16>
    %346 = arith.extf %345 : vector<4x128xbf16> to vector<4x128xf32>
    %c7_206 = arith.constant 7 : index
    %c4_207 = arith.constant 4 : index
    %c0_208 = arith.constant 0 : index
    %347 = vector.load %arg7[%c7_206, %c4_207, %c0_208] : memref<10x36x128xf32, #tpu.memory_space<vmem>>, vector<1x4x128xf32>
    %348 = vector.shape_cast %347 : vector<1x4x128xf32> to vector<4x128xf32>
    %349 = vector.shape_cast %346 : vector<4x128xf32> to vector<1x4x128xf32>
    tpu.vector_store %arg7[%c7_206, %c4_207, %c0_208], %349 {strides = array<i32>} : memref<10x36x128xf32, #tpu.memory_space<vmem>>, vector<1x4x128xf32>,
    %350 = vector.extract_strided_slice %339 {offsets = [0, 2], sizes = [4, 128], strides = [1, 1]} : vector<4x256xbf16> to vector<4x128xbf16>
    %351 = arith.extf %350 : vector<4x128xbf16> to vector<4x128xf32>
    %c7_209 = arith.constant 7 : index
    %c8_210 = arith.constant 8 : index
    %c0_211 = arith.constant 0 : index
    %352 = vector.load %arg7[%c7_209, %c8_210, %c0_211] : memref<10x36x128xf32, #tpu.memory_space<vmem>>, vector<1x4x128xf32>
    %353 = vector.shape_cast %352 : vector<1x4x128xf32> to vector<4x128xf32>
    %354 = vector.shape_cast %351 : vector<4x128xf32> to vector<1x4x128xf32>
    tpu.vector_store %arg7[%c7_209, %c8_210, %c0_211], %354 {strides = array<i32>} : memref<10x36x128xf32, #tpu.memory_space<vmem>>, vector<1x4x128xf32>,
    %355 = vector.extract_strided_slice %339 {offsets = [0, 10], sizes = [4, 128], strides = [1, 1]} : vector<4x256xbf16> to vector<4x128xbf16>
    %356 = arith.extf %355 : vector<4x128xbf16> to vector<4x128xf32>
    %c7_212 = arith.constant 7 : index
    %c12_213 = arith.constant 12 : index
    %c0_214 = arith.constant 0 : index
    %357 = vector.load %arg7[%c7_212, %c12_213, %c0_214] : memref<10x36x128xf32, #tpu.memory_space<vmem>>, vector<1x4x128xf32>
    %358 = vector.shape_cast %357 : vector<1x4x128xf32> to vector<4x128xf32>
    %359 = vector.shape_cast %356 : vector<4x128xf32> to vector<1x4x128xf32>
    tpu.vector_store %arg7[%c7_212, %c12_213, %c0_214], %359 {strides = array<i32>} : memref<10x36x128xf32, #tpu.memory_space<vmem>>, vector<1x4x128xf32>,
    %360 = vector.extract_strided_slice %339 {offsets = [0, 11], sizes = [4, 128], strides = [1, 1]} : vector<4x256xbf16> to vector<4x128xbf16>
    %361 = arith.extf %360 : vector<4x128xbf16> to vector<4x128xf32>
    %c7_215 = arith.constant 7 : index
    %c16_216 = arith.constant 16 : index
    %c0_217 = arith.constant 0 : index
    %362 = vector.load %arg7[%c7_215, %c16_216, %c0_217] : memref<10x36x128xf32, #tpu.memory_space<vmem>>, vector<1x4x128xf32>
    %363 = vector.shape_cast %362 : vector<1x4x128xf32> to vector<4x128xf32>
    %364 = vector.shape_cast %361 : vector<4x128xf32> to vector<1x4x128xf32>
    tpu.vector_store %arg7[%c7_215, %c16_216, %c0_217], %364 {strides = array<i32>} : memref<10x36x128xf32, #tpu.memory_space<vmem>>, vector<1x4x128xf32>,
    %365 = vector.extract_strided_slice %339 {offsets = [0, 12], sizes = [4, 128], strides = [1, 1]} : vector<4x256xbf16> to vector<4x128xbf16>
    %366 = arith.extf %365 : vector<4x128xbf16> to vector<4x128xf32>
    %c7_218 = arith.constant 7 : index
    %c20_219 = arith.constant 20 : index
    %c0_220 = arith.constant 0 : index
    %367 = vector.load %arg7[%c7_218, %c20_219, %c0_220] : memref<10x36x128xf32, #tpu.memory_space<vmem>>, vector<1x4x128xf32>
    %368 = vector.shape_cast %367 : vector<1x4x128xf32> to vector<4x128xf32>
    %369 = vector.shape_cast %366 : vector<4x128xf32> to vector<1x4x128xf32>
    tpu.vector_store %arg7[%c7_218, %c20_219, %c0_220], %369 {strides = array<i32>} : memref<10x36x128xf32, #tpu.memory_space<vmem>>, vector<1x4x128xf32>,
    %370 = vector.extract_strided_slice %339 {offsets = [0, 20], sizes = [4, 128], strides = [1, 1]} : vector<4x256xbf16> to vector<4x128xbf16>
    %371 = arith.extf %370 : vector<4x128xbf16> to vector<4x128xf32>
    %c7_221 = arith.constant 7 : index
    %c24_222 = arith.constant 24 : index
    %c0_223 = arith.constant 0 : index
    %372 = vector.load %arg7[%c7_221, %c24_222, %c0_223] : memref<10x36x128xf32, #tpu.memory_space<vmem>>, vector<1x4x128xf32>
    %373 = vector.shape_cast %372 : vector<1x4x128xf32> to vector<4x128xf32>
    %374 = vector.shape_cast %371 : vector<4x128xf32> to vector<1x4x128xf32>
    tpu.vector_store %arg7[%c7_221, %c24_222, %c0_223], %374 {strides = array<i32>} : memref<10x36x128xf32, #tpu.memory_space<vmem>>, vector<1x4x128xf32>,
    %375 = vector.extract_strided_slice %339 {offsets = [0, 21], sizes = [4, 128], strides = [1, 1]} : vector<4x256xbf16> to vector<4x128xbf16>
    %376 = arith.extf %375 : vector<4x128xbf16> to vector<4x128xf32>
    %c7_224 = arith.constant 7 : index
    %c28_225 = arith.constant 28 : index
    %c0_226 = arith.constant 0 : index
    %377 = vector.load %arg7[%c7_224, %c28_225, %c0_226] : memref<10x36x128xf32, #tpu.memory_space<vmem>>, vector<1x4x128xf32>
    %378 = vector.shape_cast %377 : vector<1x4x128xf32> to vector<4x128xf32>
    %379 = vector.shape_cast %376 : vector<4x128xf32> to vector<1x4x128xf32>
    tpu.vector_store %arg7[%c7_224, %c28_225, %c0_226], %379 {strides = array<i32>} : memref<10x36x128xf32, #tpu.memory_space<vmem>>, vector<1x4x128xf32>,
    %380 = vector.extract_strided_slice %339 {offsets = [0, 22], sizes = [4, 128], strides = [1, 1]} : vector<4x256xbf16> to vector<4x128xbf16>
    %381 = arith.extf %380 : vector<4x128xbf16> to vector<4x128xf32>
    %c7_227 = arith.constant 7 : index
    %c32_228 = arith.constant 32 : index
    %c0_229 = arith.constant 0 : index
    %382 = vector.load %arg7[%c7_227, %c32_228, %c0_229] : memref<10x36x128xf32, #tpu.memory_space<vmem>>, vector<1x4x128xf32>
    %383 = vector.shape_cast %382 : vector<1x4x128xf32> to vector<4x128xf32>
    %384 = vector.shape_cast %381 : vector<4x128xf32> to vector<1x4x128xf32>
    tpu.vector_store %arg7[%c7_227, %c32_228, %c0_229], %384 {strides = array<i32>} : memref<10x36x128xf32, #tpu.memory_space<vmem>>, vector<1x4x128xf32>,
    %c8_230 = arith.constant 8 : index
    %c0_231 = arith.constant 0 : index
    %c0_232 = arith.constant 0 : index
    %385 = vector.load %arg6[%c8_230, %c0_231, %c0_232] : memref<10x4x256xbf16, #tpu.memory_space<vmem>>, vector<1x4x256xbf16>
    %386 = vector.shape_cast %385 : vector<1x4x256xbf16> to vector<4x256xbf16>
    %387 = vector.extract_strided_slice %386 {offsets = [0, 0], sizes = [4, 128], strides = [1, 1]} : vector<4x256xbf16> to vector<4x128xbf16>
    %388 = arith.extf %387 : vector<4x128xbf16> to vector<4x128xf32>
    %c8_233 = arith.constant 8 : index
    %c0_234 = arith.constant 0 : index
    %c0_235 = arith.constant 0 : index
    %389 = vector.load %arg7[%c8_233, %c0_234, %c0_235] : memref<10x36x128xf32, #tpu.memory_space<vmem>>, vector<1x4x128xf32>
    %390 = vector.shape_cast %389 : vector<1x4x128xf32> to vector<4x128xf32>
    %391 = vector.shape_cast %388 : vector<4x128xf32> to vector<1x4x128xf32>
    tpu.vector_store %arg7[%c8_233, %c0_234, %c0_235], %391 {strides = array<i32>} : memref<10x36x128xf32, #tpu.memory_space<vmem>>, vector<1x4x128xf32>,
    %392 = vector.extract_strided_slice %386 {offsets = [0, 1], sizes = [4, 128], strides = [1, 1]} : vector<4x256xbf16> to vector<4x128xbf16>
    %393 = arith.extf %392 : vector<4x128xbf16> to vector<4x128xf32>
    %c8_236 = arith.constant 8 : index
    %c4_237 = arith.constant 4 : index
    %c0_238 = arith.constant 0 : index
    %394 = vector.load %arg7[%c8_236, %c4_237, %c0_238] : memref<10x36x128xf32, #tpu.memory_space<vmem>>, vector<1x4x128xf32>
    %395 = vector.shape_cast %394 : vector<1x4x128xf32> to vector<4x128xf32>
    %396 = vector.shape_cast %393 : vector<4x128xf32> to vector<1x4x128xf32>
    tpu.vector_store %arg7[%c8_236, %c4_237, %c0_238], %396 {strides = array<i32>} : memref<10x36x128xf32, #tpu.memory_space<vmem>>, vector<1x4x128xf32>,
    %397 = vector.extract_strided_slice %386 {offsets = [0, 2], sizes = [4, 128], strides = [1, 1]} : vector<4x256xbf16> to vector<4x128xbf16>
    %398 = arith.extf %397 : vector<4x128xbf16> to vector<4x128xf32>
    %c8_239 = arith.constant 8 : index
    %c8_240 = arith.constant 8 : index
    %c0_241 = arith.constant 0 : index
    %399 = vector.load %arg7[%c8_239, %c8_240, %c0_241] : memref<10x36x128xf32, #tpu.memory_space<vmem>>, vector<1x4x128xf32>
    %400 = vector.shape_cast %399 : vector<1x4x128xf32> to vector<4x128xf32>
    %401 = vector.shape_cast %398 : vector<4x128xf32> to vector<1x4x128xf32>
    tpu.vector_store %arg7[%c8_239, %c8_240, %c0_241], %401 {strides = array<i32>} : memref<10x36x128xf32, #tpu.memory_space<vmem>>, vector<1x4x128xf32>,
    %402 = vector.extract_strided_slice %386 {offsets = [0, 10], sizes = [4, 128], strides = [1, 1]} : vector<4x256xbf16> to vector<4x128xbf16>
    %403 = arith.extf %402 : vector<4x128xbf16> to vector<4x128xf32>
    %c8_242 = arith.constant 8 : index
    %c12_243 = arith.constant 12 : index
    %c0_244 = arith.constant 0 : index
    %404 = vector.load %arg7[%c8_242, %c12_243, %c0_244] : memref<10x36x128xf32, #tpu.memory_space<vmem>>, vector<1x4x128xf32>
    %405 = vector.shape_cast %404 : vector<1x4x128xf32> to vector<4x128xf32>
    %406 = vector.shape_cast %403 : vector<4x128xf32> to vector<1x4x128xf32>
    tpu.vector_store %arg7[%c8_242, %c12_243, %c0_244], %406 {strides = array<i32>} : memref<10x36x128xf32, #tpu.memory_space<vmem>>, vector<1x4x128xf32>,
    %407 = vector.extract_strided_slice %386 {offsets = [0, 11], sizes = [4, 128], strides = [1, 1]} : vector<4x256xbf16> to vector<4x128xbf16>
    %408 = arith.extf %407 : vector<4x128xbf16> to vector<4x128xf32>
    %c8_245 = arith.constant 8 : index
    %c16_246 = arith.constant 16 : index
    %c0_247 = arith.constant 0 : index
    %409 = vector.load %arg7[%c8_245, %c16_246, %c0_247] : memref<10x36x128xf32, #tpu.memory_space<vmem>>, vector<1x4x128xf32>
    %410 = vector.shape_cast %409 : vector<1x4x128xf32> to vector<4x128xf32>
    %411 = vector.shape_cast %408 : vector<4x128xf32> to vector<1x4x128xf32>
    tpu.vector_store %arg7[%c8_245, %c16_246, %c0_247], %411 {strides = array<i32>} : memref<10x36x128xf32, #tpu.memory_space<vmem>>, vector<1x4x128xf32>,
    %412 = vector.extract_strided_slice %386 {offsets = [0, 12], sizes = [4, 128], strides = [1, 1]} : vector<4x256xbf16> to vector<4x128xbf16>
    %413 = arith.extf %412 : vector<4x128xbf16> to vector<4x128xf32>
    %c8_248 = arith.constant 8 : index
    %c20_249 = arith.constant 20 : index
    %c0_250 = arith.constant 0 : index
    %414 = vector.load %arg7[%c8_248, %c20_249, %c0_250] : memref<10x36x128xf32, #tpu.memory_space<vmem>>, vector<1x4x128xf32>
    %415 = vector.shape_cast %414 : vector<1x4x128xf32> to vector<4x128xf32>
    %416 = vector.shape_cast %413 : vector<4x128xf32> to vector<1x4x128xf32>
    tpu.vector_store %arg7[%c8_248, %c20_249, %c0_250], %416 {strides = array<i32>} : memref<10x36x128xf32, #tpu.memory_space<vmem>>, vector<1x4x128xf32>,
    %417 = vector.extract_strided_slice %386 {offsets = [0, 20], sizes = [4, 128], strides = [1, 1]} : vector<4x256xbf16> to vector<4x128xbf16>
    %418 = arith.extf %417 : vector<4x128xbf16> to vector<4x128xf32>
    %c8_251 = arith.constant 8 : index
    %c24_252 = arith.constant 24 : index
    %c0_253 = arith.constant 0 : index
    %419 = vector.load %arg7[%c8_251, %c24_252, %c0_253] : memref<10x36x128xf32, #tpu.memory_space<vmem>>, vector<1x4x128xf32>
    %420 = vector.shape_cast %419 : vector<1x4x128xf32> to vector<4x128xf32>
    %421 = vector.shape_cast %418 : vector<4x128xf32> to vector<1x4x128xf32>
    tpu.vector_store %arg7[%c8_251, %c24_252, %c0_253], %421 {strides = array<i32>} : memref<10x36x128xf32, #tpu.memory_space<vmem>>, vector<1x4x128xf32>,
    %422 = vector.extract_strided_slice %386 {offsets = [0, 21], sizes = [4, 128], strides = [1, 1]} : vector<4x256xbf16> to vector<4x128xbf16>
    %423 = arith.extf %422 : vector<4x128xbf16> to vector<4x128xf32>
    %c8_254 = arith.constant 8 : index
    %c28_255 = arith.constant 28 : index
    %c0_256 = arith.constant 0 : index
    %424 = vector.load %arg7[%c8_254, %c28_255, %c0_256] : memref<10x36x128xf32, #tpu.memory_space<vmem>>, vector<1x4x128xf32>
    %425 = vector.shape_cast %424 : vector<1x4x128xf32> to vector<4x128xf32>
    %426 = vector.shape_cast %423 : vector<4x128xf32> to vector<1x4x128xf32>
    tpu.vector_store %arg7[%c8_254, %c28_255, %c0_256], %426 {strides = array<i32>} : memref<10x36x128xf32, #tpu.memory_space<vmem>>, vector<1x4x128xf32>,
    %427 = vector.extract_strided_slice %386 {offsets = [0, 22], sizes = [4, 128], strides = [1, 1]} : vector<4x256xbf16> to vector<4x128xbf16>
    %428 = arith.extf %427 : vector<4x128xbf16> to vector<4x128xf32>
    %c8_257 = arith.constant 8 : index
    %c32_258 = arith.constant 32 : index
    %c0_259 = arith.constant 0 : index
    %429 = vector.load %arg7[%c8_257, %c32_258, %c0_259] : memref<10x36x128xf32, #tpu.memory_space<vmem>>, vector<1x4x128xf32>
    %430 = vector.shape_cast %429 : vector<1x4x128xf32> to vector<4x128xf32>
    %431 = vector.shape_cast %428 : vector<4x128xf32> to vector<1x4x128xf32>
    tpu.vector_store %arg7[%c8_257, %c32_258, %c0_259], %431 {strides = array<i32>} : memref<10x36x128xf32, #tpu.memory_space<vmem>>, vector<1x4x128xf32>,
    %c9 = arith.constant 9 : index
    %c0_260 = arith.constant 0 : index
    %c0_261 = arith.constant 0 : index
    %432 = vector.load %arg6[%c9, %c0_260, %c0_261] : memref<10x4x256xbf16, #tpu.memory_space<vmem>>, vector<1x4x256xbf16>
    %433 = vector.shape_cast %432 : vector<1x4x256xbf16> to vector<4x256xbf16>
    %434 = vector.extract_strided_slice %433 {offsets = [0, 0], sizes = [4, 128], strides = [1, 1]} : vector<4x256xbf16> to vector<4x128xbf16>
    %435 = arith.extf %434 : vector<4x128xbf16> to vector<4x128xf32>
    %c9_262 = arith.constant 9 : index
    %c0_263 = arith.constant 0 : index
    %c0_264 = arith.constant 0 : index
    %436 = vector.load %arg7[%c9_262, %c0_263, %c0_264] : memref<10x36x128xf32, #tpu.memory_space<vmem>>, vector<1x4x128xf32>
    %437 = vector.shape_cast %436 : vector<1x4x128xf32> to vector<4x128xf32>
    %438 = vector.shape_cast %435 : vector<4x128xf32> to vector<1x4x128xf32>
    tpu.vector_store %arg7[%c9_262, %c0_263, %c0_264], %438 {strides = array<i32>} : memref<10x36x128xf32, #tpu.memory_space<vmem>>, vector<1x4x128xf32>,
    %439 = vector.extract_strided_slice %433 {offsets = [0, 1], sizes = [4, 128], strides = [1, 1]} : vector<4x256xbf16> to vector<4x128xbf16>
    %440 = arith.extf %439 : vector<4x128xbf16> to vector<4x128xf32>
    %c9_265 = arith.constant 9 : index
    %c4_266 = arith.constant 4 : index
    %c0_267 = arith.constant 0 : index
    %441 = vector.load %arg7[%c9_265, %c4_266, %c0_267] : memref<10x36x128xf32, #tpu.memory_space<vmem>>, vector<1x4x128xf32>
    %442 = vector.shape_cast %441 : vector<1x4x128xf32> to vector<4x128xf32>
    %443 = vector.shape_cast %440 : vector<4x128xf32> to vector<1x4x128xf32>
    tpu.vector_store %arg7[%c9_265, %c4_266, %c0_267], %443 {strides = array<i32>} : memref<10x36x128xf32, #tpu.memory_space<vmem>>, vector<1x4x128xf32>,
    %444 = vector.extract_strided_slice %433 {offsets = [0, 2], sizes = [4, 128], strides = [1, 1]} : vector<4x256xbf16> to vector<4x128xbf16>
    %445 = arith.extf %444 : vector<4x128xbf16> to vector<4x128xf32>
    %c9_268 = arith.constant 9 : index
    %c8_269 = arith.constant 8 : index
    %c0_270 = arith.constant 0 : index
    %446 = vector.load %arg7[%c9_268, %c8_269, %c0_270] : memref<10x36x128xf32, #tpu.memory_space<vmem>>, vector<1x4x128xf32>
    %447 = vector.shape_cast %446 : vector<1x4x128xf32> to vector<4x128xf32>
    %448 = vector.shape_cast %445 : vector<4x128xf32> to vector<1x4x128xf32>
    tpu.vector_store %arg7[%c9_268, %c8_269, %c0_270], %448 {strides = array<i32>} : memref<10x36x128xf32, #tpu.memory_space<vmem>>, vector<1x4x128xf32>,
    %449 = vector.extract_strided_slice %433 {offsets = [0, 10], sizes = [4, 128], strides = [1, 1]} : vector<4x256xbf16> to vector<4x128xbf16>
    %450 = arith.extf %449 : vector<4x128xbf16> to vector<4x128xf32>
    %c9_271 = arith.constant 9 : index
    %c12_272 = arith.constant 12 : index
    %c0_273 = arith.constant 0 : index
    %451 = vector.load %arg7[%c9_271, %c12_272, %c0_273] : memref<10x36x128xf32, #tpu.memory_space<vmem>>, vector<1x4x128xf32>
    %452 = vector.shape_cast %451 : vector<1x4x128xf32> to vector<4x128xf32>
    %453 = vector.shape_cast %450 : vector<4x128xf32> to vector<1x4x128xf32>
    tpu.vector_store %arg7[%c9_271, %c12_272, %c0_273], %453 {strides = array<i32>} : memref<10x36x128xf32, #tpu.memory_space<vmem>>, vector<1x4x128xf32>,
    %454 = vector.extract_strided_slice %433 {offsets = [0, 11], sizes = [4, 128], strides = [1, 1]} : vector<4x256xbf16> to vector<4x128xbf16>
    %455 = arith.extf %454 : vector<4x128xbf16> to vector<4x128xf32>
    %c9_274 = arith.constant 9 : index
    %c16_275 = arith.constant 16 : index
    %c0_276 = arith.constant 0 : index
    %456 = vector.load %arg7[%c9_274, %c16_275, %c0_276] : memref<10x36x128xf32, #tpu.memory_space<vmem>>, vector<1x4x128xf32>
    %457 = vector.shape_cast %456 : vector<1x4x128xf32> to vector<4x128xf32>
    %458 = vector.shape_cast %455 : vector<4x128xf32> to vector<1x4x128xf32>
    tpu.vector_store %arg7[%c9_274, %c16_275, %c0_276], %458 {strides = array<i32>} : memref<10x36x128xf32, #tpu.memory_space<vmem>>, vector<1x4x128xf32>,
    %459 = vector.extract_strided_slice %433 {offsets = [0, 12], sizes = [4, 128], strides = [1, 1]} : vector<4x256xbf16> to vector<4x128xbf16>
    %460 = arith.extf %459 : vector<4x128xbf16> to vector<4x128xf32>
    %c9_277 = arith.constant 9 : index
    %c20_278 = arith.constant 20 : index
    %c0_279 = arith.constant 0 : index
    %461 = vector.load %arg7[%c9_277, %c20_278, %c0_279] : memref<10x36x128xf32, #tpu.memory_space<vmem>>, vector<1x4x128xf32>
    %462 = vector.shape_cast %461 : vector<1x4x128xf32> to vector<4x128xf32>
    %463 = vector.shape_cast %460 : vector<4x128xf32> to vector<1x4x128xf32>
    tpu.vector_store %arg7[%c9_277, %c20_278, %c0_279], %463 {strides = array<i32>} : memref<10x36x128xf32, #tpu.memory_space<vmem>>, vector<1x4x128xf32>,
    %464 = vector.extract_strided_slice %433 {offsets = [0, 20], sizes = [4, 128], strides = [1, 1]} : vector<4x256xbf16> to vector<4x128xbf16>
    %465 = arith.extf %464 : vector<4x128xbf16> to vector<4x128xf32>
    %c9_280 = arith.constant 9 : index
    %c24_281 = arith.constant 24 : index
    %c0_282 = arith.constant 0 : index
    %466 = vector.load %arg7[%c9_280, %c24_281, %c0_282] : memref<10x36x128xf32, #tpu.memory_space<vmem>>, vector<1x4x128xf32>
    %467 = vector.shape_cast %466 : vector<1x4x128xf32> to vector<4x128xf32>
    %468 = vector.shape_cast %465 : vector<4x128xf32> to vector<1x4x128xf32>
    tpu.vector_store %arg7[%c9_280, %c24_281, %c0_282], %468 {strides = array<i32>} : memref<10x36x128xf32, #tpu.memory_space<vmem>>, vector<1x4x128xf32>,
    %469 = vector.extract_strided_slice %433 {offsets = [0, 21], sizes = [4, 128], strides = [1, 1]} : vector<4x256xbf16> to vector<4x128xbf16>
    %470 = arith.extf %469 : vector<4x128xbf16> to vector<4x128xf32>
    %c9_283 = arith.constant 9 : index
    %c28_284 = arith.constant 28 : index
    %c0_285 = arith.constant 0 : index
    %471 = vector.load %arg7[%c9_283, %c28_284, %c0_285] : memref<10x36x128xf32, #tpu.memory_space<vmem>>, vector<1x4x128xf32>
    %472 = vector.shape_cast %471 : vector<1x4x128xf32> to vector<4x128xf32>
    %473 = vector.shape_cast %470 : vector<4x128xf32> to vector<1x4x128xf32>
    tpu.vector_store %arg7[%c9_283, %c28_284, %c0_285], %473 {strides = array<i32>} : memref<10x36x128xf32, #tpu.memory_space<vmem>>, vector<1x4x128xf32>,
    %474 = vector.extract_strided_slice %433 {offsets = [0, 22], sizes = [4, 128], strides = [1, 1]} : vector<4x256xbf16> to vector<4x128xbf16>
    %475 = arith.extf %474 : vector<4x128xbf16> to vector<4x128xf32>
    %c9_286 = arith.constant 9 : index
    %c32_287 = arith.constant 32 : index
    %c0_288 = arith.constant 0 : index
    %476 = vector.load %arg7[%c9_286, %c32_287, %c0_288] : memref<10x36x128xf32, #tpu.memory_space<vmem>>, vector<1x4x128xf32>
    %477 = vector.shape_cast %476 : vector<1x4x128xf32> to vector<4x128xf32>
    %478 = vector.shape_cast %475 : vector<4x128xf32> to vector<1x4x128xf32>
    tpu.vector_store %arg7[%c9_286, %c32_287, %c0_288], %478 {strides = array<i32>} : memref<10x36x128xf32, #tpu.memory_space<vmem>>, vector<1x4x128xf32>,
    %c0_289 = arith.constant 0 : index
    %c0_290 = arith.constant 0 : index
    %c0_291 = arith.constant 0 : index
    %479 = vector.load %arg3[%c0_289, %c0_290, %c0_291] : memref<3x8x36xbf16, #tpu.memory_space<vmem>>, vector<1x8x36xbf16>
    %480 = vector.shape_cast %479 : vector<1x8x36xbf16> to vector<8x36xbf16>
    %c1_292 = arith.constant 1 : index
    %c0_293 = arith.constant 0 : index
    %c0_294 = arith.constant 0 : index
    %481 = vector.load %arg3[%c1_292, %c0_293, %c0_294] : memref<3x8x36xbf16, #tpu.memory_space<vmem>>, vector<1x8x36xbf16>
    %482 = vector.shape_cast %481 : vector<1x8x36xbf16> to vector<8x36xbf16>
    %c2_295 = arith.constant 2 : index
    %c0_296 = arith.constant 0 : index
    %c0_297 = arith.constant 0 : index
    %483 = vector.load %arg3[%c2_295, %c0_296, %c0_297] : memref<3x8x36xbf16, #tpu.memory_space<vmem>>, vector<1x8x36xbf16>
    %484 = vector.shape_cast %483 : vector<1x8x36xbf16> to vector<8x36xbf16>
    %cst = arith.constant 0.000000e+00 : f32
    %485 = vector.broadcast %cst : f32 to vector<8x128xf32>
    %c0_298 = arith.constant 0 : index
    %c0_299 = arith.constant 0 : index
    %c0_300 = arith.constant 0 : index
    %486 = vector.load %arg7[%c0_298, %c0_299, %c0_300] : memref<10x36x128xf32, #tpu.memory_space<vmem>>, vector<1x36x128xf32>
    %487 = vector.shape_cast %486 : vector<1x36x128xf32> to vector<36x128xf32>
    %488 = arith.truncf %487 : vector<36x128xf32> to vector<36x128xbf16>
    %cst_301 = arith.constant dense<0.000000e+00> : vector<8x128xf32>
    %489 = tpu.matmul %480, %488, %cst_301 {dimension_numbers = #tpu.dot_dimension_numbers<[1], [0], [0], [1], [0, 0, 1, 1], [], []>} : vector<8x36xbf16>, vector<36x128xbf16>, vector<8x128xf32> -> vector<8x128xf32>
    %490 = arith.addf %485, %489 : vector<8x128xf32>
    %c1_302 = arith.constant 1 : index
    %c0_303 = arith.constant 0 : index
    %c0_304 = arith.constant 0 : index
    %491 = vector.load %arg7[%c1_302, %c0_303, %c0_304] : memref<10x36x128xf32, #tpu.memory_space<vmem>>, vector<1x36x128xf32>
    %492 = vector.shape_cast %491 : vector<1x36x128xf32> to vector<36x128xf32>
    %493 = arith.truncf %492 : vector<36x128xf32> to vector<36x128xbf16>
    %cst_305 = arith.constant dense<0.000000e+00> : vector<8x128xf32>
    %494 = tpu.matmul %482, %493, %cst_305 {dimension_numbers = #tpu.dot_dimension_numbers<[1], [0], [0], [1], [0, 0, 1, 1], [], []>} : vector<8x36xbf16>, vector<36x128xbf16>, vector<8x128xf32> -> vector<8x128xf32>
    %495 = arith.addf %490, %494 : vector<8x128xf32>
    %c2_306 = arith.constant 2 : index
    %c0_307 = arith.constant 0 : index
    %c0_308 = arith.constant 0 : index
    %496 = vector.load %arg7[%c2_306, %c0_307, %c0_308] : memref<10x36x128xf32, #tpu.memory_space<vmem>>, vector<1x36x128xf32>
    %497 = vector.shape_cast %496 : vector<1x36x128xf32> to vector<36x128xf32>
    %498 = arith.truncf %497 : vector<36x128xf32> to vector<36x128xbf16>
    %cst_309 = arith.constant dense<0.000000e+00> : vector<8x128xf32>
    %499 = tpu.matmul %484, %498, %cst_309 {dimension_numbers = #tpu.dot_dimension_numbers<[1], [0], [0], [1], [0, 0, 1, 1], [], []>} : vector<8x36xbf16>, vector<36x128xbf16>, vector<8x128xf32> -> vector<8x128xf32>
    %500 = arith.addf %495, %499 : vector<8x128xf32>
    %c0_310 = arith.constant 0 : index
    %c0_311 = arith.constant 0 : index
    %c0_312 = arith.constant 0 : index
    %c0_313 = arith.constant 0 : index
    %501 = vector.load %arg5[%c0_310, %c0_311, %c0_312, %c0_313] : memref<1x8x8x128xf32, #tpu.memory_space<vmem>>, vector<1x1x8x128xf32>
    %502 = vector.shape_cast %501 : vector<1x1x8x128xf32> to vector<8x128xf32>
    %503 = vector.shape_cast %500 : vector<8x128xf32> to vector<1x1x8x128xf32>
    tpu.vector_store %arg5[%c0_310, %c0_311, %c0_312, %c0_313], %503 {strides = array<i32>} : memref<1x8x8x128xf32, #tpu.memory_space<vmem>>, vector<1x1x8x128xf32>,
    %cst_314 = arith.constant 0.000000e+00 : f32
    %504 = vector.broadcast %cst_314 : f32 to vector<8x128xf32>
    %c1_315 = arith.constant 1 : index
    %c0_316 = arith.constant 0 : index
    %c0_317 = arith.constant 0 : index
    %505 = vector.load %arg7[%c1_315, %c0_316, %c0_317] : memref<10x36x128xf32, #tpu.memory_space<vmem>>, vector<1x36x128xf32>
    %506 = vector.shape_cast %505 : vector<1x36x128xf32> to vector<36x128xf32>
    %507 = arith.truncf %506 : vector<36x128xf32> to vector<36x128xbf16>
    %cst_318 = arith.constant dense<0.000000e+00> : vector<8x128xf32>
    %508 = tpu.matmul %480, %507, %cst_318 {dimension_numbers = #tpu.dot_dimension_numbers<[1], [0], [0], [1], [0, 0, 1, 1], [], []>} : vector<8x36xbf16>, vector<36x128xbf16>, vector<8x128xf32> -> vector<8x128xf32>
    %509 = arith.addf %504, %508 : vector<8x128xf32>
    %c2_319 = arith.constant 2 : index
    %c0_320 = arith.constant 0 : index
    %c0_321 = arith.constant 0 : index
    %510 = vector.load %arg7[%c2_319, %c0_320, %c0_321] : memref<10x36x128xf32, #tpu.memory_space<vmem>>, vector<1x36x128xf32>
    %511 = vector.shape_cast %510 : vector<1x36x128xf32> to vector<36x128xf32>
    %512 = arith.truncf %511 : vector<36x128xf32> to vector<36x128xbf16>
    %cst_322 = arith.constant dense<0.000000e+00> : vector<8x128xf32>
    %513 = tpu.matmul %482, %512, %cst_322 {dimension_numbers = #tpu.dot_dimension_numbers<[1], [0], [0], [1], [0, 0, 1, 1], [], []>} : vector<8x36xbf16>, vector<36x128xbf16>, vector<8x128xf32> -> vector<8x128xf32>
    %514 = arith.addf %509, %513 : vector<8x128xf32>
    %c3_323 = arith.constant 3 : index
    %c0_324 = arith.constant 0 : index
    %c0_325 = arith.constant 0 : index
    %515 = vector.load %arg7[%c3_323, %c0_324, %c0_325] : memref<10x36x128xf32, #tpu.memory_space<vmem>>, vector<1x36x128xf32>
    %516 = vector.shape_cast %515 : vector<1x36x128xf32> to vector<36x128xf32>
    %517 = arith.truncf %516 : vector<36x128xf32> to vector<36x128xbf16>
    %cst_326 = arith.constant dense<0.000000e+00> : vector<8x128xf32>
    %518 = tpu.matmul %484, %517, %cst_326 {dimension_numbers = #tpu.dot_dimension_numbers<[1], [0], [0], [1], [0, 0, 1, 1], [], []>} : vector<8x36xbf16>, vector<36x128xbf16>, vector<8x128xf32> -> vector<8x128xf32>
    %519 = arith.addf %514, %518 : vector<8x128xf32>
    %c0_327 = arith.constant 0 : index
    %c1_328 = arith.constant 1 : index
    %c0_329 = arith.constant 0 : index
    %c0_330 = arith.constant 0 : index
    %520 = vector.load %arg5[%c0_327, %c1_328, %c0_329, %c0_330] : memref<1x8x8x128xf32, #tpu.memory_space<vmem>>, vector<1x1x8x128xf32>
    %521 = vector.shape_cast %520 : vector<1x1x8x128xf32> to vector<8x128xf32>
    %522 = vector.shape_cast %519 : vector<8x128xf32> to vector<1x1x8x128xf32>
    tpu.vector_store %arg5[%c0_327, %c1_328, %c0_329, %c0_330], %522 {strides = array<i32>} : memref<1x8x8x128xf32, #tpu.memory_space<vmem>>, vector<1x1x8x128xf32>,
    %cst_331 = arith.constant 0.000000e+00 : f32
    %523 = vector.broadcast %cst_331 : f32 to vector<8x128xf32>
    %c2_332 = arith.constant 2 : index
    %c0_333 = arith.constant 0 : index
    %c0_334 = arith.constant 0 : index
    %524 = vector.load %arg7[%c2_332, %c0_333, %c0_334] : memref<10x36x128xf32, #tpu.memory_space<vmem>>, vector<1x36x128xf32>
    %525 = vector.shape_cast %524 : vector<1x36x128xf32> to vector<36x128xf32>
    %526 = arith.truncf %525 : vector<36x128xf32> to vector<36x128xbf16>
    %cst_335 = arith.constant dense<0.000000e+00> : vector<8x128xf32>
    %527 = tpu.matmul %480, %526, %cst_335 {dimension_numbers = #tpu.dot_dimension_numbers<[1], [0], [0], [1], [0, 0, 1, 1], [], []>} : vector<8x36xbf16>, vector<36x128xbf16>, vector<8x128xf32> -> vector<8x128xf32>
    %528 = arith.addf %523, %527 : vector<8x128xf32>
    %c3_336 = arith.constant 3 : index
    %c0_337 = arith.constant 0 : index
    %c0_338 = arith.constant 0 : index
    %529 = vector.load %arg7[%c3_336, %c0_337, %c0_338] : memref<10x36x128xf32, #tpu.memory_space<vmem>>, vector<1x36x128xf32>
    %530 = vector.shape_cast %529 : vector<1x36x128xf32> to vector<36x128xf32>
    %531 = arith.truncf %530 : vector<36x128xf32> to vector<36x128xbf16>
    %cst_339 = arith.constant dense<0.000000e+00> : vector<8x128xf32>
    %532 = tpu.matmul %482, %531, %cst_339 {dimension_numbers = #tpu.dot_dimension_numbers<[1], [0], [0], [1], [0, 0, 1, 1], [], []>} : vector<8x36xbf16>, vector<36x128xbf16>, vector<8x128xf32> -> vector<8x128xf32>
    %533 = arith.addf %528, %532 : vector<8x128xf32>
    %c4_340 = arith.constant 4 : index
    %c0_341 = arith.constant 0 : index
    %c0_342 = arith.constant 0 : index
    %534 = vector.load %arg7[%c4_340, %c0_341, %c0_342] : memref<10x36x128xf32, #tpu.memory_space<vmem>>, vector<1x36x128xf32>
    %535 = vector.shape_cast %534 : vector<1x36x128xf32> to vector<36x128xf32>
    %536 = arith.truncf %535 : vector<36x128xf32> to vector<36x128xbf16>
    %cst_343 = arith.constant dense<0.000000e+00> : vector<8x128xf32>
    %537 = tpu.matmul %484, %536, %cst_343 {dimension_numbers = #tpu.dot_dimension_numbers<[1], [0], [0], [1], [0, 0, 1, 1], [], []>} : vector<8x36xbf16>, vector<36x128xbf16>, vector<8x128xf32> -> vector<8x128xf32>
    %538 = arith.addf %533, %537 : vector<8x128xf32>
    %c0_344 = arith.constant 0 : index
    %c2_345 = arith.constant 2 : index
    %c0_346 = arith.constant 0 : index
    %c0_347 = arith.constant 0 : index
    %539 = vector.load %arg5[%c0_344, %c2_345, %c0_346, %c0_347] : memref<1x8x8x128xf32, #tpu.memory_space<vmem>>, vector<1x1x8x128xf32>
    %540 = vector.shape_cast %539 : vector<1x1x8x128xf32> to vector<8x128xf32>
    %541 = vector.shape_cast %538 : vector<8x128xf32> to vector<1x1x8x128xf32>
    tpu.vector_store %arg5[%c0_344, %c2_345, %c0_346, %c0_347], %541 {strides = array<i32>} : memref<1x8x8x128xf32, #tpu.memory_space<vmem>>, vector<1x1x8x128xf32>,
    %cst_348 = arith.constant 0.000000e+00 : f32
    %542 = vector.broadcast %cst_348 : f32 to vector<8x128xf32>
    %c3_349 = arith.constant 3 : index
    %c0_350 = arith.constant 0 : index
    %c0_351 = arith.constant 0 : index
    %543 = vector.load %arg7[%c3_349, %c0_350, %c0_351] : memref<10x36x128xf32, #tpu.memory_space<vmem>>, vector<1x36x128xf32>
    %544 = vector.shape_cast %543 : vector<1x36x128xf32> to vector<36x128xf32>
    %545 = arith.truncf %544 : vector<36x128xf32> to vector<36x128xbf16>
    %cst_352 = arith.constant dense<0.000000e+00> : vector<8x128xf32>
    %546 = tpu.matmul %480, %545, %cst_352 {dimension_numbers = #tpu.dot_dimension_numbers<[1], [0], [0], [1], [0, 0, 1, 1], [], []>} : vector<8x36xbf16>, vector<36x128xbf16>, vector<8x128xf32> -> vector<8x128xf32>
    %547 = arith.addf %542, %546 : vector<8x128xf32>
    %c4_353 = arith.constant 4 : index
    %c0_354 = arith.constant 0 : index
    %c0_355 = arith.constant 0 : index
    %548 = vector.load %arg7[%c4_353, %c0_354, %c0_355] : memref<10x36x128xf32, #tpu.memory_space<vmem>>, vector<1x36x128xf32>
    %549 = vector.shape_cast %548 : vector<1x36x128xf32> to vector<36x128xf32>
    %550 = arith.truncf %549 : vector<36x128xf32> to vector<36x128xbf16>
    %cst_356 = arith.constant dense<0.000000e+00> : vector<8x128xf32>
    %551 = tpu.matmul %482, %550, %cst_356 {dimension_numbers = #tpu.dot_dimension_numbers<[1], [0], [0], [1], [0, 0, 1, 1], [], []>} : vector<8x36xbf16>, vector<36x128xbf16>, vector<8x128xf32> -> vector<8x128xf32>
    %552 = arith.addf %547, %551 : vector<8x128xf32>
    %c5_357 = arith.constant 5 : index
    %c0_358 = arith.constant 0 : index
    %c0_359 = arith.constant 0 : index
    %553 = vector.load %arg7[%c5_357, %c0_358, %c0_359] : memref<10x36x128xf32, #tpu.memory_space<vmem>>, vector<1x36x128xf32>
    %554 = vector.shape_cast %553 : vector<1x36x128xf32> to vector<36x128xf32>
    %555 = arith.truncf %554 : vector<36x128xf32> to vector<36x128xbf16>
    %cst_360 = arith.constant dense<0.000000e+00> : vector<8x128xf32>
    %556 = tpu.matmul %484, %555, %cst_360 {dimension_numbers = #tpu.dot_dimension_numbers<[1], [0], [0], [1], [0, 0, 1, 1], [], []>} : vector<8x36xbf16>, vector<36x128xbf16>, vector<8x128xf32> -> vector<8x128xf32>
    %557 = arith.addf %552, %556 : vector<8x128xf32>
    %c0_361 = arith.constant 0 : index
    %c3_362 = arith.constant 3 : index
    %c0_363 = arith.constant 0 : index
    %c0_364 = arith.constant 0 : index
    %558 = vector.load %arg5[%c0_361, %c3_362, %c0_363, %c0_364] : memref<1x8x8x128xf32, #tpu.memory_space<vmem>>, vector<1x1x8x128xf32>
    %559 = vector.shape_cast %558 : vector<1x1x8x128xf32> to vector<8x128xf32>
    %560 = vector.shape_cast %557 : vector<8x128xf32> to vector<1x1x8x128xf32>
    tpu.vector_store %arg5[%c0_361, %c3_362, %c0_363, %c0_364], %560 {strides = array<i32>} : memref<1x8x8x128xf32, #tpu.memory_space<vmem>>, vector<1x1x8x128xf32>,
    %cst_365 = arith.constant 0.000000e+00 : f32
    %561 = vector.broadcast %cst_365 : f32 to vector<8x128xf32>
    %c4_366 = arith.constant 4 : index
    %c0_367 = arith.constant 0 : index
    %c0_368 = arith.constant 0 : index
    %562 = vector.load %arg7[%c4_366, %c0_367, %c0_368] : memref<10x36x128xf32, #tpu.memory_space<vmem>>, vector<1x36x128xf32>
    %563 = vector.shape_cast %562 : vector<1x36x128xf32> to vector<36x128xf32>
    %564 = arith.truncf %563 : vector<36x128xf32> to vector<36x128xbf16>
    %cst_369 = arith.constant dense<0.000000e+00> : vector<8x128xf32>
    %565 = tpu.matmul %480, %564, %cst_369 {dimension_numbers = #tpu.dot_dimension_numbers<[1], [0], [0], [1], [0, 0, 1, 1], [], []>} : vector<8x36xbf16>, vector<36x128xbf16>, vector<8x128xf32> -> vector<8x128xf32>
    %566 = arith.addf %561, %565 : vector<8x128xf32>
    %c5_370 = arith.constant 5 : index
    %c0_371 = arith.constant 0 : index
    %c0_372 = arith.constant 0 : index
    %567 = vector.load %arg7[%c5_370, %c0_371, %c0_372] : memref<10x36x128xf32, #tpu.memory_space<vmem>>, vector<1x36x128xf32>
    %568 = vector.shape_cast %567 : vector<1x36x128xf32> to vector<36x128xf32>
    %569 = arith.truncf %568 : vector<36x128xf32> to vector<36x128xbf16>
    %cst_373 = arith.constant dense<0.000000e+00> : vector<8x128xf32>
    %570 = tpu.matmul %482, %569, %cst_373 {dimension_numbers = #tpu.dot_dimension_numbers<[1], [0], [0], [1], [0, 0, 1, 1], [], []>} : vector<8x36xbf16>, vector<36x128xbf16>, vector<8x128xf32> -> vector<8x128xf32>
    %571 = arith.addf %566, %570 : vector<8x128xf32>
    %c6_374 = arith.constant 6 : index
    %c0_375 = arith.constant 0 : index
    %c0_376 = arith.constant 0 : index
    %572 = vector.load %arg7[%c6_374, %c0_375, %c0_376] : memref<10x36x128xf32, #tpu.memory_space<vmem>>, vector<1x36x128xf32>
    %573 = vector.shape_cast %572 : vector<1x36x128xf32> to vector<36x128xf32>
    %574 = arith.truncf %573 : vector<36x128xf32> to vector<36x128xbf16>
    %cst_377 = arith.constant dense<0.000000e+00> : vector<8x128xf32>
    %575 = tpu.matmul %484, %574, %cst_377 {dimension_numbers = #tpu.dot_dimension_numbers<[1], [0], [0], [1], [0, 0, 1, 1], [], []>} : vector<8x36xbf16>, vector<36x128xbf16>, vector<8x128xf32> -> vector<8x128xf32>
    %576 = arith.addf %571, %575 : vector<8x128xf32>
    %c0_378 = arith.constant 0 : index
    %c4_379 = arith.constant 4 : index
    %c0_380 = arith.constant 0 : index
    %c0_381 = arith.constant 0 : index
    %577 = vector.load %arg5[%c0_378, %c4_379, %c0_380, %c0_381] : memref<1x8x8x128xf32, #tpu.memory_space<vmem>>, vector<1x1x8x128xf32>
    %578 = vector.shape_cast %577 : vector<1x1x8x128xf32> to vector<8x128xf32>
    %579 = vector.shape_cast %576 : vector<8x128xf32> to vector<1x1x8x128xf32>
    tpu.vector_store %arg5[%c0_378, %c4_379, %c0_380, %c0_381], %579 {strides = array<i32>} : memref<1x8x8x128xf32, #tpu.memory_space<vmem>>, vector<1x1x8x128xf32>,
    %cst_382 = arith.constant 0.000000e+00 : f32
    %580 = vector.broadcast %cst_382 : f32 to vector<8x128xf32>
    %c5_383 = arith.constant 5 : index
    %c0_384 = arith.constant 0 : index
    %c0_385 = arith.constant 0 : index
    %581 = vector.load %arg7[%c5_383, %c0_384, %c0_385] : memref<10x36x128xf32, #tpu.memory_space<vmem>>, vector<1x36x128xf32>
    %582 = vector.shape_cast %581 : vector<1x36x128xf32> to vector<36x128xf32>
    %583 = arith.truncf %582 : vector<36x128xf32> to vector<36x128xbf16>
    %cst_386 = arith.constant dense<0.000000e+00> : vector<8x128xf32>
    %584 = tpu.matmul %480, %583, %cst_386 {dimension_numbers = #tpu.dot_dimension_numbers<[1], [0], [0], [1], [0, 0, 1, 1], [], []>} : vector<8x36xbf16>, vector<36x128xbf16>, vector<8x128xf32> -> vector<8x128xf32>
    %585 = arith.addf %580, %584 : vector<8x128xf32>
    %c6_387 = arith.constant 6 : index
    %c0_388 = arith.constant 0 : index
    %c0_389 = arith.constant 0 : index
    %586 = vector.load %arg7[%c6_387, %c0_388, %c0_389] : memref<10x36x128xf32, #tpu.memory_space<vmem>>, vector<1x36x128xf32>
    %587 = vector.shape_cast %586 : vector<1x36x128xf32> to vector<36x128xf32>
    %588 = arith.truncf %587 : vector<36x128xf32> to vector<36x128xbf16>
    %cst_390 = arith.constant dense<0.000000e+00> : vector<8x128xf32>
    %589 = tpu.matmul %482, %588, %cst_390 {dimension_numbers = #tpu.dot_dimension_numbers<[1], [0], [0], [1], [0, 0, 1, 1], [], []>} : vector<8x36xbf16>, vector<36x128xbf16>, vector<8x128xf32> -> vector<8x128xf32>
    %590 = arith.addf %585, %589 : vector<8x128xf32>
    %c7_391 = arith.constant 7 : index
    %c0_392 = arith.constant 0 : index
    %c0_393 = arith.constant 0 : index
    %591 = vector.load %arg7[%c7_391, %c0_392, %c0_393] : memref<10x36x128xf32, #tpu.memory_space<vmem>>, vector<1x36x128xf32>
    %592 = vector.shape_cast %591 : vector<1x36x128xf32> to vector<36x128xf32>
    %593 = arith.truncf %592 : vector<36x128xf32> to vector<36x128xbf16>
    %cst_394 = arith.constant dense<0.000000e+00> : vector<8x128xf32>
    %594 = tpu.matmul %484, %593, %cst_394 {dimension_numbers = #tpu.dot_dimension_numbers<[1], [0], [0], [1], [0, 0, 1, 1], [], []>} : vector<8x36xbf16>, vector<36x128xbf16>, vector<8x128xf32> -> vector<8x128xf32>
    %595 = arith.addf %590, %594 : vector<8x128xf32>
    %c0_395 = arith.constant 0 : index
    %c5_396 = arith.constant 5 : index
    %c0_397 = arith.constant 0 : index
    %c0_398 = arith.constant 0 : index
    %596 = vector.load %arg5[%c0_395, %c5_396, %c0_397, %c0_398] : memref<1x8x8x128xf32, #tpu.memory_space<vmem>>, vector<1x1x8x128xf32>
    %597 = vector.shape_cast %596 : vector<1x1x8x128xf32> to vector<8x128xf32>
    %598 = vector.shape_cast %595 : vector<8x128xf32> to vector<1x1x8x128xf32>
    tpu.vector_store %arg5[%c0_395, %c5_396, %c0_397, %c0_398], %598 {strides = array<i32>} : memref<1x8x8x128xf32, #tpu.memory_space<vmem>>, vector<1x1x8x128xf32>,
    %cst_399 = arith.constant 0.000000e+00 : f32
    %599 = vector.broadcast %cst_399 : f32 to vector<8x128xf32>
    %c6_400 = arith.constant 6 : index
    %c0_401 = arith.constant 0 : index
    %c0_402 = arith.constant 0 : index
    %600 = vector.load %arg7[%c6_400, %c0_401, %c0_402] : memref<10x36x128xf32, #tpu.memory_space<vmem>>, vector<1x36x128xf32>
    %601 = vector.shape_cast %600 : vector<1x36x128xf32> to vector<36x128xf32>
    %602 = arith.truncf %601 : vector<36x128xf32> to vector<36x128xbf16>
    %cst_403 = arith.constant dense<0.000000e+00> : vector<8x128xf32>
    %603 = tpu.matmul %480, %602, %cst_403 {dimension_numbers = #tpu.dot_dimension_numbers<[1], [0], [0], [1], [0, 0, 1, 1], [], []>} : vector<8x36xbf16>, vector<36x128xbf16>, vector<8x128xf32> -> vector<8x128xf32>
    %604 = arith.addf %599, %603 : vector<8x128xf32>
    %c7_404 = arith.constant 7 : index
    %c0_405 = arith.constant 0 : index
    %c0_406 = arith.constant 0 : index
    %605 = vector.load %arg7[%c7_404, %c0_405, %c0_406] : memref<10x36x128xf32, #tpu.memory_space<vmem>>, vector<1x36x128xf32>
    %606 = vector.shape_cast %605 : vector<1x36x128xf32> to vector<36x128xf32>
    %607 = arith.truncf %606 : vector<36x128xf32> to vector<36x128xbf16>
    %cst_407 = arith.constant dense<0.000000e+00> : vector<8x128xf32>
    %608 = tpu.matmul %482, %607, %cst_407 {dimension_numbers = #tpu.dot_dimension_numbers<[1], [0], [0], [1], [0, 0, 1, 1], [], []>} : vector<8x36xbf16>, vector<36x128xbf16>, vector<8x128xf32> -> vector<8x128xf32>
    %609 = arith.addf %604, %608 : vector<8x128xf32>
    %c8_408 = arith.constant 8 : index
    %c0_409 = arith.constant 0 : index
    %c0_410 = arith.constant 0 : index
    %610 = vector.load %arg7[%c8_408, %c0_409, %c0_410] : memref<10x36x128xf32, #tpu.memory_space<vmem>>, vector<1x36x128xf32>
    %611 = vector.shape_cast %610 : vector<1x36x128xf32> to vector<36x128xf32>
    %612 = arith.truncf %611 : vector<36x128xf32> to vector<36x128xbf16>
    %cst_411 = arith.constant dense<0.000000e+00> : vector<8x128xf32>
    %613 = tpu.matmul %484, %612, %cst_411 {dimension_numbers = #tpu.dot_dimension_numbers<[1], [0], [0], [1], [0, 0, 1, 1], [], []>} : vector<8x36xbf16>, vector<36x128xbf16>, vector<8x128xf32> -> vector<8x128xf32>
    %614 = arith.addf %609, %613 : vector<8x128xf32>
    %c0_412 = arith.constant 0 : index
    %c6_413 = arith.constant 6 : index
    %c0_414 = arith.constant 0 : index
    %c0_415 = arith.constant 0 : index
    %615 = vector.load %arg5[%c0_412, %c6_413, %c0_414, %c0_415] : memref<1x8x8x128xf32, #tpu.memory_space<vmem>>, vector<1x1x8x128xf32>
    %616 = vector.shape_cast %615 : vector<1x1x8x128xf32> to vector<8x128xf32>
    %617 = vector.shape_cast %614 : vector<8x128xf32> to vector<1x1x8x128xf32>
    tpu.vector_store %arg5[%c0_412, %c6_413, %c0_414, %c0_415], %617 {strides = array<i32>} : memref<1x8x8x128xf32, #tpu.memory_space<vmem>>, vector<1x1x8x128xf32>,
    %cst_416 = arith.constant 0.000000e+00 : f32
    %618 = vector.broadcast %cst_416 : f32 to vector<8x128xf32>
    %c7_417 = arith.constant 7 : index
    %c0_418 = arith.constant 0 : index
    %c0_419 = arith.constant 0 : index
    %619 = vector.load %arg7[%c7_417, %c0_418, %c0_419] : memref<10x36x128xf32, #tpu.memory_space<vmem>>, vector<1x36x128xf32>
    %620 = vector.shape_cast %619 : vector<1x36x128xf32> to vector<36x128xf32>
    %621 = arith.truncf %620 : vector<36x128xf32> to vector<36x128xbf16>
    %cst_420 = arith.constant dense<0.000000e+00> : vector<8x128xf32>
    %622 = tpu.matmul %480, %621, %cst_420 {dimension_numbers = #tpu.dot_dimension_numbers<[1], [0], [0], [1], [0, 0, 1, 1], [], []>} : vector<8x36xbf16>, vector<36x128xbf16>, vector<8x128xf32> -> vector<8x128xf32>
    %623 = arith.addf %618, %622 : vector<8x128xf32>
    %c8_421 = arith.constant 8 : index
    %c0_422 = arith.constant 0 : index
    %c0_423 = arith.constant 0 : index
    %624 = vector.load %arg7[%c8_421, %c0_422, %c0_423] : memref<10x36x128xf32, #tpu.memory_space<vmem>>, vector<1x36x128xf32>
    %625 = vector.shape_cast %624 : vector<1x36x128xf32> to vector<36x128xf32>
    %626 = arith.truncf %625 : vector<36x128xf32> to vector<36x128xbf16>
    %cst_424 = arith.constant dense<0.000000e+00> : vector<8x128xf32>
    %627 = tpu.matmul %482, %626, %cst_424 {dimension_numbers = #tpu.dot_dimension_numbers<[1], [0], [0], [1], [0, 0, 1, 1], [], []>} : vector<8x36xbf16>, vector<36x128xbf16>, vector<8x128xf32> -> vector<8x128xf32>
    %628 = arith.addf %623, %627 : vector<8x128xf32>
    %c9_425 = arith.constant 9 : index
    %c0_426 = arith.constant 0 : index
    %c0_427 = arith.constant 0 : index
    %629 = vector.load %arg7[%c9_425, %c0_426, %c0_427] : memref<10x36x128xf32, #tpu.memory_space<vmem>>, vector<1x36x128xf32>
    %630 = vector.shape_cast %629 : vector<1x36x128xf32> to vector<36x128xf32>
    %631 = arith.truncf %630 : vector<36x128xf32> to vector<36x128xbf16>
    %cst_428 = arith.constant dense<0.000000e+00> : vector<8x128xf32>
    %632 = tpu.matmul %484, %631, %cst_428 {dimension_numbers = #tpu.dot_dimension_numbers<[1], [0], [0], [1], [0, 0, 1, 1], [], []>} : vector<8x36xbf16>, vector<36x128xbf16>, vector<8x128xf32> -> vector<8x128xf32>
    %633 = arith.addf %628, %632 : vector<8x128xf32>
    %c0_429 = arith.constant 0 : index
    %c7_430 = arith.constant 7 : index
    %c0_431 = arith.constant 0 : index
    %c0_432 = arith.constant 0 : index
    %634 = vector.load %arg5[%c0_429, %c7_430, %c0_431, %c0_432] : memref<1x8x8x128xf32, #tpu.memory_space<vmem>>, vector<1x1x8x128xf32>
    %635 = vector.shape_cast %634 : vector<1x1x8x128xf32> to vector<8x128xf32>
    %636 = vector.shape_cast %633 : vector<8x128xf32> to vector<1x1x8x128xf32>
    tpu.vector_store %arg5[%c0_429, %c7_430, %c0_431, %c0_432], %636 {strides = array<i32>} : memref<1x8x8x128xf32, #tpu.memory_space<vmem>>, vector<1x1x8x128xf32>,
    %c0_433 = arith.constant 0 : index
    %c0_434 = arith.constant 0 : index
    %c0_435 = arith.constant 0 : index
    %c0_436 = arith.constant 0 : index
    %637 = vector.load %arg5[%c0_433, %c0_434, %c0_435, %c0_436] : memref<1x8x8x128xf32, #tpu.memory_space<vmem>>, vector<1x8x8x128xf32>
    %c0_437 = arith.constant 0 : index
    %c0_438 = arith.constant 0 : index
    %638 = vector.load %arg4[%c0_437, %c0_438] : memref<8x1xf32, #tpu.memory_space<vmem>>, vector<8x1xf32>
    %639 = vector.shape_cast %638 : vector<8x1xf32> to vector<1x1x8x1xf32>
    %640 = vector.broadcast %639 : vector<1x1x8x1xf32> to vector<1x8x8x128xf32>
    %641 = arith.addf %637, %640 : vector<1x8x8x128xf32>
    %cst_439 = arith.constant 0.707106769 : f32
    %642 = vector.broadcast %cst_439 : f32 to vector<1x8x8x128xf32>
    %643 = arith.mulf %641, %642 : vector<1x8x8x128xf32>
    %cst_440 = arith.constant 0.000000e+00 : f32
    %644 = vector.broadcast %cst_440 : f32 to vector<1x8x8x128xf32>
    %645 = arith.cmpf oge, %643, %644 : vector<1x8x8x128xf32>
    %cst_441 = arith.constant 1.000000e+00 : f32
    %cst_442 = arith.constant -1.000000e+00 : f32
    %646 = vector.broadcast %cst_441 : f32 to vector<1x8x8x128xf32>
    %647 = vector.broadcast %cst_442 : f32 to vector<1x8x8x128xf32>
    %648 = arith.select %645, %646, %647 : vector<1x8x8x128xi1>, vector<1x8x8x128xf32>
    %649 = math.absf %643 : vector<1x8x8x128xf32>
    %cst_443 = arith.constant 0.327591091 : f32
    %650 = vector.broadcast %cst_443 : f32 to vector<1x8x8x128xf32>
    %651 = arith.mulf %650, %649 : vector<1x8x8x128xf32>
    %cst_444 = arith.constant 1.000000e+00 : f32
    %652 = vector.broadcast %cst_444 : f32 to vector<1x8x8x128xf32>
    %653 = arith.addf %652, %651 : vector<1x8x8x128xf32>
    %654 = tpu.reciprocal %653 {approx = true} : vector<1x8x8x128xf32> -> vector<1x8x8x128xf32>
    %655 = arith.mulf %653, %654 : vector<1x8x8x128xf32>
    %cst_445 = arith.constant 2.000000e+00 : f32
    %656 = vector.broadcast %cst_445 : f32 to vector<1x8x8x128xf32>
    %657 = arith.subf %656, %655 : vector<1x8x8x128xf32>
    %658 = arith.mulf %654, %657 : vector<1x8x8x128xf32>
    %cst_446 = arith.constant 1.06140542 : f32
    %659 = vector.broadcast %cst_446 : f32 to vector<1x8x8x128xf32>
    %660 = arith.mulf %659, %658 : vector<1x8x8x128xf32>
    %cst_447 = arith.constant -1.45315206 : f32
    %661 = vector.broadcast %cst_447 : f32 to vector<1x8x8x128xf32>
    %662 = arith.addf %660, %661 : vector<1x8x8x128xf32>
    %663 = arith.mulf %662, %658 : vector<1x8x8x128xf32>
    %cst_448 = arith.constant 1.42141378 : f32
    %664 = vector.broadcast %cst_448 : f32 to vector<1x8x8x128xf32>
    %665 = arith.addf %663, %664 : vector<1x8x8x128xf32>
    %666 = arith.mulf %665, %658 : vector<1x8x8x128xf32>
    %cst_449 = arith.constant -0.284496725 : f32
    %667 = vector.broadcast %cst_449 : f32 to vector<1x8x8x128xf32>
    %668 = arith.addf %666, %667 : vector<1x8x8x128xf32>
    %669 = arith.mulf %668, %658 : vector<1x8x8x128xf32>
    %cst_450 = arith.constant 0.254829586 : f32
    %670 = vector.broadcast %cst_450 : f32 to vector<1x8x8x128xf32>
    %671 = arith.addf %669, %670 : vector<1x8x8x128xf32>
    %672 = arith.mulf %671, %658 : vector<1x8x8x128xf32>
    %cst_451 = arith.constant 0.000000e+00 : f32
    %673 = vector.broadcast %cst_451 : f32 to vector<1x8x8x128xf32>
    %674 = arith.subf %673, %649 : vector<1x8x8x128xf32>
    %675 = arith.mulf %674, %649 : vector<1x8x8x128xf32>
    %676 = math.exp %675 : vector<1x8x8x128xf32>
    %677 = arith.mulf %672, %676 : vector<1x8x8x128xf32>
    %cst_452 = arith.constant 1.000000e+00 : f32
    %678 = vector.broadcast %cst_452 : f32 to vector<1x8x8x128xf32>
    %679 = arith.subf %678, %677 : vector<1x8x8x128xf32>
    %680 = arith.mulf %648, %679 : vector<1x8x8x128xf32>
    %cst_453 = arith.constant 5.000000e-01 : f32
    %681 = vector.broadcast %cst_453 : f32 to vector<1x8x8x128xf32>
    %682 = arith.mulf %681, %641 : vector<1x8x8x128xf32>
    %cst_454 = arith.constant 1.000000e+00 : f32
    %683 = vector.broadcast %cst_454 : f32 to vector<1x8x8x128xf32>
    %684 = arith.addf %683, %680 : vector<1x8x8x128xf32>
    %685 = arith.mulf %682, %684 : vector<1x8x8x128xf32>
    %c0_455 = arith.constant 0 : index
    %c0_456 = arith.constant 0 : index
    %c0_457 = arith.constant 0 : index
    %c0_458 = arith.constant 0 : index
    %686 = vector.load %arg5[%c0_455, %c0_456, %c0_457, %c0_458] : memref<1x8x8x128xf32, #tpu.memory_space<vmem>>, vector<1x8x8x128xf32>
    tpu.vector_store %arg5[%c0_455, %c0_456, %c0_457, %c0_458], %685 {strides = array<i32>} : memref<1x8x8x128xf32, #tpu.memory_space<vmem>>, vector<1x8x8x128xf32>,
    return
  }
  func.func @transform_1(%arg0: i32, %arg1: i32) -> (i32, i32, i32) {
    %c0_i32 = arith.constant 0 : i32
    %c0_i32_0 = arith.constant 0 : i32
    %c0_i32_1 = arith.constant 0 : i32
    %c0_i32_2 = arith.constant 0 : i32
    return %c0_i32, %c0_i32_0, %c0_i32_1 : i32, i32, i32
  }
  func.func @transform_2(%arg0: i32, %arg1: i32) -> (i32, i32) {
    %c0_i32 = arith.constant 0 : i32
    %c0_i32_0 = arith.constant 0 : i32
    %c0_i32_1 = arith.constant 0 : i32
    return %c0_i32, %c0_i32_0 : i32, i32
  }
  func.func @transform_3(%arg0: i32, %arg1: i32) -> (i32, i32, i32, i32) {
    %c0_i32 = arith.constant 0 : i32
    %c0_i32_0 = arith.constant 0 : i32
    %c0_i32_1 = arith.constant 0 : i32
    return %arg0, %arg1, %c0_i32, %c0_i32_0 : i32, i32, i32, i32
  }
}

</mosaic_0001>

<llo_original>
// kernel: _lambda_.1
$region0: #{_lambda_.1}
  #allocation0 [shape = 'u32[]', space=smem, size = 0x4, offset = 0x4, fixed_abs, tag = 'smem constant byte address 0x4 - core index']
  #allocation1 [shape = 'u32[144,128]{1,0:T(1,128)}', space=vmem, size = 0x12000, scoped, tag = 'internal scratch']
  #allocation2 [shape = 'bf16[10,4,256]{2,1,0:T(4,128)(2,1)}', space=vmem, size = 0x5000, scoped, tag = 'scratch operand']
  #allocation3 [shape = 'f32[10,36,128]{2,1,0:T(8,128)}', space=vmem, size = 0x32000, scoped, tag = 'scratch operand']
  #allocation4 [shape = 's32[1]{0}', space=sflag, size = 0x4, scoped, tag = 'scratch operand']
  #allocation5 [shape = 's32[]', space=sflag, size = 0x4, offset = 0, fixed_abs, tag = 'sflag constant byte address 0x0 - dummy sync flag']
  %s0 = inlined_call_operand.vmem [shape: bf16[2,10,4,256], index: 0, kind: input, shape index: {}]
  %s1 = inlined_call_operand.vmem [shape: bf16[3,8,36], index: 1, kind: input, shape index: {}]
  %s2 = inlined_call_operand.vmem [shape: f32[8,1], index: 2, kind: input, shape index: {}]
  %s3 = inlined_call_operand.vmem [shape: f32[2,8,8,128], index: 3, kind: output, shape index: {}]
  %s4 = sld [smem:[#allocation0]]
  $region75: #{_lambda_.1} parent=0
    _
  %s6 = ssub.s32 1, %s4
  %s7 = scalar_select 0, %s6, %s4
  loop: start=0, step=1, limit=4
  $region2: #{_lambda_.1} parent=0 // loop_pre_header
    _
  $region3: #{_lambda_.1} parent=0 // loop_header
    %s9 = sphi 0, %s13
    %p10 = scmp.ge.s32.totalorder %s9, 4
    %s16 = sphi 0, %s28
    %s17 = sphi 0, %s24
    %s18 = sphi 0, %s16
    %s19 = sphi 0, %s17
    %s20 = sphi 0, %s18
    %s21 = sphi 0, %s19
    %s29 = sphi 0, %s29
    %s31 = sphi 0, %s29
    %s32 = sphi 0, %s31
    %s46 = sphi 0, %s32
    %s50 = sphi 0, %s50
    %s52 = sphi 0, %s50
    %s53 = sphi 0, %s52
    %s67 = sphi 0, %s53
    %s75 = sphi 0, %s77
    %s78 = sphi 0, %s75
    %s79 = sphi 0, %s78
    %s95 = sphi 0, %s79
  $region4: #{_lambda_.1} parent=0 // loop_header_branch
    %12 = sbr.rel (%p10) target = $region8
  $region5: #{_lambda_.1} parent=0 // loop_body
    %s14 = ssub.s32 %s9, 1
    %s15 = ssub.s32 %s9, 2
    %s22 = sadd.s32 1, %s17
    %p23 = scmp.ge.s32.totalorder %s22, 1
    %s24 = scalar_select %p23, 0, %s22
    %s25 = sadd.s32 1, %s16
    %s26 = scalar_select %p23, %s25, %s16
    %p27 = scmp.ge.s32.totalorder %s26, 2
    %s28 = scalar_select %p27, 0, %s26
    %s30 = sadd.s32 %s29, 1
    %p33 = scmp.eq.s32.totalorder %s9, 1
    %p34 = scmp.ne.s32.totalorder %s29, %s31
    %p35 = scmp.eq.s32.totalorder %s9, 0
    %p36 = por %p34, %p35
    %p37 = scmp.ne.s32.totalorder %s29, %s31
    %p38 = scmp.eq.s32.totalorder %s14, 1
    %p39 = por %p37, %p38
    %p40 = scmp.ne.s32.totalorder %s31, %s32
    %p41 = scmp.eq.s32.totalorder %s14, 0
    %p42 = por %p40, %p41
    %p43 = scmp.ne.s32.totalorder %s31, %s32
    %p44 = scmp.eq.s32.totalorder %s15, 1
    %p45 = por %p43, %p44
    %p47 = scmp.ne.s32.totalorder %s32, %s46
    %p48 = scmp.eq.s32.totalorder %s15, 0
    %p49 = por %p47, %p48
    %s51 = sadd.s32 %s50, 1
    %p54 = scmp.eq.s32.totalorder %s9, 1
    %p55 = scmp.ne.s32.totalorder %s50, %s52
    %p56 = scmp.eq.s32.totalorder %s9, 0
    %p57 = por %p55, %p56
    %p58 = scmp.ne.s32.totalorder %s50, %s52
    %p59 = scmp.eq.s32.totalorder %s14, 1
    %p60 = por %p58, %p59
    %p61 = scmp.ne.s32.totalorder %s52, %s53
    %p62 = scmp.eq.s32.totalorder %s14, 0
    %p63 = por %p61, %p62
    %p64 = scmp.ne.s32.totalorder %s52, %s53
    %p65 = scmp.eq.s32.totalorder %s15, 1
    %p66 = por %p64, %p65
    %p68 = scmp.ne.s32.totalorder %s53, %s67
    %p69 = scmp.eq.s32.totalorder %s15, 0
    %p70 = por %p68, %p69
    %s71 = ssub.s32 %s16, %s28
    %s72 = ssub.s32 %s17, %s24
    %s73 = sor.u32 %s71, %s72
    %p74 = scmp.eq.s32.totalorder %s73, 0
    %s76 = sadd.s32 %s75, 1
    %s77 = scalar_select %p74, %s75, %s76
    %p80 = pneg %p74
    %p81 = scmp.eq.s32.totalorder %s9, 1
    %p82 = por %p80, %p81
    %p83 = scmp.ne.s32.totalorder %s75, %s78
    %p84 = scmp.eq.s32.totalorder %s9, 0
    %p85 = por %p83, %p84
    %p86 = scmp.ne.s32.totalorder %s75, %s78
    %p87 = scmp.eq.s32.totalorder %s14, 1
    %p88 = por %p86, %p87
    %p89 = scmp.ne.s32.totalorder %s78, %s79
    %p90 = scmp.eq.s32.totalorder %s14, 0
    %p91 = por %p89, %p90
    %p92 = scmp.ne.s32.totalorder %s78, %s79
    %p93 = scmp.eq.s32.totalorder %s15, 1
    %p94 = por %p92, %p93
    %p96 = scmp.ne.s32.totalorder %s79, %s95
    %p97 = scmp.eq.s32.totalorder %s15, 0
    %p98 = por %p96, %p97
    %p99 = scmp.le.s32.totalorder 1, %s9
    %p100 = scmp.lt.s32.totalorder %s9, 3
    %p101 = pnand %p99, %p100
    %p102 = pneg %p101
    // Predicated region
    $region9: #{_lambda_.1} parent=5 // pred_check
      _
    $region10: #{_lambda_.1} parent=5 // pred_check_branch
      %104 = sbr.rel (%p101) target = $region12
    $region11: #{_lambda_.1} parent=5 // pred_region
      %s105 = ssub.s32 %s9, 1
      // Predicated region
      $region13: #{_lambda_.1} parent=11 // pred_check
        %p106 = pneg %p42
      $region14: #{_lambda_.1} parent=11 // pred_check_branch
        %108 = sbr.rel (%p106) target = $region16
      $region15: #{_lambda_.1} parent=11 // pred_region
        _
      $region16: #{_lambda_.1} parent=11 // pred_fallthru
        _
      // Predicated region
      $region17: #{_lambda_.1} parent=11 // pred_check
        %p109 = pneg %p63
      $region18: #{_lambda_.1} parent=11 // pred_check_branch
        %111 = sbr.rel (%p109) target = $region20
      $region19: #{_lambda_.1} parent=11 // pred_region
        _
      $region20: #{_lambda_.1} parent=11 // pred_fallthru
        _
    $region12: #{_lambda_.1} parent=5 // pred_fallthru
      _
    %p112 = scmp.lt.s32.totalorder %s9, 2
    // Predicated region
    $region21: #{_lambda_.1} parent=5 // pred_check
      %p113 = pneg %p112
    $region22: #{_lambda_.1} parent=5 // pred_check_branch
      %115 = sbr.rel (%p113) target = $region24
    $region23: #{_lambda_.1} parent=5 // pred_region
      _
    $region24: #{_lambda_.1} parent=5 // pred_fallthru
      _
    %p116 = scmp.le.s32.totalorder 1, %s9
    %p117 = scmp.lt.s32.totalorder %s9, 3
    %p118 = pnand %p116, %p117
    %p119 = pneg %p118
    // Predicated region
    $region25: #{_lambda_.1} parent=5 // pred_check
      _
    $region26: #{_lambda_.1} parent=5 // pred_check_branch
      %121 = sbr.rel (%p118) target = $region28
    $region27: #{_lambda_.1} parent=5 // pred_region
      %s122 = ssub.s32 %s9, 1
      %p123 = pneg %p42
      %p124 = pneg %p39
      %p125 = pneg %p63
      %p126 = pneg %p60
      %p127 = pneg %p91
      %p128 = pneg %p88
      %s129 = smul.u32 8, %s19
      %p130 = scmp.lt.s32.totalorder %s18, 1
      %s131 = scalar_select %p130, %s18, 1
      %p132 = scmp.lt.s32.totalorder %s129, 7
      %s133 = scalar_select %p132, %s129, 7
      %s134 = smul.addr %s131, 8
      %s135 = sadd.s32 %s133, %s134
      %s136 = smul.addr %s135, 8
      %s137 = scalar_lea.vmem %s3, %s136
      %s138 = smul.u32 8, %s19
      %p139 = scmp.lt.s32.totalorder %s18, 1
      %s140 = scalar_select %p139, %s18, 1
      %p141 = scmp.lt.s32.totalorder %s138, 7
      %s142 = scalar_select %p141, %s138, 7
      %s143 = smul.addr %s140, 8
      %s144 = sadd.s32 %s142, %s143
      %s145 = smul.addr %s144, 8
      %s146 = scalar_lea.vmem %s3, %s145
      %s147 = smul.u32 8, %s19
      %s149 = smul.u32 %s19, 8
      %s150 = smul.u32 %s149, 2
      %s151 = smul.u32 %s18, 20
      %s152 = sadd.s32 %s150, %s151
      %s153 = smul.addr %s152, 2
      %s154 = scalar_lea.vmem %s0, %s153
      %p156 = scmp.lt.u32.totalorder 40, 8
      %p157 = pneg %p156
      // Predicated region
      $region29: #{_lambda_.1} parent=27 // pred_check
        _
      $region30: #{_lambda_.1} parent=27 // pred_check_branch
        %159 = sbr.rel (%p156) target = $region32
      $region31: #{_lambda_.1} parent=27 // pred_region
        %s175 = sand.u32 40, 7
        %p176 = scmp.eq.s32.totalorder %s175, 0
        // Predicated region
        $region44: #{_lambda_.1} parent=31 // pred_check
          %p177 = pneg %p176
        $region45: #{_lambda_.1} parent=31 // pred_check_branch
          %179 = sbr.rel (%p177) target = $region47
        $region46: #{_lambda_.1} parent=31 // pred_region
          loop: start=0, step=1, limit=1
          $region48: #{_lambda_.1} parent=46 // loop_pre_header
            _
          $region49: #{_lambda_.1} parent=46 // loop_header
            %s181 = sphi 0, %s185
            %p182 = scmp.ge.s32.totalorder %s181, 1
            %s186 = sphi %s154, %s154
            %s187 = sphi [#allocation2], [#allocation2]
          $region50: #{_lambda_.1} parent=46 // loop_header_branch
            %184 = sbr.rel (%p182) target = $region54
          $region51: #{_lambda_.1} parent=46 // loop_body
            %v188 = vld [vmem:[%s186] sm:$0xff]
            %189 = vst [vmem:[%s187] sm:$0xff] %v188
            %v190 = vld [vmem:[%s186 + $0x8] sm:$0xff]
            %191 = vst [vmem:[%s187 + $0x8] sm:$0xff] %v190
            %v192 = vld [vmem:[%s186 + $0x10] sm:$0xff]
            %193 = vst [vmem:[%s187 + $0x10] sm:$0xff] %v192
            %v194 = vld [vmem:[%s186 + $0x18] sm:$0xff]
            %195 = vst [vmem:[%s187 + $0x18] sm:$0xff] %v194
            %v196 = vld [vmem:[%s186 + $0x20] sm:$0xff]
            %197 = vst [vmem:[%s187 + $0x20] sm:$0xff] %v196
          $region52: #{_lambda_.1} parent=46 // loop_footer
            %s185 = sadd.s32 1, %s181
          $region53: #{_lambda_.1} parent=46 // loop_footer_branch
            %180 = sbr.rel target = $region49
          $region54: #{_lambda_.1} parent=46 // loop_exit
            _
        $region47: #{_lambda_.1} parent=31 // pred_fallthru
          _
        %p198 = pneg %p176
        // Predicated region
        $region55: #{_lambda_.1} parent=31 // pred_check
          _
        $region56: #{_lambda_.1} parent=31 // pred_check_branch
          %200 = sbr.rel (%p176) target = $region58
        $region57: #{_lambda_.1} parent=31 // pred_region
          %s201 = sand.u32 40, 7
        $region58: #{_lambda_.1} parent=31 // pred_fallthru
          _
      $region32: #{_lambda_.1} parent=27 // pred_fallthru
        _
      // Predicated region
      $region33: #{_lambda_.1} parent=27 // pred_check
        %p160 = pneg %p156
      $region34: #{_lambda_.1} parent=27 // pred_check_branch
        %162 = sbr.rel (%p160) target = $region36
      $region35: #{_lambda_.1} parent=27 // pred_region
        %s163 = sshll.u32 1, 40
        %s164 = ssub.s32 %s163, 1
        loop: start=0, step=1, limit=1
        $region37: #{_lambda_.1} parent=35 // loop_pre_header
          _
        $region38: #{_lambda_.1} parent=35 // loop_header
          %s166 = sphi 0, %s170
          %p167 = scmp.ge.s32.totalorder %s166, 1
          %s171 = sphi %s154, %s154
          %s172 = sphi [#allocation2], [#allocation2]
        $region39: #{_lambda_.1} parent=35 // loop_header_branch
          %169 = sbr.rel (%p167) target = $region43
        $region40: #{_lambda_.1} parent=35 // loop_body
          %v173 = vld [vmem:[%s171] sm:%s164]
          %174 = vst [vmem:[%s172] sm:%s164] %v173
        $region41: #{_lambda_.1} parent=35 // loop_footer
          %s170 = sadd.s32 1, %s166
        $region42: #{_lambda_.1} parent=35 // loop_footer_branch
          %165 = sbr.rel target = $region38
        $region43: #{_lambda_.1} parent=35 // loop_exit
          _
      $region36: #{_lambda_.1} parent=27 // pred_fallthru
        _
      // Predicated region
      $region59: #{_lambda_.1} parent=27 // pred_check
        _
      $region60: #{_lambda_.1} parent=27 // pred_check_branch
        %204 = sbr.rel (0) target = $region62
      $region61: #{_lambda_.1} parent=27 // pred_region
        %205 = vsyncadd [#allocation4], 640
      $region62: #{_lambda_.1} parent=27 // pred_fallthru
        _
      %s206 = smul.u32 2, 10
      %s207 = smul.u32 %s206, 1
      %s208 = smul.u32 %s207, 2
      %s209 = sshll.u32 %s208, 4
      %210 = dma.done [#allocation4], %s209
      %v211 = vld [vmem:[#allocation2] sm:$0xf]
      %v212 = vunpack.c.l.bf16 %v211
      %213 = vst [vmem:[#allocation3] sm:$0xf] %v212
      %v215 = vcombine.high %v212, %v212
      %216 = vrot.lane.b32.xlu0 %v212, 127
      %v217 = vpop.permute.xlu0 %216
      %218 = vrot.lane.b32.xlu0 %v215, 127
      %v219 = vpop.permute.xlu0 %218
      %vm220 = vcmask 1039360
      %v221 = vsel %vm220, %v217, %v219
      %223 = vst [vmem:[#allocation3 + $0x4] sm:$0xf] %v221
      %224 = vrot.lane.b32.xlu0 %v212, 126
      %v225 = vpop.permute.xlu0 %224
      %226 = vrot.lane.b32.xlu0 %v215, 126
      %v227 = vpop.permute.xlu0 %226
      %vm228 = vcmask 1031168
      %v229 = vsel %vm228, %v225, %v227
      %231 = vst [vmem:[#allocation3 + $0x8] sm:$0xf] %v229
      %232 = vrot.lane.b32.xlu0 %v212, 118
      %v233 = vpop.permute.xlu0 %232
      %234 = vrot.lane.b32.xlu0 %v215, 118
      %v235 = vpop.permute.xlu0 %234
      %vm236 = vcmask 965632
      %v237 = vsel %vm236, %v233, %v235
      %239 = vst [vmem:[#allocation3 + $0xc] sm:$0xf] %v237
      %240 = vrot.lane.b32.xlu0 %v212, 117
      %v241 = vpop.permute.xlu0 %240
      %242 = vrot.lane.b32.xlu0 %v215, 117
      %v243 = vpop.permute.xlu0 %242
      %vm244 = vcmask 957440
      %v245 = vsel %vm244, %v241, %v243
      %247 = vst [vmem:[#allocation3 + $0x10] sm:$0xf] %v245
      %248 = vrot.lane.b32.xlu0 %v212, 116
      %v249 = vpop.permute.xlu0 %248
      %250 = vrot.lane.b32.xlu0 %v215, 116
      %v251 = vpop.permute.xlu0 %250
      %vm252 = vcmask 949248
      %v253 = vsel %vm252, %v249, %v251
      %255 = vst [vmem:[#allocation3 + $0x14] sm:$0xf] %v253
      %256 = vrot.lane.b32.xlu0 %v212, 108
      %v257 = vpop.permute.xlu0 %256
      %258 = vrot.lane.b32.xlu0 %v215, 108
      %v259 = vpop.permute.xlu0 %258
      %vm260 = vcmask 883712
      %v261 = vsel %vm260, %v257, %v259
      %263 = vst [vmem:[#allocation3 + $0x18] sm:$0xf] %v261
      %264 = vrot.lane.b32.xlu0 %v212, 107
      %v265 = vpop.permute.xlu0 %264
      %266 = vrot.lane.b32.xlu0 %v215, 107
      %v267 = vpop.permute.xlu0 %266
      %vm268 = vcmask 875520
      %v269 = vsel %vm268, %v265, %v267
      %271 = vst [vmem:[#allocation3 + $0x1c] sm:$0xf] %v269
      %272 = vrot.lane.b32.xlu0 %v212, 106
      %v273 = vpop.permute.xlu0 %272
      %274 = vrot.lane.b32.xlu0 %v215, 106
      %v275 = vpop.permute.xlu0 %274
      %vm276 = vcmask 867328
      %v277 = vsel %vm276, %v273, %v275
      %279 = vst [vmem:[#allocation3 + $0x20] sm:$0xf] %v277
      %s280 = scalar_lea.vmem [#allocation2], 4
      %v281 = vld [vmem:[%s280] sm:$0xf]
      %v282 = vunpack.c.l.bf16 %v281
      %s283 = scalar_lea.vmem [#allocation3], 40
      %284 = vst [vmem:[%s283] sm:$0xf] %v282
      %v286 = vcombine.high %v282, %v282
      %287 = vrot.lane.b32.xlu0 %v282, 127
      %v288 = vpop.permute.xlu0 %287
      %289 = vrot.lane.b32.xlu0 %v286, 127
      %v290 = vpop.permute.xlu0 %289
      %v291 = vsel %vm220, %v288, %v290
      %293 = vst [vmem:[%s283 + $0x4] sm:$0xf] %v291
      %294 = vrot.lane.b32.xlu0 %v282, 126
      %v295 = vpop.permute.xlu0 %294
      %296 = vrot.lane.b32.xlu0 %v286, 126
      %v297 = vpop.permute.xlu0 %296
      %v298 = vsel %vm228, %v295, %v297
      %300 = vst [vmem:[%s283 + $0x8] sm:$0xf] %v298
      %301 = vrot.lane.b32.xlu0 %v282, 118
      %v302 = vpop.permute.xlu0 %301
      %303 = vrot.lane.b32.xlu0 %v286, 118
      %v304 = vpop.permute.xlu0 %303
      %v305 = vsel %vm236, %v302, %v304
      %307 = vst [vmem:[%s283 + $0xc] sm:$0xf] %v305
      %308 = vrot.lane.b32.xlu0 %v282, 117
      %v309 = vpop.permute.xlu0 %308
      %310 = vrot.lane.b32.xlu0 %v286, 117
      %v311 = vpop.permute.xlu0 %310
      %v312 = vsel %vm244, %v309, %v311
      %314 = vst [vmem:[%s283 + $0x10] sm:$0xf] %v312
      %315 = vrot.lane.b32.xlu0 %v282, 116
      %v316 = vpop.permute.xlu0 %315
      %317 = vrot.lane.b32.xlu0 %v286, 116
      %v318 = vpop.permute.xlu0 %317
      %v319 = vsel %vm252, %v316, %v318
      %321 = vst [vmem:[%s283 + $0x14] sm:$0xf] %v319
      %322 = vrot.lane.b32.xlu0 %v282, 108
      %v323 = vpop.permute.xlu0 %322
      %324 = vrot.lane.b32.xlu0 %v286, 108
      %v325 = vpop.permute.xlu0 %324
      %v326 = vsel %vm260, %v323, %v325
      %328 = vst [vmem:[%s283 + $0x18] sm:$0xf] %v326
      %329 = vrot.lane.b32.xlu0 %v282, 107
      %v330 = vpop.permute.xlu0 %329
      %331 = vrot.lane.b32.xlu0 %v286, 107
      %v332 = vpop.permute.xlu0 %331
      %v333 = vsel %vm268, %v330, %v332
      %335 = vst [vmem:[%s283 + $0x1c] sm:$0xf] %v333
      %336 = vrot.lane.b32.xlu0 %v282, 106
      %v337 = vpop.permute.xlu0 %336
      %338 = vrot.lane.b32.xlu0 %v286, 106
      %v339 = vpop.permute.xlu0 %338
      %v340 = vsel %vm276, %v337, %v339
      %342 = vst [vmem:[%s283 + $0x20] sm:$0xf] %v340
      %s343 = scalar_lea.vmem [#allocation2], 8
      %v344 = vld [vmem:[%s343] sm:$0xf]
      %v345 = vunpack.c.l.bf16 %v344
      %s346 = scalar_lea.vmem [#allocation3], 80
      %347 = vst [vmem:[%s346] sm:$0xf] %v345
      %v349 = vcombine.high %v345, %v345
      %350 = vrot.lane.b32.xlu0 %v345, 127
      %v351 = vpop.permute.xlu0 %350
      %352 = vrot.lane.b32.xlu0 %v349, 127
      %v353 = vpop.permute.xlu0 %352
      %v354 = vsel %vm220, %v351, %v353
      %356 = vst [vmem:[%s346 + $0x4] sm:$0xf] %v354
      %357 = vrot.lane.b32.xlu0 %v345, 126
      %v358 = vpop.permute.xlu0 %357
      %359 = vrot.lane.b32.xlu0 %v349, 126
      %v360 = vpop.permute.xlu0 %359
      %v361 = vsel %vm228, %v358, %v360
      %363 = vst [vmem:[%s346 + $0x8] sm:$0xf] %v361
      %364 = vrot.lane.b32.xlu0 %v345, 118
      %v365 = vpop.permute.xlu0 %364
      %366 = vrot.lane.b32.xlu0 %v349, 118
      %v367 = vpop.permute.xlu0 %366
      %v368 = vsel %vm236, %v365, %v367
      %370 = vst [vmem:[%s346 + $0xc] sm:$0xf] %v368
      %371 = vrot.lane.b32.xlu0 %v345, 117
      %v372 = vpop.permute.xlu0 %371
      %373 = vrot.lane.b32.xlu0 %v349, 117
      %v374 = vpop.permute.xlu0 %373
      %v375 = vsel %vm244, %v372, %v374
      %377 = vst [vmem:[%s346 + $0x10] sm:$0xf] %v375
      %378 = vrot.lane.b32.xlu0 %v345, 116
      %v379 = vpop.permute.xlu0 %378
      %380 = vrot.lane.b32.xlu0 %v349, 116
      %v381 = vpop.permute.xlu0 %380
      %v382 = vsel %vm252, %v379, %v381
      %384 = vst [vmem:[%s346 + $0x14] sm:$0xf] %v382
      %385 = vrot.lane.b32.xlu0 %v345, 108
      %v386 = vpop.permute.xlu0 %385
      %387 = vrot.lane.b32.xlu0 %v349, 108
      %v388 = vpop.permute.xlu0 %387
      %v389 = vsel %vm260, %v386, %v388
      %391 = vst [vmem:[%s346 + $0x18] sm:$0xf] %v389
      %392 = vrot.lane.b32.xlu0 %v345, 107
      %v393 = vpop.permute.xlu0 %392
      %394 = vrot.lane.b32.xlu0 %v349, 107
      %v395 = vpop.permute.xlu0 %394
      %v396 = vsel %vm268, %v393, %v395
      %398 = vst [vmem:[%s346 + $0x1c] sm:$0xf] %v396
      %399 = vrot.lane.b32.xlu0 %v345, 106
      %v400 = vpop.permute.xlu0 %399
      %401 = vrot.lane.b32.xlu0 %v349, 106
      %v402 = vpop.permute.xlu0 %401
      %v403 = vsel %vm276, %v400, %v402
      %405 = vst [vmem:[%s346 + $0x20] sm:$0xf] %v403
      %s406 = scalar_lea.vmem [#allocation2], 12
      %v407 = vld [vmem:[%s406] sm:$0xf]
      %v408 = vunpack.c.l.bf16 %v407
      %s409 = scalar_lea.vmem [#allocation3], 120
      %410 = vst [vmem:[%s409] sm:$0xf] %v408
      %v412 = vcombine.high %v408, %v408
      %413 = vrot.lane.b32.xlu0 %v408, 127
      %v414 = vpop.permute.xlu0 %413
      %415 = vrot.lane.b32.xlu0 %v412, 127
      %v416 = vpop.permute.xlu0 %415
      %v417 = vsel %vm220, %v414, %v416
      %419 = vst [vmem:[%s409 + $0x4] sm:$0xf] %v417
      %420 = vrot.lane.b32.xlu0 %v408, 126
      %v421 = vpop.permute.xlu0 %420
      %422 = vrot.lane.b32.xlu0 %v412, 126
      %v423 = vpop.permute.xlu0 %422
      %v424 = vsel %vm228, %v421, %v423
      %426 = vst [vmem:[%s409 + $0x8] sm:$0xf] %v424
      %427 = vrot.lane.b32.xlu0 %v408, 118
      %v428 = vpop.permute.xlu0 %427
      %429 = vrot.lane.b32.xlu0 %v412, 118
      %v430 = vpop.permute.xlu0 %429
      %v431 = vsel %vm236, %v428, %v430
      %433 = vst [vmem:[%s409 + $0xc] sm:$0xf] %v431
      %434 = vrot.lane.b32.xlu0 %v408, 117
      %v435 = vpop.permute.xlu0 %434
      %436 = vrot.lane.b32.xlu0 %v412, 117
      %v437 = vpop.permute.xlu0 %436
      %v438 = vsel %vm244, %v435, %v437
      %440 = vst [vmem:[%s409 + $0x10] sm:$0xf] %v438
      %441 = vrot.lane.b32.xlu0 %v408, 116
      %v442 = vpop.permute.xlu0 %441
      %443 = vrot.lane.b32.xlu0 %v412, 116
      %v444 = vpop.permute.xlu0 %443
      %v445 = vsel %vm252, %v442, %v444
      %447 = vst [vmem:[%s409 + $0x14] sm:$0xf] %v445
      %448 = vrot.lane.b32.xlu0 %v408, 108
      %v449 = vpop.permute.xlu0 %448
      %450 = vrot.lane.b32.xlu0 %v412, 108
      %v451 = vpop.permute.xlu0 %450
      %v452 = vsel %vm260, %v449, %v451
      %454 = vst [vmem:[%s409 + $0x18] sm:$0xf] %v452
      %455 = vrot.lane.b32.xlu0 %v408, 107
      %v456 = vpop.permute.xlu0 %455
      %457 = vrot.lane.b32.xlu0 %v412, 107
      %v458 = vpop.permute.xlu0 %457
      %v459 = vsel %vm268, %v456, %v458
      %461 = vst [vmem:[%s409 + $0x1c] sm:$0xf] %v459
      %462 = vrot.lane.b32.xlu0 %v408, 106
      %v463 = vpop.permute.xlu0 %462
      %464 = vrot.lane.b32.xlu0 %v412, 106
      %v465 = vpop.permute.xlu0 %464
      %v466 = vsel %vm276, %v463, %v465
      %468 = vst [vmem:[%s409 + $0x20] sm:$0xf] %v466
      %s469 = scalar_lea.vmem [#allocation2], 16
      %v470 = vld [vmem:[%s469] sm:$0xf]
      %v471 = vunpack.c.l.bf16 %v470
      %s472 = scalar_lea.vmem [#allocation3], 160
      %473 = vst [vmem:[%s472] sm:$0xf] %v471
      %v475 = vcombine.high %v471, %v471
      %476 = vrot.lane.b32.xlu0 %v471, 127
      %v477 = vpop.permute.xlu0 %476
      %478 = vrot.lane.b32.xlu0 %v475, 127
      %v479 = vpop.permute.xlu0 %478
      %v480 = vsel %vm220, %v477, %v479
      %482 = vst [vmem:[%s472 + $0x4] sm:$0xf] %v480
      %483 = vrot.lane.b32.xlu0 %v471, 126
      %v484 = vpop.permute.xlu0 %483
      %485 = vrot.lane.b32.xlu0 %v475, 126
      %v486 = vpop.permute.xlu0 %485
      %v487 = vsel %vm228, %v484, %v486
      %489 = vst [vmem:[%s472 + $0x8] sm:$0xf] %v487
      %490 = vrot.lane.b32.xlu0 %v471, 118
      %v491 = vpop.permute.xlu0 %490
      %492 = vrot.lane.b32.xlu0 %v475, 118
      %v493 = vpop.permute.xlu0 %492
      %v494 = vsel %vm236, %v491, %v493
      %496 = vst [vmem:[%s472 + $0xc] sm:$0xf] %v494
      %497 = vrot.lane.b32.xlu0 %v471, 117
      %v498 = vpop.permute.xlu0 %497
      %499 = vrot.lane.b32.xlu0 %v475, 117
      %v500 = vpop.permute.xlu0 %499
      %v501 = vsel %vm244, %v498, %v500
      %503 = vst [vmem:[%s472 + $0x10] sm:$0xf] %v501
      %504 = vrot.lane.b32.xlu0 %v471, 116
      %v505 = vpop.permute.xlu0 %504
      %506 = vrot.lane.b32.xlu0 %v475, 116
      %v507 = vpop.permute.xlu0 %506
      %v508 = vsel %vm252, %v505, %v507
      %510 = vst [vmem:[%s472 + $0x14] sm:$0xf] %v508
      %511 = vrot.lane.b32.xlu0 %v471, 108
      %v512 = vpop.permute.xlu0 %511
      %513 = vrot.lane.b32.xlu0 %v475, 108
      %v514 = vpop.permute.xlu0 %513
      %v515 = vsel %vm260, %v512, %v514
      %517 = vst [vmem:[%s472 + $0x18] sm:$0xf] %v515
      %518 = vrot.lane.b32.xlu0 %v471, 107
      %v519 = vpop.permute.xlu0 %518
      %520 = vrot.lane.b32.xlu0 %v475, 107
      %v521 = vpop.permute.xlu0 %520
      %v522 = vsel %vm268, %v519, %v521
      %524 = vst [vmem:[%s472 + $0x1c] sm:$0xf] %v522
      %525 = vrot.lane.b32.xlu0 %v471, 106
      %v526 = vpop.permute.xlu0 %525
      %527 = vrot.lane.b32.xlu0 %v475, 106
      %v528 = vpop.permute.xlu0 %527
      %v529 = vsel %vm276, %v526, %v528
      %531 = vst [vmem:[%s472 + $0x20] sm:$0xf] %v529
      %s532 = scalar_lea.vmem [#allocation2], 20
      %v533 = vld [vmem:[%s532] sm:$0xf]
      %v534 = vunpack.c.l.bf16 %v533
      %s535 = scalar_lea.vmem [#allocation3], 200
      %536 = vst [vmem:[%s535] sm:$0xf] %v534
      %v538 = vcombine.high %v534, %v534
      %539 = vrot.lane.b32.xlu0 %v534, 127
      %v540 = vpop.permute.xlu0 %539
      %541 = vrot.lane.b32.xlu0 %v538, 127
      %v542 = vpop.permute.xlu0 %541
      %v543 = vsel %vm220, %v540, %v542
      %545 = vst [vmem:[%s535 + $0x4] sm:$0xf] %v543
      %546 = vrot.lane.b32.xlu0 %v534, 126
      %v547 = vpop.permute.xlu0 %546
      %548 = vrot.lane.b32.xlu0 %v538, 126
      %v549 = vpop.permute.xlu0 %548
      %v550 = vsel %vm228, %v547, %v549
      %552 = vst [vmem:[%s535 + $0x8] sm:$0xf] %v550
      %553 = vrot.lane.b32.xlu0 %v534, 118
      %v554 = vpop.permute.xlu0 %553
      %555 = vrot.lane.b32.xlu0 %v538, 118
      %v556 = vpop.permute.xlu0 %555
      %v557 = vsel %vm236, %v554, %v556
      %559 = vst [vmem:[%s535 + $0xc] sm:$0xf] %v557
      %560 = vrot.lane.b32.xlu0 %v534, 117
      %v561 = vpop.permute.xlu0 %560
      %562 = vrot.lane.b32.xlu0 %v538, 117
      %v563 = vpop.permute.xlu0 %562
      %v564 = vsel %vm244, %v561, %v563
      %566 = vst [vmem:[%s535 + $0x10] sm:$0xf] %v564
      %567 = vrot.lane.b32.xlu0 %v534, 116
      %v568 = vpop.permute.xlu0 %567
      %569 = vrot.lane.b32.xlu0 %v538, 116
      %v570 = vpop.permute.xlu0 %569
      %v571 = vsel %vm252, %v568, %v570
      %573 = vst [vmem:[%s535 + $0x14] sm:$0xf] %v571
      %574 = vrot.lane.b32.xlu0 %v534, 108
      %v575 = vpop.permute.xlu0 %574
      %576 = vrot.lane.b32.xlu0 %v538, 108
      %v577 = vpop.permute.xlu0 %576
      %v578 = vsel %vm260, %v575, %v577
      %580 = vst [vmem:[%s535 + $0x18] sm:$0xf] %v578
      %581 = vrot.lane.b32.xlu0 %v534, 107
      %v582 = vpop.permute.xlu0 %581
      %583 = vrot.lane.b32.xlu0 %v538, 107
      %v584 = vpop.permute.xlu0 %583
      %v585 = vsel %vm268, %v582, %v584
      %587 = vst [vmem:[%s535 + $0x1c] sm:$0xf] %v585
      %588 = vrot.lane.b32.xlu0 %v534, 106
      %v589 = vpop.permute.xlu0 %588
      %590 = vrot.lane.b32.xlu0 %v538, 106
      %v591 = vpop.permute.xlu0 %590
      %v592 = vsel %vm276, %v589, %v591
      %594 = vst [vmem:[%s535 + $0x20] sm:$0xf] %v592
      %s595 = scalar_lea.vmem [#allocation2], 24
      %v596 = vld [vmem:[%s595] sm:$0xf]
      %v597 = vunpack.c.l.bf16 %v596
      %s598 = scalar_lea.vmem [#allocation3], 240
      %599 = vst [vmem:[%s598] sm:$0xf] %v597
      %v601 = vcombine.high %v597, %v597
      %602 = vrot.lane.b32.xlu0 %v597, 127
      %v603 = vpop.permute.xlu0 %602
      %604 = vrot.lane.b32.xlu0 %v601, 127
      %v605 = vpop.permute.xlu0 %604
      %v606 = vsel %vm220, %v603, %v605
      %608 = vst [vmem:[%s598 + $0x4] sm:$0xf] %v606
      %609 = vrot.lane.b32.xlu0 %v597, 126
      %v610 = vpop.permute.xlu0 %609
      %611 = vrot.lane.b32.xlu0 %v601, 126
      %v612 = vpop.permute.xlu0 %611
      %v613 = vsel %vm228, %v610, %v612
      %615 = vst [vmem:[%s598 + $0x8] sm:$0xf] %v613
      %616 = vrot.lane.b32.xlu0 %v597, 118
      %v617 = vpop.permute.xlu0 %616
      %618 = vrot.lane.b32.xlu0 %v601, 118
      %v619 = vpop.permute.xlu0 %618
      %v620 = vsel %vm236, %v617, %v619
      %622 = vst [vmem:[%s598 + $0xc] sm:$0xf] %v620
      %623 = vrot.lane.b32.xlu0 %v597, 117
      %v624 = vpop.permute.xlu0 %623
      %625 = vrot.lane.b32.xlu0 %v601, 117
      %v626 = vpop.permute.xlu0 %625
      %v627 = vsel %vm244, %v624, %v626
      %629 = vst [vmem:[%s598 + $0x10] sm:$0xf] %v627
      %630 = vrot.lane.b32.xlu0 %v597, 116
      %v631 = vpop.permute.xlu0 %630
      %632 = vrot.lane.b32.xlu0 %v601, 116
      %v633 = vpop.permute.xlu0 %632
      %v634 = vsel %vm252, %v631, %v633
      %636 = vst [vmem:[%s598 + $0x14] sm:$0xf] %v634
      %637 = vrot.lane.b32.xlu0 %v597, 108
      %v638 = vpop.permute.xlu0 %637
      %639 = vrot.lane.b32.xlu0 %v601, 108
      %v640 = vpop.permute.xlu0 %639
      %v641 = vsel %vm260, %v638, %v640
      %643 = vst [vmem:[%s598 + $0x18] sm:$0xf] %v641
      %644 = vrot.lane.b32.xlu0 %v597, 107
      %v645 = vpop.permute.xlu0 %644
      %646 = vrot.lane.b32.xlu0 %v601, 107
      %v647 = vpop.permute.xlu0 %646
      %v648 = vsel %vm268, %v645, %v647
      %650 = vst [vmem:[%s598 + $0x1c] sm:$0xf] %v648
      %651 = vrot.lane.b32.xlu0 %v597, 106
      %v652 = vpop.permute.xlu0 %651
      %653 = vrot.lane.b32.xlu0 %v601, 106
      %v654 = vpop.permute.xlu0 %653
      %v655 = vsel %vm276, %v652, %v654
      %657 = vst [vmem:[%s598 + $0x20] sm:$0xf] %v655
      %s658 = scalar_lea.vmem [#allocation2], 28
      %v659 = vld [vmem:[%s658] sm:$0xf]
      %v660 = vunpack.c.l.bf16 %v659
      %s661 = scalar_lea.vmem [#allocation3], 280
      %662 = vst [vmem:[%s661] sm:$0xf] %v660
      %v664 = vcombine.high %v660, %v660
      %665 = vrot.lane.b32.xlu0 %v660, 127
      %v666 = vpop.permute.xlu0 %665
      %667 = vrot.lane.b32.xlu0 %v664, 127
      %v668 = vpop.permute.xlu0 %667
      %v669 = vsel %vm220, %v666, %v668
      %671 = vst [vmem:[%s661 + $0x4] sm:$0xf] %v669
      %672 = vrot.lane.b32.xlu0 %v660, 126
      %v673 = vpop.permute.xlu0 %672
      %674 = vrot.lane.b32.xlu0 %v664, 126
      %v675 = vpop.permute.xlu0 %674
      %v676 = vsel %vm228, %v673, %v675
      %678 = vst [vmem:[%s661 + $0x8] sm:$0xf] %v676
      %679 = vrot.lane.b32.xlu0 %v660, 118
      %v680 = vpop.permute.xlu0 %679
      %681 = vrot.lane.b32.xlu0 %v664, 118
      %v682 = vpop.permute.xlu0 %681
      %v683 = vsel %vm236, %v680, %v682
      %685 = vst [vmem:[%s661 + $0xc] sm:$0xf] %v683
      %686 = vrot.lane.b32.xlu0 %v660, 117
      %v687 = vpop.permute.xlu0 %686
      %688 = vrot.lane.b32.xlu0 %v664, 117
      %v689 = vpop.permute.xlu0 %688
      %v690 = vsel %vm244, %v687, %v689
      %692 = vst [vmem:[%s661 + $0x10] sm:$0xf] %v690
      %693 = vrot.lane.b32.xlu0 %v660, 116
      %v694 = vpop.permute.xlu0 %693
      %695 = vrot.lane.b32.xlu0 %v664, 116
      %v696 = vpop.permute.xlu0 %695
      %v697 = vsel %vm252, %v694, %v696
      %699 = vst [vmem:[%s661 + $0x14] sm:$0xf] %v697
      %700 = vrot.lane.b32.xlu0 %v660, 108
      %v701 = vpop.permute.xlu0 %700
      %702 = vrot.lane.b32.xlu0 %v664, 108
      %v703 = vpop.permute.xlu0 %702
      %v704 = vsel %vm260, %v701, %v703
      %706 = vst [vmem:[%s661 + $0x18] sm:$0xf] %v704
      %707 = vrot.lane.b32.xlu0 %v660, 107
      %v708 = vpop.permute.xlu0 %707
      %709 = vrot.lane.b32.xlu0 %v664, 107
      %v710 = vpop.permute.xlu0 %709
      %v711 = vsel %vm268, %v708, %v710
      %713 = vst [vmem:[%s661 + $0x1c] sm:$0xf] %v711
      %714 = vrot.lane.b32.xlu0 %v660, 106
      %v715 = vpop.permute.xlu0 %714
      %716 = vrot.lane.b32.xlu0 %v664, 106
      %v717 = vpop.permute.xlu0 %716
      %v718 = vsel %vm276, %v715, %v717
      %720 = vst [vmem:[%s661 + $0x20] sm:$0xf] %v718
      %s721 = scalar_lea.vmem [#allocation2], 32
      %v722 = vld [vmem:[%s721] sm:$0xf]
      %v723 = vunpack.c.l.bf16 %v722
      %s724 = scalar_lea.vmem [#allocation3], 320
      %725 = vst [vmem:[%s724] sm:$0xf] %v723
      %v727 = vcombine.high %v723, %v723
      %728 = vrot.lane.b32.xlu0 %v723, 127
      %v729 = vpop.permute.xlu0 %728
      %730 = vrot.lane.b32.xlu0 %v727, 127
      %v731 = vpop.permute.xlu0 %730
      %v732 = vsel %vm220, %v729, %v731
      %734 = vst [vmem:[%s724 + $0x4] sm:$0xf] %v732
      %735 = vrot.lane.b32.xlu0 %v723, 126
      %v736 = vpop.permute.xlu0 %735
      %737 = vrot.lane.b32.xlu0 %v727, 126
      %v738 = vpop.permute.xlu0 %737
      %v739 = vsel %vm228, %v736, %v738
      %741 = vst [vmem:[%s724 + $0x8] sm:$0xf] %v739
      %742 = vrot.lane.b32.xlu0 %v723, 118
      %v743 = vpop.permute.xlu0 %742
      %744 = vrot.lane.b32.xlu0 %v727, 118
      %v745 = vpop.permute.xlu0 %744
      %v746 = vsel %vm236, %v743, %v745
      %748 = vst [vmem:[%s724 + $0xc] sm:$0xf] %v746
      %749 = vrot.lane.b32.xlu0 %v723, 117
      %v750 = vpop.permute.xlu0 %749
      %751 = vrot.lane.b32.xlu0 %v727, 117
      %v752 = vpop.permute.xlu0 %751
      %v753 = vsel %vm244, %v750, %v752
      %755 = vst [vmem:[%s724 + $0x10] sm:$0xf] %v753
      %756 = vrot.lane.b32.xlu0 %v723, 116
      %v757 = vpop.permute.xlu0 %756
      %758 = vrot.lane.b32.xlu0 %v727, 116
      %v759 = vpop.permute.xlu0 %758
      %v760 = vsel %vm252, %v757, %v759
      %762 = vst [vmem:[%s724 + $0x14] sm:$0xf] %v760
      %763 = vrot.lane.b32.xlu0 %v723, 108
      %v764 = vpop.permute.xlu0 %763
      %765 = vrot.lane.b32.xlu0 %v727, 108
      %v766 = vpop.permute.xlu0 %765
      %v767 = vsel %vm260, %v764, %v766
      %769 = vst [vmem:[%s724 + $0x18] sm:$0xf] %v767
      %770 = vrot.lane.b32.xlu0 %v723, 107
      %v771 = vpop.permute.xlu0 %770
      %772 = vrot.lane.b32.xlu0 %v727, 107
      %v773 = vpop.permute.xlu0 %772
      %v774 = vsel %vm268, %v771, %v773
      %776 = vst [vmem:[%s724 + $0x1c] sm:$0xf] %v774
      %777 = vrot.lane.b32.xlu0 %v723, 106
      %v778 = vpop.permute.xlu0 %777
      %779 = vrot.lane.b32.xlu0 %v727, 106
      %v780 = vpop.permute.xlu0 %779
      %v781 = vsel %vm276, %v778, %v780
      %783 = vst [vmem:[%s724 + $0x20] sm:$0xf] %v781
      %s784 = scalar_lea.vmem [#allocation2], 36
      %v785 = vld [vmem:[%s784] sm:$0xf]
      %v786 = vunpack.c.l.bf16 %v785
      %s787 = scalar_lea.vmem [#allocation3], 360
      %788 = vst [vmem:[%s787] sm:$0xf] %v786
      %v790 = vcombine.high %v786, %v786
      %791 = vrot.lane.b32.xlu0 %v786, 127
      %v792 = vpop.permute.xlu0 %791
      %793 = vrot.lane.b32.xlu0 %v790, 127
      %v794 = vpop.permute.xlu0 %793
      %v795 = vsel %vm220, %v792, %v794
      %797 = vst [vmem:[%s787 + $0x4] sm:$0xf] %v795
      %798 = vrot.lane.b32.xlu0 %v786, 126
      %v799 = vpop.permute.xlu0 %798
      %800 = vrot.lane.b32.xlu0 %v790, 126
      %v801 = vpop.permute.xlu0 %800
      %v802 = vsel %vm228, %v799, %v801
      %804 = vst [vmem:[%s787 + $0x8] sm:$0xf] %v802
      %805 = vrot.lane.b32.xlu0 %v786, 118
      %v806 = vpop.permute.xlu0 %805
      %807 = vrot.lane.b32.xlu0 %v790, 118
      %v808 = vpop.permute.xlu0 %807
      %v809 = vsel %vm236, %v806, %v808
      %811 = vst [vmem:[%s787 + $0xc] sm:$0xf] %v809
      %812 = vrot.lane.b32.xlu0 %v786, 117
      %v813 = vpop.permute.xlu0 %812
      %814 = vrot.lane.b32.xlu0 %v790, 117
      %v815 = vpop.permute.xlu0 %814
      %v816 = vsel %vm244, %v813, %v815
      %818 = vst [vmem:[%s787 + $0x10] sm:$0xf] %v816
      %819 = vrot.lane.b32.xlu0 %v786, 116
      %v820 = vpop.permute.xlu0 %819
      %821 = vrot.lane.b32.xlu0 %v790, 116
      %v822 = vpop.permute.xlu0 %821
      %v823 = vsel %vm252, %v820, %v822
      %825 = vst [vmem:[%s787 + $0x14] sm:$0xf] %v823
      %826 = vrot.lane.b32.xlu0 %v786, 108
      %v827 = vpop.permute.xlu0 %826
      %828 = vrot.lane.b32.xlu0 %v790, 108
      %v829 = vpop.permute.xlu0 %828
      %v830 = vsel %vm260, %v827, %v829
      %832 = vst [vmem:[%s787 + $0x18] sm:$0xf] %v830
      %833 = vrot.lane.b32.xlu0 %v786, 107
      %v834 = vpop.permute.xlu0 %833
      %835 = vrot.lane.b32.xlu0 %v790, 107
      %v836 = vpop.permute.xlu0 %835
      %v837 = vsel %vm268, %v834, %v836
      %839 = vst [vmem:[%s787 + $0x1c] sm:$0xf] %v837
      %840 = vrot.lane.b32.xlu0 %v786, 106
      %v841 = vpop.permute.xlu0 %840
      %842 = vrot.lane.b32.xlu0 %v790, 106
      %v843 = vpop.permute.xlu0 %842
      %v844 = vsel %vm276, %v841, %v843
      %846 = vst [vmem:[%s787 + $0x20] sm:$0xf] %v844
      %v847 = vld [vmem:[%s1] sm:$0xf]
      %s848 = scalar_lea.vmem %s1, 4
      %v849 = vld [vmem:[%s848] sm:$0xf]
      %s850 = scalar_lea.vmem %s1, 8
      %v851 = vld [vmem:[%s850] sm:$0xf]
      %v852 = vld [vmem:[#allocation3] sm:$0xff]
      %v853 = vld [vmem:[#allocation3 + $0x8] sm:$0xff]
      %v854 = vld [vmem:[#allocation3 + $0x10] sm:$0xff]
      %v855 = vld [vmem:[#allocation3 + $0x18] sm:$0xff]
      %v856 = vld [vmem:[#allocation3 + $0x20] sm:$0xf]
      %v857 = vpack.c.bf16 %v853, %v852
      %v858 = vpack.c.bf16 %v855, %v854
      %v859 = vpack.c.bf16 %v856, %v856
      %v860 = vld [vmem:[%s283] sm:$0xff]
      %v861 = vld [vmem:[%s283 + $0x8] sm:$0xff]
      %v862 = vld [vmem:[%s283 + $0x10] sm:$0xff]
      %v863 = vld [vmem:[%s283 + $0x18] sm:$0xff]
      %v864 = vld [vmem:[%s283 + $0x20] sm:$0xf]
      %v865 = vpack.c.bf16 %v861, %v860
      %v866 = vpack.c.bf16 %v863, %v862
      %v867 = vpack.c.bf16 %v864, %v864
      %vm868 = vcmask 293888
      %v870 = vsel %vm868, %v849, 0
      %vm872 = vcmask 1041408
      %v874 = vsel %vm872, %v867, 0
      %876 = vmatprep.subr.bf16.mxu0 0
      %877 = vmatpush1.bf16.msra.mxu0 0
      %878 = vmatprep.subr.bf16.mxu0 0
      %879 = vmatpush1.bf16.msra.mxu0 0
      %880 = vmatprep.subr.bf16.mxu0 0
      %881 = vmatpush1.bf16.msra.mxu0 0
      %882 = vmatprep.subr.bf16.mxu0 0
      %883 = vmatpush1.bf16.msra.mxu0 0
      %884 = vmatprep.subr.bf16.mxu0 0
      %885 = vmatpush1.bf16.msra.mxu0 0
      %886 = vmatprep.subr.bf16.mxu0 0
      %887 = vmatpush1.bf16.msra.mxu0 %v874
      %888 = vmatprep.subr.bf16.mxu0 0
      %889 = vmatpush1.bf16.msra.mxu0 %v866
      %890 = vmatprep.subr.bf16.mxu0 0
      %891 = vmatpush1.bf16.msra.mxu0 %v865
      %892 = vmatprep.subr.bf16.mxu0 0
      %893 = vmatpush2.bf16.msra.mxu0 0
      %894 = vmatprep.subr.bf16.mxu0 0
      %895 = vmatpush2.bf16.msra.mxu0 0
      %896 = vmatprep.subr.bf16.mxu0 0
      %897 = vmatpush2.bf16.msra.mxu0 0
      %898 = vmatprep.subr.bf16.mxu0 0
      %899 = vmatpush2.bf16.msra.mxu0 0
      %900 = vmatprep.subr.bf16.mxu0 0
      %901 = vmatpush2.bf16.msra.mxu0 0
      %902 = vmatprep.subr.bf16.mxu0 0
      %903 = vmatpush2.bf16.msra.mxu0 0
      %904 = vmatprep.subr.bf16.mxu0 0
      %905 = vmatpush2.bf16.msra.mxu0 0
      %906 = vmatprep.subr.bf16.mxu0 0
      %907 = vmatpush2.bf16.msra.mxu0 0
      %908 = vmatprep.mubr.bf16.mxu0 0
      %909 = vmatmul.mubr.bf16.gmra.mxu0 %v870
      %v910 = vpop.f32.mrf.mxu0
      %v911 = vadd.f32 0.0, %v910
      %v912 = vpop.f32.mrf.mxu0
      %v913 = vpop.f32.mrf.mxu0
      %v914 = vpop.f32.mrf.mxu0
      %915 = vdwg.mxu0
      %v917 = vsel %vm868, %v847, 0
      %v920 = vsel %vm872, %v859, 0
      %922 = vmatprep.subr.bf16.mxu0 0
      %923 = vmatpush1.bf16.msra.mxu0 0
      %924 = vmatprep.subr.bf16.mxu0 0
      %925 = vmatpush1.bf16.msra.mxu0 0
      %926 = vmatprep.subr.bf16.mxu0 0
      %927 = vmatpush1.bf16.msra.mxu0 0
      %928 = vmatprep.subr.bf16.mxu0 0
      %929 = vmatpush1.bf16.msra.mxu0 0
      %930 = vmatprep.subr.bf16.mxu0 0
      %931 = vmatpush1.bf16.msra.mxu0 0
      %932 = vmatprep.subr.bf16.mxu0 0
      %933 = vmatpush1.bf16.msra.mxu0 %v920
      %934 = vmatprep.subr.bf16.mxu0 0
      %935 = vmatpush1.bf16.msra.mxu0 %v858
      %936 = vmatprep.subr.bf16.mxu0 0
      %937 = vmatpush1.bf16.msra.mxu0 %v857
      %938 = vmatprep.subr.bf16.mxu0 0
      %939 = vmatpush2.bf16.msra.mxu0 0
      %940 = vmatprep.subr.bf16.mxu0 0
      %941 = vmatpush2.bf16.msra.mxu0 0
      %942 = vmatprep.subr.bf16.mxu0 0
      %943 = vmatpush2.bf16.msra.mxu0 0
      %944 = vmatprep.subr.bf16.mxu0 0
      %945 = vmatpush2.bf16.msra.mxu0 0
      %946 = vmatprep.subr.bf16.mxu0 0
      %947 = vmatpush2.bf16.msra.mxu0 0
      %948 = vmatprep.subr.bf16.mxu0 0
      %949 = vmatpush2.bf16.msra.mxu0 0
      %950 = vmatprep.subr.bf16.mxu0 0
      %951 = vmatpush2.bf16.msra.mxu0 0
      %952 = vmatprep.subr.bf16.mxu0 0
      %953 = vmatpush2.bf16.msra.mxu0 0
      %954 = vmatprep.mubr.bf16.mxu0 0
      %955 = vmatmul.mubr.bf16.gmra.mxu0 %v917
      %v956 = vpop.f32.mrf.mxu0
      %v957 = vadd.f32 %v911, %v956
      %v958 = vpop.f32.mrf.mxu0
      %v959 = vpop.f32.mrf.mxu0
      %v960 = vpop.f32.mrf.mxu0
      %961 = vdwg.mxu0
      %v962 = vld [vmem:[%s346] sm:$0xff]
      %v963 = vld [vmem:[%s346 + $0x8] sm:$0xff]
      %v964 = vld [vmem:[%s346 + $0x10] sm:$0xff]
      %v965 = vld [vmem:[%s346 + $0x18] sm:$0xff]
      %v966 = vld [vmem:[%s346 + $0x20] sm:$0xf]
      %v967 = vpack.c.bf16 %v963, %v962
      %v968 = vpack.c.bf16 %v965, %v964
      %v969 = vpack.c.bf16 %v966, %v966
      %v971 = vsel %vm868, %v851, 0
      %v974 = vsel %vm872, %v969, 0
      %976 = vmatprep.subr.bf16.mxu0 0
      %977 = vmatpush1.bf16.msra.mxu0 0
      %978 = vmatprep.subr.bf16.mxu0 0
      %979 = vmatpush1.bf16.msra.mxu0 0
      %980 = vmatprep.subr.bf16.mxu0 0
      %981 = vmatpush1.bf16.msra.mxu0 0
      %982 = vmatprep.subr.bf16.mxu0 0
      %983 = vmatpush1.bf16.msra.mxu0 0
      %984 = vmatprep.subr.bf16.mxu0 0
      %985 = vmatpush1.bf16.msra.mxu0 0
      %986 = vmatprep.subr.bf16.mxu0 0
      %987 = vmatpush1.bf16.msra.mxu0 %v974
      %988 = vmatprep.subr.bf16.mxu0 0
      %989 = vmatpush1.bf16.msra.mxu0 %v968
      %990 = vmatprep.subr.bf16.mxu0 0
      %991 = vmatpush1.bf16.msra.mxu0 %v967
      %992 = vmatprep.subr.bf16.mxu0 0
      %993 = vmatpush2.bf16.msra.mxu0 0
      %994 = vmatprep.subr.bf16.mxu0 0
      %995 = vmatpush2.bf16.msra.mxu0 0
      %996 = vmatprep.subr.bf16.mxu0 0
      %997 = vmatpush2.bf16.msra.mxu0 0
      %998 = vmatprep.subr.bf16.mxu0 0
      %999 = vmatpush2.bf16.msra.mxu0 0
      %1000 = vmatprep.subr.bf16.mxu0 0
      %1001 = vmatpush2.bf16.msra.mxu0 0
      %1002 = vmatprep.subr.bf16.mxu0 0
      %1003 = vmatpush2.bf16.msra.mxu0 0
      %1004 = vmatprep.subr.bf16.mxu0 0
      %1005 = vmatpush2.bf16.msra.mxu0 0
      %1006 = vmatprep.subr.bf16.mxu0 0
      %1007 = vmatpush2.bf16.msra.mxu0 0
      %1008 = vmatprep.mubr.bf16.mxu0 0
      %1009 = vmatmul.mubr.bf16.gmra.mxu0 %v971
      %v1010 = vpop.f32.mrf.mxu0
      %v1011 = vadd.f32 0.0, %v1010
      %v1012 = vpop.f32.mrf.mxu0
      %v1013 = vpop.f32.mrf.mxu0
      %v1014 = vpop.f32.mrf.mxu0
      %1015 = vdwg.mxu0
      %v1016 = vadd.f32 %v957, %v1011
      %1017 = vst [vmem:[%s146] sm:$0xff] %v1016
      %v1018 = vld [vmem:[%s283] sm:$0xff]
      %v1019 = vld [vmem:[%s283 + $0x8] sm:$0xff]
      %v1020 = vld [vmem:[%s283 + $0x10] sm:$0xff]
      %v1021 = vld [vmem:[%s283 + $0x18] sm:$0xff]
      %v1022 = vld [vmem:[%s283 + $0x20] sm:$0xf]
      %v1023 = vpack.c.bf16 %v1019, %v1018
      %v1024 = vpack.c.bf16 %v1021, %v1020
      %v1025 = vpack.c.bf16 %v1022, %v1022
      %v1026 = vld [vmem:[%s346] sm:$0xff]
      %v1027 = vld [vmem:[%s346 + $0x8] sm:$0xff]
      %v1028 = vld [vmem:[%s346 + $0x10] sm:$0xff]
      %v1029 = vld [vmem:[%s346 + $0x18] sm:$0xff]
      %v1030 = vld [vmem:[%s346 + $0x20] sm:$0xf]
      %v1031 = vpack.c.bf16 %v1027, %v1026
      %v1032 = vpack.c.bf16 %v1029, %v1028
      %v1033 = vpack.c.bf16 %v1030, %v1030
      %v1035 = vsel %vm872, %v1033, 0
      %1037 = vmatprep.subr.bf16.mxu0 0
      %1038 = vmatpush1.bf16.msra.mxu0 0
      %1039 = vmatprep.subr.bf16.mxu0 0
      %1040 = vmatpush1.bf16.msra.mxu0 0
      %1041 = vmatprep.subr.bf16.mxu0 0
      %1042 = vmatpush1.bf16.msra.mxu0 0
      %1043 = vmatprep.subr.bf16.mxu0 0
      %1044 = vmatpush1.bf16.msra.mxu0 0
      %1045 = vmatprep.subr.bf16.mxu0 0
      %1046 = vmatpush1.bf16.msra.mxu0 0
      %1047 = vmatprep.subr.bf16.mxu0 0
      %1048 = vmatpush1.bf16.msra.mxu0 %v1035
      %1049 = vmatprep.subr.bf16.mxu0 0
      %1050 = vmatpush1.bf16.msra.mxu0 %v1032
      %1051 = vmatprep.subr.bf16.mxu0 0
      %1052 = vmatpush1.bf16.msra.mxu0 %v1031
      %1053 = vmatprep.subr.bf16.mxu0 0
      %1054 = vmatpush2.bf16.msra.mxu0 0
      %1055 = vmatprep.subr.bf16.mxu0 0
      %1056 = vmatpush2.bf16.msra.mxu0 0
      %1057 = vmatprep.subr.bf16.mxu0 0
      %1058 = vmatpush2.bf16.msra.mxu0 0
      %1059 = vmatprep.subr.bf16.mxu0 0
      %1060 = vmatpush2.bf16.msra.mxu0 0
      %1061 = vmatprep.subr.bf16.mxu0 0
      %1062 = vmatpush2.bf16.msra.mxu0 0
      %1063 = vmatprep.subr.bf16.mxu0 0
      %1064 = vmatpush2.bf16.msra.mxu0 0
      %1065 = vmatprep.subr.bf16.mxu0 0
      %1066 = vmatpush2.bf16.msra.mxu0 0
      %1067 = vmatprep.subr.bf16.mxu0 0
      %1068 = vmatpush2.bf16.msra.mxu0 0
      %1069 = vmatprep.mubr.bf16.mxu0 0
      %1070 = vmatmul.mubr.bf16.gmra.mxu0 %v870
      %v1071 = vpop.f32.mrf.mxu0
      %v1072 = vadd.f32 0.0, %v1071
      %v1073 = vpop.f32.mrf.mxu0
      %v1074 = vpop.f32.mrf.mxu0
      %v1075 = vpop.f32.mrf.mxu0
      %1076 = vdwg.mxu0
      %v1078 = vsel %vm872, %v1025, 0
      %1080 = vmatprep.subr.bf16.mxu0 0
      %1081 = vmatpush1.bf16.msra.mxu0 0
      %1082 = vmatprep.subr.bf16.mxu0 0
      %1083 = vmatpush1.bf16.msra.mxu0 0
      %1084 = vmatprep.subr.bf16.mxu0 0
      %1085 = vmatpush1.bf16.msra.mxu0 0
      %1086 = vmatprep.subr.bf16.mxu0 0
      %1087 = vmatpush1.bf16.msra.mxu0 0
      %1088 = vmatprep.subr.bf16.mxu0 0
      %1089 = vmatpush1.bf16.msra.mxu0 0
      %1090 = vmatprep.subr.bf16.mxu0 0
      %1091 = vmatpush1.bf16.msra.mxu0 %v1078
      %1092 = vmatprep.subr.bf16.mxu0 0
      %1093 = vmatpush1.bf16.msra.mxu0 %v1024
      %1094 = vmatprep.subr.bf16.mxu0 0
      %1095 = vmatpush1.bf16.msra.mxu0 %v1023
      %1096 = vmatprep.subr.bf16.mxu0 0
      %1097 = vmatpush2.bf16.msra.mxu0 0
      %1098 = vmatprep.subr.bf16.mxu0 0
      %1099 = vmatpush2.bf16.msra.mxu0 0
      %1100 = vmatprep.subr.bf16.mxu0 0
      %1101 = vmatpush2.bf16.msra.mxu0 0
      %1102 = vmatprep.subr.bf16.mxu0 0
      %1103 = vmatpush2.bf16.msra.mxu0 0
      %1104 = vmatprep.subr.bf16.mxu0 0
      %1105 = vmatpush2.bf16.msra.mxu0 0
      %1106 = vmatprep.subr.bf16.mxu0 0
      %1107 = vmatpush2.bf16.msra.mxu0 0
      %1108 = vmatprep.subr.bf16.mxu0 0
      %1109 = vmatpush2.bf16.msra.mxu0 0
      %1110 = vmatprep.subr.bf16.mxu0 0
      %1111 = vmatpush2.bf16.msra.mxu0 0
      %1112 = vmatprep.mubr.bf16.mxu0 0
      %1113 = vmatmul.mubr.bf16.gmra.mxu0 %v917
      %v1114 = vpop.f32.mrf.mxu0
      %v1115 = vadd.f32 %v1072, %v1114
      %v1116 = vpop.f32.mrf.mxu0
      %v1117 = vpop.f32.mrf.mxu0
      %v1118 = vpop.f32.mrf.mxu0
      %1119 = vdwg.mxu0
      %v1120 = vld [vmem:[%s409] sm:$0xff]
      %v1121 = vld [vmem:[%s409 + $0x8] sm:$0xff]
      %v1122 = vld [vmem:[%s409 + $0x10] sm:$0xff]
      %v1123 = vld [vmem:[%s409 + $0x18] sm:$0xff]
      %v1124 = vld [vmem:[%s409 + $0x20] sm:$0xf]
      %v1125 = vpack.c.bf16 %v1121, %v1120
      %v1126 = vpack.c.bf16 %v1123, %v1122
      %v1127 = vpack.c.bf16 %v1124, %v1124
      %v1129 = vsel %vm872, %v1127, 0
      %1131 = vmatprep.subr.bf16.mxu0 0
      %1132 = vmatpush1.bf16.msra.mxu0 0
      %1133 = vmatprep.subr.bf16.mxu0 0
      %1134 = vmatpush1.bf16.msra.mxu0 0
      %1135 = vmatprep.subr.bf16.mxu0 0
      %1136 = vmatpush1.bf16.msra.mxu0 0
      %1137 = vmatprep.subr.bf16.mxu0 0
      %1138 = vmatpush1.bf16.msra.mxu0 0
      %1139 = vmatprep.subr.bf16.mxu0 0
      %1140 = vmatpush1.bf16.msra.mxu0 0
      %1141 = vmatprep.subr.bf16.mxu0 0
      %1142 = vmatpush1.bf16.msra.mxu0 %v1129
      %1143 = vmatprep.subr.bf16.mxu0 0
      %1144 = vmatpush1.bf16.msra.mxu0 %v1126
      %1145 = vmatprep.subr.bf16.mxu0 0
      %1146 = vmatpush1.bf16.msra.mxu0 %v1125
      %1147 = vmatprep.subr.bf16.mxu0 0
      %1148 = vmatpush2.bf16.msra.mxu0 0
      %1149 = vmatprep.subr.bf16.mxu0 0
      %1150 = vmatpush2.bf16.msra.mxu0 0
      %1151 = vmatprep.subr.bf16.mxu0 0
      %1152 = vmatpush2.bf16.msra.mxu0 0
      %1153 = vmatprep.subr.bf16.mxu0 0
      %1154 = vmatpush2.bf16.msra.mxu0 0
      %1155 = vmatprep.subr.bf16.mxu0 0
      %1156 = vmatpush2.bf16.msra.mxu0 0
      %1157 = vmatprep.subr.bf16.mxu0 0
      %1158 = vmatpush2.bf16.msra.mxu0 0
      %1159 = vmatprep.subr.bf16.mxu0 0
      %1160 = vmatpush2.bf16.msra.mxu0 0
      %1161 = vmatprep.subr.bf16.mxu0 0
      %1162 = vmatpush2.bf16.msra.mxu0 0
      %1163 = vmatprep.mubr.bf16.mxu0 0
      %1164 = vmatmul.mubr.bf16.gmra.mxu0 %v971
      %v1165 = vpop.f32.mrf.mxu0
      %v1166 = vadd.f32 0.0, %v1165
      %v1167 = vpop.f32.mrf.mxu0
      %v1168 = vpop.f32.mrf.mxu0
      %v1169 = vpop.f32.mrf.mxu0
      %1170 = vdwg.mxu0
      %v1171 = vadd.f32 %v1115, %v1166
      %s1172 = scalar_lea.vmem %s146, 8
      %1173 = vst [vmem:[%s1172] sm:$0xff] %v1171
      %v1174 = vld [vmem:[%s346] sm:$0xff]
      %v1175 = vld [vmem:[%s346 + $0x8] sm:$0xff]
      %v1176 = vld [vmem:[%s346 + $0x10] sm:$0xff]
      %v1177 = vld [vmem:[%s346 + $0x18] sm:$0xff]
      %v1178 = vld [vmem:[%s346 + $0x20] sm:$0xf]
      %v1179 = vpack.c.bf16 %v1175, %v1174
      %v1180 = vpack.c.bf16 %v1177, %v1176
      %v1181 = vpack.c.bf16 %v1178, %v1178
      %v1182 = vld [vmem:[%s409] sm:$0xff]
      %v1183 = vld [vmem:[%s409 + $0x8] sm:$0xff]
      %v1184 = vld [vmem:[%s409 + $0x10] sm:$0xff]
      %v1185 = vld [vmem:[%s409 + $0x18] sm:$0xff]
      %v1186 = vld [vmem:[%s409 + $0x20] sm:$0xf]
      %v1187 = vpack.c.bf16 %v1183, %v1182
      %v1188 = vpack.c.bf16 %v1185, %v1184
      %v1189 = vpack.c.bf16 %v1186, %v1186
      %v1191 = vsel %vm872, %v1189, 0
      %1193 = vmatprep.subr.bf16.mxu0 0
      %1194 = vmatpush1.bf16.msra.mxu0 0
      %1195 = vmatprep.subr.bf16.mxu0 0
      %1196 = vmatpush1.bf16.msra.mxu0 0
      %1197 = vmatprep.subr.bf16.mxu0 0
      %1198 = vmatpush1.bf16.msra.mxu0 0
      %1199 = vmatprep.subr.bf16.mxu0 0
      %1200 = vmatpush1.bf16.msra.mxu0 0
      %1201 = vmatprep.subr.bf16.mxu0 0
      %1202 = vmatpush1.bf16.msra.mxu0 0
      %1203 = vmatprep.subr.bf16.mxu0 0
      %1204 = vmatpush1.bf16.msra.mxu0 %v1191
      %1205 = vmatprep.subr.bf16.mxu0 0
      %1206 = vmatpush1.bf16.msra.mxu0 %v1188
      %1207 = vmatprep.subr.bf16.mxu0 0
      %1208 = vmatpush1.bf16.msra.mxu0 %v1187
      %1209 = vmatprep.subr.bf16.mxu0 0
      %1210 = vmatpush2.bf16.msra.mxu0 0
      %1211 = vmatprep.subr.bf16.mxu0 0
      %1212 = vmatpush2.bf16.msra.mxu0 0
      %1213 = vmatprep.subr.bf16.mxu0 0
      %1214 = vmatpush2.bf16.msra.mxu0 0
      %1215 = vmatprep.subr.bf16.mxu0 0
      %1216 = vmatpush2.bf16.msra.mxu0 0
      %1217 = vmatprep.subr.bf16.mxu0 0
      %1218 = vmatpush2.bf16.msra.mxu0 0
      %1219 = vmatprep.subr.bf16.mxu0 0
      %1220 = vmatpush2.bf16.msra.mxu0 0
      %1221 = vmatprep.subr.bf16.mxu0 0
      %1222 = vmatpush2.bf16.msra.mxu0 0
      %1223 = vmatprep.subr.bf16.mxu0 0
      %1224 = vmatpush2.bf16.msra.mxu0 0
      %1225 = vmatprep.mubr.bf16.mxu0 0
      %1226 = vmatmul.mubr.bf16.gmra.mxu0 %v870
      %v1227 = vpop.f32.mrf.mxu0
      %v1228 = vadd.f32 0.0, %v1227
      %v1229 = vpop.f32.mrf.mxu0
      %v1230 = vpop.f32.mrf.mxu0
      %v1231 = vpop.f32.mrf.mxu0
      %1232 = vdwg.mxu0
      %v1234 = vsel %vm872, %v1181, 0
      %1236 = vmatprep.subr.bf16.mxu0 0
      %1237 = vmatpush1.bf16.msra.mxu0 0
      %1238 = vmatprep.subr.bf16.mxu0 0
      %1239 = vmatpush1.bf16.msra.mxu0 0
      %1240 = vmatprep.subr.bf16.mxu0 0
      %1241 = vmatpush1.bf16.msra.mxu0 0
      %1242 = vmatprep.subr.bf16.mxu0 0
      %1243 = vmatpush1.bf16.msra.mxu0 0
      %1244 = vmatprep.subr.bf16.mxu0 0
      %1245 = vmatpush1.bf16.msra.mxu0 0
      %1246 = vmatprep.subr.bf16.mxu0 0
      %1247 = vmatpush1.bf16.msra.mxu0 %v1234
      %1248 = vmatprep.subr.bf16.mxu0 0
      %1249 = vmatpush1.bf16.msra.mxu0 %v1180
      %1250 = vmatprep.subr.bf16.mxu0 0
      %1251 = vmatpush1.bf16.msra.mxu0 %v1179
      %1252 = vmatprep.subr.bf16.mxu0 0
      %1253 = vmatpush2.bf16.msra.mxu0 0
      %1254 = vmatprep.subr.bf16.mxu0 0
      %1255 = vmatpush2.bf16.msra.mxu0 0
      %1256 = vmatprep.subr.bf16.mxu0 0
      %1257 = vmatpush2.bf16.msra.mxu0 0
      %1258 = vmatprep.subr.bf16.mxu0 0
      %1259 = vmatpush2.bf16.msra.mxu0 0
      %1260 = vmatprep.subr.bf16.mxu0 0
      %1261 = vmatpush2.bf16.msra.mxu0 0
      %1262 = vmatprep.subr.bf16.mxu0 0
      %1263 = vmatpush2.bf16.msra.mxu0 0
      %1264 = vmatprep.subr.bf16.mxu0 0
      %1265 = vmatpush2.bf16.msra.mxu0 0
      %1266 = vmatprep.subr.bf16.mxu0 0
      %1267 = vmatpush2.bf16.msra.mxu0 0
      %1268 = vmatprep.mubr.bf16.mxu0 0
      %1269 = vmatmul.mubr.bf16.gmra.mxu0 %v917
      %v1270 = vpop.f32.mrf.mxu0
      %v1271 = vadd.f32 %v1228, %v1270
      %v1272 = vpop.f32.mrf.mxu0
      %v1273 = vpop.f32.mrf.mxu0
      %v1274 = vpop.f32.mrf.mxu0
      %1275 = vdwg.mxu0
      %v1276 = vld [vmem:[%s472] sm:$0xff]
      %v1277 = vld [vmem:[%s472 + $0x8] sm:$0xff]
      %v1278 = vld [vmem:[%s472 + $0x10] sm:$0xff]
      %v1279 = vld [vmem:[%s472 + $0x18] sm:$0xff]
      %v1280 = vld [vmem:[%s472 + $0x20] sm:$0xf]
      %v1281 = vpack.c.bf16 %v1277, %v1276
      %v1282 = vpack.c.bf16 %v1279, %v1278
      %v1283 = vpack.c.bf16 %v1280, %v1280
      %v1285 = vsel %vm872, %v1283, 0
      %1287 = vmatprep.subr.bf16.mxu0 0
      %1288 = vmatpush1.bf16.msra.mxu0 0
      %1289 = vmatprep.subr.bf16.mxu0 0
      %1290 = vmatpush1.bf16.msra.mxu0 0
      %1291 = vmatprep.subr.bf16.mxu0 0
      %1292 = vmatpush1.bf16.msra.mxu0 0
      %1293 = vmatprep.subr.bf16.mxu0 0
      %1294 = vmatpush1.bf16.msra.mxu0 0
      %1295 = vmatprep.subr.bf16.mxu0 0
      %1296 = vmatpush1.bf16.msra.mxu0 0
      %1297 = vmatprep.subr.bf16.mxu0 0
      %1298 = vmatpush1.bf16.msra.mxu0 %v1285
      %1299 = vmatprep.subr.bf16.mxu0 0
      %1300 = vmatpush1.bf16.msra.mxu0 %v1282
      %1301 = vmatprep.subr.bf16.mxu0 0
      %1302 = vmatpush1.bf16.msra.mxu0 %v1281
      %1303 = vmatprep.subr.bf16.mxu0 0
      %1304 = vmatpush2.bf16.msra.mxu0 0
      %1305 = vmatprep.subr.bf16.mxu0 0
      %1306 = vmatpush2.bf16.msra.mxu0 0
      %1307 = vmatprep.subr.bf16.mxu0 0
      %1308 = vmatpush2.bf16.msra.mxu0 0
      %1309 = vmatprep.subr.bf16.mxu0 0
      %1310 = vmatpush2.bf16.msra.mxu0 0
      %1311 = vmatprep.subr.bf16.mxu0 0
      %1312 = vmatpush2.bf16.msra.mxu0 0
      %1313 = vmatprep.subr.bf16.mxu0 0
      %1314 = vmatpush2.bf16.msra.mxu0 0
      %1315 = vmatprep.subr.bf16.mxu0 0
      %1316 = vmatpush2.bf16.msra.mxu0 0
      %1317 = vmatprep.subr.bf16.mxu0 0
      %1318 = vmatpush2.bf16.msra.mxu0 0
      %1319 = vmatprep.mubr.bf16.mxu0 0
      %1320 = vmatmul.mubr.bf16.gmra.mxu0 %v971
      %v1321 = vpop.f32.mrf.mxu0
      %v1322 = vadd.f32 0.0, %v1321
      %v1323 = vpop.f32.mrf.mxu0
      %v1324 = vpop.f32.mrf.mxu0
      %v1325 = vpop.f32.mrf.mxu0
      %1326 = vdwg.mxu0
      %v1327 = vadd.f32 %v1271, %v1322
      %s1328 = scalar_lea.vmem %s146, 16
      %1329 = vst [vmem:[%s1328] sm:$0xff] %v1327
      %v1330 = vld [vmem:[%s409] sm:$0xff]
      %v1331 = vld [vmem:[%s409 + $0x8] sm:$0xff]
      %v1332 = vld [vmem:[%s409 + $0x10] sm:$0xff]
      %v1333 = vld [vmem:[%s409 + $0x18] sm:$0xff]
      %v1334 = vld [vmem:[%s409 + $0x20] sm:$0xf]
      %v1335 = vpack.c.bf16 %v1331, %v1330
      %v1336 = vpack.c.bf16 %v1333, %v1332
      %v1337 = vpack.c.bf16 %v1334, %v1334
      %v1338 = vld [vmem:[%s472] sm:$0xff]
      %v1339 = vld [vmem:[%s472 + $0x8] sm:$0xff]
      %v1340 = vld [vmem:[%s472 + $0x10] sm:$0xff]
      %v1341 = vld [vmem:[%s472 + $0x18] sm:$0xff]
      %v1342 = vld [vmem:[%s472 + $0x20] sm:$0xf]
      %v1343 = vpack.c.bf16 %v1339, %v1338
      %v1344 = vpack.c.bf16 %v1341, %v1340
      %v1345 = vpack.c.bf16 %v1342, %v1342
      %v1347 = vsel %vm872, %v1345, 0
      %1349 = vmatprep.subr.bf16.mxu0 0
      %1350 = vmatpush1.bf16.msra.mxu0 0
      %1351 = vmatprep.subr.bf16.mxu0 0
      %1352 = vmatpush1.bf16.msra.mxu0 0
      %1353 = vmatprep.subr.bf16.mxu0 0
      %1354 = vmatpush1.bf16.msra.mxu0 0
      %1355 = vmatprep.subr.bf16.mxu0 0
      %1356 = vmatpush1.bf16.msra.mxu0 0
      %1357 = vmatprep.subr.bf16.mxu0 0
      %1358 = vmatpush1.bf16.msra.mxu0 0
      %1359 = vmatprep.subr.bf16.mxu0 0
      %1360 = vmatpush1.bf16.msra.mxu0 %v1347
      %1361 = vmatprep.subr.bf16.mxu0 0
      %1362 = vmatpush1.bf16.msra.mxu0 %v1344
      %1363 = vmatprep.subr.bf16.mxu0 0
      %1364 = vmatpush1.bf16.msra.mxu0 %v1343
      %1365 = vmatprep.subr.bf16.mxu0 0
      %1366 = vmatpush2.bf16.msra.mxu0 0
      %1367 = vmatprep.subr.bf16.mxu0 0
      %1368 = vmatpush2.bf16.msra.mxu0 0
      %1369 = vmatprep.subr.bf16.mxu0 0
      %1370 = vmatpush2.bf16.msra.mxu0 0
      %1371 = vmatprep.subr.bf16.mxu0 0
      %1372 = vmatpush2.bf16.msra.mxu0 0
      %1373 = vmatprep.subr.bf16.mxu0 0
      %1374 = vmatpush2.bf16.msra.mxu0 0
      %1375 = vmatprep.subr.bf16.mxu0 0
      %1376 = vmatpush2.bf16.msra.mxu0 0
      %1377 = vmatprep.subr.bf16.mxu0 0
      %1378 = vmatpush2.bf16.msra.mxu0 0
      %1379 = vmatprep.subr.bf16.mxu0 0
      %1380 = vmatpush2.bf16.msra.mxu0 0
      %1381 = vmatprep.mubr.bf16.mxu0 0
      %1382 = vmatmul.mubr.bf16.gmra.mxu0 %v870
      %v1383 = vpop.f32.mrf.mxu0
      %v1384 = vadd.f32 0.0, %v1383
      %v1385 = vpop.f32.mrf.mxu0
      %v1386 = vpop.f32.mrf.mxu0
      %v1387 = vpop.f32.mrf.mxu0
      %1388 = vdwg.mxu0
      %v1390 = vsel %vm872, %v1337, 0
      %1392 = vmatprep.subr.bf16.mxu0 0
      %1393 = vmatpush1.bf16.msra.mxu0 0
      %1394 = vmatprep.subr.bf16.mxu0 0
      %1395 = vmatpush1.bf16.msra.mxu0 0
      %1396 = vmatprep.subr.bf16.mxu0 0
      %1397 = vmatpush1.bf16.msra.mxu0 0
      %1398 = vmatprep.subr.bf16.mxu0 0
      %1399 = vmatpush1.bf16.msra.mxu0 0
      %1400 = vmatprep.subr.bf16.mxu0 0
      %1401 = vmatpush1.bf16.msra.mxu0 0
      %1402 = vmatprep.subr.bf16.mxu0 0
      %1403 = vmatpush1.bf16.msra.mxu0 %v1390
      %1404 = vmatprep.subr.bf16.mxu0 0
      %1405 = vmatpush1.bf16.msra.mxu0 %v1336
      %1406 = vmatprep.subr.bf16.mxu0 0
      %1407 = vmatpush1.bf16.msra.mxu0 %v1335
      %1408 = vmatprep.subr.bf16.mxu0 0
      %1409 = vmatpush2.bf16.msra.mxu0 0
      %1410 = vmatprep.subr.bf16.mxu0 0
      %1411 = vmatpush2.bf16.msra.mxu0 0
      %1412 = vmatprep.subr.bf16.mxu0 0
      %1413 = vmatpush2.bf16.msra.mxu0 0
      %1414 = vmatprep.subr.bf16.mxu0 0
      %1415 = vmatpush2.bf16.msra.mxu0 0
      %1416 = vmatprep.subr.bf16.mxu0 0
      %1417 = vmatpush2.bf16.msra.mxu0 0
      %1418 = vmatprep.subr.bf16.mxu0 0
      %1419 = vmatpush2.bf16.msra.mxu0 0
      %1420 = vmatprep.subr.bf16.mxu0 0
      %1421 = vmatpush2.bf16.msra.mxu0 0
      %1422 = vmatprep.subr.bf16.mxu0 0
      %1423 = vmatpush2.bf16.msra.mxu0 0
      %1424 = vmatprep.mubr.bf16.mxu0 0
      %1425 = vmatmul.mubr.bf16.gmra.mxu0 %v917
      %v1426 = vpop.f32.mrf.mxu0
      %v1427 = vadd.f32 %v1384, %v1426
      %v1428 = vpop.f32.mrf.mxu0
      %v1429 = vpop.f32.mrf.mxu0
      %v1430 = vpop.f32.mrf.mxu0
      %1431 = vdwg.mxu0
      %v1432 = vld [vmem:[%s535] sm:$0xff]
      %v1433 = vld [vmem:[%s535 + $0x8] sm:$0xff]
      %v1434 = vld [vmem:[%s535 + $0x10] sm:$0xff]
      %v1435 = vld [vmem:[%s535 + $0x18] sm:$0xff]
      %v1436 = vld [vmem:[%s535 + $0x20] sm:$0xf]
      %v1437 = vpack.c.bf16 %v1433, %v1432
      %v1438 = vpack.c.bf16 %v1435, %v1434
      %v1439 = vpack.c.bf16 %v1436, %v1436
      %v1441 = vsel %vm872, %v1439, 0
      %1443 = vmatprep.subr.bf16.mxu0 0
      %1444 = vmatpush1.bf16.msra.mxu0 0
      %1445 = vmatprep.subr.bf16.mxu0 0
      %1446 = vmatpush1.bf16.msra.mxu0 0
      %1447 = vmatprep.subr.bf16.mxu0 0
      %1448 = vmatpush1.bf16.msra.mxu0 0
      %1449 = vmatprep.subr.bf16.mxu0 0
      %1450 = vmatpush1.bf16.msra.mxu0 0
      %1451 = vmatprep.subr.bf16.mxu0 0
      %1452 = vmatpush1.bf16.msra.mxu0 0
      %1453 = vmatprep.subr.bf16.mxu0 0
      %1454 = vmatpush1.bf16.msra.mxu0 %v1441
      %1455 = vmatprep.subr.bf16.mxu0 0
      %1456 = vmatpush1.bf16.msra.mxu0 %v1438
      %1457 = vmatprep.subr.bf16.mxu0 0
      %1458 = vmatpush1.bf16.msra.mxu0 %v1437
      %1459 = vmatprep.subr.bf16.mxu0 0
      %1460 = vmatpush2.bf16.msra.mxu0 0
      %1461 = vmatprep.subr.bf16.mxu0 0
      %1462 = vmatpush2.bf16.msra.mxu0 0
      %1463 = vmatprep.subr.bf16.mxu0 0
      %1464 = vmatpush2.bf16.msra.mxu0 0
      %1465 = vmatprep.subr.bf16.mxu0 0
      %1466 = vmatpush2.bf16.msra.mxu0 0
      %1467 = vmatprep.subr.bf16.mxu0 0
      %1468 = vmatpush2.bf16.msra.mxu0 0
      %1469 = vmatprep.subr.bf16.mxu0 0
      %1470 = vmatpush2.bf16.msra.mxu0 0
      %1471 = vmatprep.subr.bf16.mxu0 0
      %1472 = vmatpush2.bf16.msra.mxu0 0
      %1473 = vmatprep.subr.bf16.mxu0 0
      %1474 = vmatpush2.bf16.msra.mxu0 0
      %1475 = vmatprep.mubr.bf16.mxu0 0
      %1476 = vmatmul.mubr.bf16.gmra.mxu0 %v971
      %v1477 = vpop.f32.mrf.mxu0
      %v1478 = vadd.f32 0.0, %v1477
      %v1479 = vpop.f32.mrf.mxu0
      %v1480 = vpop.f32.mrf.mxu0
      %v1481 = vpop.f32.mrf.mxu0
      %1482 = vdwg.mxu0
      %v1483 = vadd.f32 %v1427, %v1478
      %s1484 = scalar_lea.vmem %s146, 24
      %1485 = vst [vmem:[%s1484] sm:$0xff] %v1483
      %v1486 = vld [vmem:[%s472] sm:$0xff]
      %v1487 = vld [vmem:[%s472 + $0x8] sm:$0xff]
      %v1488 = vld [vmem:[%s472 + $0x10] sm:$0xff]
      %v1489 = vld [vmem:[%s472 + $0x18] sm:$0xff]
      %v1490 = vld [vmem:[%s472 + $0x20] sm:$0xf]
      %v1491 = vpack.c.bf16 %v1487, %v1486
      %v1492 = vpack.c.bf16 %v1489, %v1488
      %v1493 = vpack.c.bf16 %v1490, %v1490
      %v1494 = vld [vmem:[%s535] sm:$0xff]
      %v1495 = vld [vmem:[%s535 + $0x8] sm:$0xff]
      %v1496 = vld [vmem:[%s535 + $0x10] sm:$0xff]
      %v1497 = vld [vmem:[%s535 + $0x18] sm:$0xff]
      %v1498 = vld [vmem:[%s535 + $0x20] sm:$0xf]
      %v1499 = vpack.c.bf16 %v1495, %v1494
      %v1500 = vpack.c.bf16 %v1497, %v1496
      %v1501 = vpack.c.bf16 %v1498, %v1498
      %v1503 = vsel %vm872, %v1501, 0
      %1505 = vmatprep.subr.bf16.mxu0 0
      %1506 = vmatpush1.bf16.msra.mxu0 0
      %1507 = vmatprep.subr.bf16.mxu0 0
      %1508 = vmatpush1.bf16.msra.mxu0 0
      %1509 = vmatprep.subr.bf16.mxu0 0
      %1510 = vmatpush1.bf16.msra.mxu0 0
      %1511 = vmatprep.subr.bf16.mxu0 0
      %1512 = vmatpush1.bf16.msra.mxu0 0
      %1513 = vmatprep.subr.bf16.mxu0 0
      %1514 = vmatpush1.bf16.msra.mxu0 0
      %1515 = vmatprep.subr.bf16.mxu0 0
      %1516 = vmatpush1.bf16.msra.mxu0 %v1503
      %1517 = vmatprep.subr.bf16.mxu0 0
      %1518 = vmatpush1.bf16.msra.mxu0 %v1500
      %1519 = vmatprep.subr.bf16.mxu0 0
      %1520 = vmatpush1.bf16.msra.mxu0 %v1499
      %1521 = vmatprep.subr.bf16.mxu0 0
      %1522 = vmatpush2.bf16.msra.mxu0 0
      %1523 = vmatprep.subr.bf16.mxu0 0
      %1524 = vmatpush2.bf16.msra.mxu0 0
      %1525 = vmatprep.subr.bf16.mxu0 0
      %1526 = vmatpush2.bf16.msra.mxu0 0
      %1527 = vmatprep.subr.bf16.mxu0 0
      %1528 = vmatpush2.bf16.msra.mxu0 0
      %1529 = vmatprep.subr.bf16.mxu0 0
      %1530 = vmatpush2.bf16.msra.mxu0 0
      %1531 = vmatprep.subr.bf16.mxu0 0
      %1532 = vmatpush2.bf16.msra.mxu0 0
      %1533 = vmatprep.subr.bf16.mxu0 0
      %1534 = vmatpush2.bf16.msra.mxu0 0
      %1535 = vmatprep.subr.bf16.mxu0 0
      %1536 = vmatpush2.bf16.msra.mxu0 0
      %1537 = vmatprep.mubr.bf16.mxu0 0
      %1538 = vmatmul.mubr.bf16.gmra.mxu0 %v870
      %v1539 = vpop.f32.mrf.mxu0
      %v1540 = vadd.f32 0.0, %v1539
      %v1541 = vpop.f32.mrf.mxu0
      %v1542 = vpop.f32.mrf.mxu0
      %v1543 = vpop.f32.mrf.mxu0
      %1544 = vdwg.mxu0
      %v1546 = vsel %vm872, %v1493, 0
      %1548 = vmatprep.subr.bf16.mxu0 0
      %1549 = vmatpush1.bf16.msra.mxu0 0
      %1550 = vmatprep.subr.bf16.mxu0 0
      %1551 = vmatpush1.bf16.msra.mxu0 0
      %1552 = vmatprep.subr.bf16.mxu0 0
      %1553 = vmatpush1.bf16.msra.mxu0 0
      %1554 = vmatprep.subr.bf16.mxu0 0
      %1555 = vmatpush1.bf16.msra.mxu0 0
      %1556 = vmatprep.subr.bf16.mxu0 0
      %1557 = vmatpush1.bf16.msra.mxu0 0
      %1558 = vmatprep.subr.bf16.mxu0 0
      %1559 = vmatpush1.bf16.msra.mxu0 %v1546
      %1560 = vmatprep.subr.bf16.mxu0 0
      %1561 = vmatpush1.bf16.msra.mxu0 %v1492
      %1562 = vmatprep.subr.bf16.mxu0 0
      %1563 = vmatpush1.bf16.msra.mxu0 %v1491
      %1564 = vmatprep.subr.bf16.mxu0 0
      %1565 = vmatpush2.bf16.msra.mxu0 0
      %1566 = vmatprep.subr.bf16.mxu0 0
      %1567 = vmatpush2.bf16.msra.mxu0 0
      %1568 = vmatprep.subr.bf16.mxu0 0
      %1569 = vmatpush2.bf16.msra.mxu0 0
      %1570 = vmatprep.subr.bf16.mxu0 0
      %1571 = vmatpush2.bf16.msra.mxu0 0
      %1572 = vmatprep.subr.bf16.mxu0 0
      %1573 = vmatpush2.bf16.msra.mxu0 0
      %1574 = vmatprep.subr.bf16.mxu0 0
      %1575 = vmatpush2.bf16.msra.mxu0 0
      %1576 = vmatprep.subr.bf16.mxu0 0
      %1577 = vmatpush2.bf16.msra.mxu0 0
      %1578 = vmatprep.subr.bf16.mxu0 0
      %1579 = vmatpush2.bf16.msra.mxu0 0
      %1580 = vmatprep.mubr.bf16.mxu0 0
      %1581 = vmatmul.mubr.bf16.gmra.mxu0 %v917
      %v1582 = vpop.f32.mrf.mxu0
      %v1583 = vadd.f32 %v1540, %v1582
      %v1584 = vpop.f32.mrf.mxu0
      %v1585 = vpop.f32.mrf.mxu0
      %v1586 = vpop.f32.mrf.mxu0
      %1587 = vdwg.mxu0
      %v1588 = vld [vmem:[%s598] sm:$0xff]
      %v1589 = vld [vmem:[%s598 + $0x8] sm:$0xff]
      %v1590 = vld [vmem:[%s598 + $0x10] sm:$0xff]
      %v1591 = vld [vmem:[%s598 + $0x18] sm:$0xff]
      %v1592 = vld [vmem:[%s598 + $0x20] sm:$0xf]
      %v1593 = vpack.c.bf16 %v1589, %v1588
      %v1594 = vpack.c.bf16 %v1591, %v1590
      %v1595 = vpack.c.bf16 %v1592, %v1592
      %v1597 = vsel %vm872, %v1595, 0
      %1599 = vmatprep.subr.bf16.mxu0 0
      %1600 = vmatpush1.bf16.msra.mxu0 0
      %1601 = vmatprep.subr.bf16.mxu0 0
      %1602 = vmatpush1.bf16.msra.mxu0 0
      %1603 = vmatprep.subr.bf16.mxu0 0
      %1604 = vmatpush1.bf16.msra.mxu0 0
      %1605 = vmatprep.subr.bf16.mxu0 0
      %1606 = vmatpush1.bf16.msra.mxu0 0
      %1607 = vmatprep.subr.bf16.mxu0 0
      %1608 = vmatpush1.bf16.msra.mxu0 0
      %1609 = vmatprep.subr.bf16.mxu0 0
      %1610 = vmatpush1.bf16.msra.mxu0 %v1597
      %1611 = vmatprep.subr.bf16.mxu0 0
      %1612 = vmatpush1.bf16.msra.mxu0 %v1594
      %1613 = vmatprep.subr.bf16.mxu0 0
      %1614 = vmatpush1.bf16.msra.mxu0 %v1593
      %1615 = vmatprep.subr.bf16.mxu0 0
      %1616 = vmatpush2.bf16.msra.mxu0 0
      %1617 = vmatprep.subr.bf16.mxu0 0
      %1618 = vmatpush2.bf16.msra.mxu0 0
      %1619 = vmatprep.subr.bf16.mxu0 0
      %1620 = vmatpush2.bf16.msra.mxu0 0
      %1621 = vmatprep.subr.bf16.mxu0 0
      %1622 = vmatpush2.bf16.msra.mxu0 0
      %1623 = vmatprep.subr.bf16.mxu0 0
      %1624 = vmatpush2.bf16.msra.mxu0 0
      %1625 = vmatprep.subr.bf16.mxu0 0
      %1626 = vmatpush2.bf16.msra.mxu0 0
      %1627 = vmatprep.subr.bf16.mxu0 0
      %1628 = vmatpush2.bf16.msra.mxu0 0
      %1629 = vmatprep.subr.bf16.mxu0 0
      %1630 = vmatpush2.bf16.msra.mxu0 0
      %1631 = vmatprep.mubr.bf16.mxu0 0
      %1632 = vmatmul.mubr.bf16.gmra.mxu0 %v971
      %v1633 = vpop.f32.mrf.mxu0
      %v1634 = vadd.f32 0.0, %v1633
      %v1635 = vpop.f32.mrf.mxu0
      %v1636 = vpop.f32.mrf.mxu0
      %v1637 = vpop.f32.mrf.mxu0
      %1638 = vdwg.mxu0
      %v1639 = vadd.f32 %v1583, %v1634
      %s1640 = scalar_lea.vmem %s146, 32
      %1641 = vst [vmem:[%s1640] sm:$0xff] %v1639
      %v1642 = vld [vmem:[%s535] sm:$0xff]
      %v1643 = vld [vmem:[%s535 + $0x8] sm:$0xff]
      %v1644 = vld [vmem:[%s535 + $0x10] sm:$0xff]
      %v1645 = vld [vmem:[%s535 + $0x18] sm:$0xff]
      %v1646 = vld [vmem:[%s535 + $0x20] sm:$0xf]
      %v1647 = vpack.c.bf16 %v1643, %v1642
      %v1648 = vpack.c.bf16 %v1645, %v1644
      %v1649 = vpack.c.bf16 %v1646, %v1646
      %v1650 = vld [vmem:[%s598] sm:$0xff]
      %v1651 = vld [vmem:[%s598 + $0x8] sm:$0xff]
      %v1652 = vld [vmem:[%s598 + $0x10] sm:$0xff]
      %v1653 = vld [vmem:[%s598 + $0x18] sm:$0xff]
      %v1654 = vld [vmem:[%s598 + $0x20] sm:$0xf]
      %v1655 = vpack.c.bf16 %v1651, %v1650
      %v1656 = vpack.c.bf16 %v1653, %v1652
      %v1657 = vpack.c.bf16 %v1654, %v1654
      %v1659 = vsel %vm872, %v1657, 0
      %1661 = vmatprep.subr.bf16.mxu0 0
      %1662 = vmatpush1.bf16.msra.mxu0 0
      %1663 = vmatprep.subr.bf16.mxu0 0
      %1664 = vmatpush1.bf16.msra.mxu0 0
      %1665 = vmatprep.subr.bf16.mxu0 0
      %1666 = vmatpush1.bf16.msra.mxu0 0
      %1667 = vmatprep.subr.bf16.mxu0 0
      %1668 = vmatpush1.bf16.msra.mxu0 0
      %1669 = vmatprep.subr.bf16.mxu0 0
      %1670 = vmatpush1.bf16.msra.mxu0 0
      %1671 = vmatprep.subr.bf16.mxu0 0
      %1672 = vmatpush1.bf16.msra.mxu0 %v1659
      %1673 = vmatprep.subr.bf16.mxu0 0
      %1674 = vmatpush1.bf16.msra.mxu0 %v1656
      %1675 = vmatprep.subr.bf16.mxu0 0
      %1676 = vmatpush1.bf16.msra.mxu0 %v1655
      %1677 = vmatprep.subr.bf16.mxu0 0
      %1678 = vmatpush2.bf16.msra.mxu0 0
      %1679 = vmatprep.subr.bf16.mxu0 0
      %1680 = vmatpush2.bf16.msra.mxu0 0
      %1681 = vmatprep.subr.bf16.mxu0 0
      %1682 = vmatpush2.bf16.msra.mxu0 0
      %1683 = vmatprep.subr.bf16.mxu0 0
      %1684 = vmatpush2.bf16.msra.mxu0 0
      %1685 = vmatprep.subr.bf16.mxu0 0
      %1686 = vmatpush2.bf16.msra.mxu0 0
      %1687 = vmatprep.subr.bf16.mxu0 0
      %1688 = vmatpush2.bf16.msra.mxu0 0
      %1689 = vmatprep.subr.bf16.mxu0 0
      %1690 = vmatpush2.bf16.msra.mxu0 0
      %1691 = vmatprep.subr.bf16.mxu0 0
      %1692 = vmatpush2.bf16.msra.mxu0 0
      %1693 = vmatprep.mubr.bf16.mxu0 0
      %1694 = vmatmul.mubr.bf16.gmra.mxu0 %v870
      %v1695 = vpop.f32.mrf.mxu0
      %v1696 = vadd.f32 0.0, %v1695
      %v1697 = vpop.f32.mrf.mxu0
      %v1698 = vpop.f32.mrf.mxu0
      %v1699 = vpop.f32.mrf.mxu0
      %1700 = vdwg.mxu0
      %v1702 = vsel %vm872, %v1649, 0
      %1704 = vmatprep.subr.bf16.mxu0 0
      %1705 = vmatpush1.bf16.msra.mxu0 0
      %1706 = vmatprep.subr.bf16.mxu0 0
      %1707 = vmatpush1.bf16.msra.mxu0 0
      %1708 = vmatprep.subr.bf16.mxu0 0
      %1709 = vmatpush1.bf16.msra.mxu0 0
      %1710 = vmatprep.subr.bf16.mxu0 0
      %1711 = vmatpush1.bf16.msra.mxu0 0
      %1712 = vmatprep.subr.bf16.mxu0 0
      %1713 = vmatpush1.bf16.msra.mxu0 0
      %1714 = vmatprep.subr.bf16.mxu0 0
      %1715 = vmatpush1.bf16.msra.mxu0 %v1702
      %1716 = vmatprep.subr.bf16.mxu0 0
      %1717 = vmatpush1.bf16.msra.mxu0 %v1648
      %1718 = vmatprep.subr.bf16.mxu0 0
      %1719 = vmatpush1.bf16.msra.mxu0 %v1647
      %1720 = vmatprep.subr.bf16.mxu0 0
      %1721 = vmatpush2.bf16.msra.mxu0 0
      %1722 = vmatprep.subr.bf16.mxu0 0
      %1723 = vmatpush2.bf16.msra.mxu0 0
      %1724 = vmatprep.subr.bf16.mxu0 0
      %1725 = vmatpush2.bf16.msra.mxu0 0
      %1726 = vmatprep.subr.bf16.mxu0 0
      %1727 = vmatpush2.bf16.msra.mxu0 0
      %1728 = vmatprep.subr.bf16.mxu0 0
      %1729 = vmatpush2.bf16.msra.mxu0 0
      %1730 = vmatprep.subr.bf16.mxu0 0
      %1731 = vmatpush2.bf16.msra.mxu0 0
      %1732 = vmatprep.subr.bf16.mxu0 0
      %1733 = vmatpush2.bf16.msra.mxu0 0
      %1734 = vmatprep.subr.bf16.mxu0 0
      %1735 = vmatpush2.bf16.msra.mxu0 0
      %1736 = vmatprep.mubr.bf16.mxu0 0
      %1737 = vmatmul.mubr.bf16.gmra.mxu0 %v917
      %v1738 = vpop.f32.mrf.mxu0
      %v1739 = vadd.f32 %v1696, %v1738
      %v1740 = vpop.f32.mrf.mxu0
      %v1741 = vpop.f32.mrf.mxu0
      %v1742 = vpop.f32.mrf.mxu0
      %1743 = vdwg.mxu0
      %v1744 = vld [vmem:[%s661] sm:$0xff]
      %v1745 = vld [vmem:[%s661 + $0x8] sm:$0xff]
      %v1746 = vld [vmem:[%s661 + $0x10] sm:$0xff]
      %v1747 = vld [vmem:[%s661 + $0x18] sm:$0xff]
      %v1748 = vld [vmem:[%s661 + $0x20] sm:$0xf]
      %v1749 = vpack.c.bf16 %v1745, %v1744
      %v1750 = vpack.c.bf16 %v1747, %v1746
      %v1751 = vpack.c.bf16 %v1748, %v1748
      %v1753 = vsel %vm872, %v1751, 0
      %1755 = vmatprep.subr.bf16.mxu0 0
      %1756 = vmatpush1.bf16.msra.mxu0 0
      %1757 = vmatprep.subr.bf16.mxu0 0
      %1758 = vmatpush1.bf16.msra.mxu0 0
      %1759 = vmatprep.subr.bf16.mxu0 0
      %1760 = vmatpush1.bf16.msra.mxu0 0
      %1761 = vmatprep.subr.bf16.mxu0 0
      %1762 = vmatpush1.bf16.msra.mxu0 0
      %1763 = vmatprep.subr.bf16.mxu0 0
      %1764 = vmatpush1.bf16.msra.mxu0 0
      %1765 = vmatprep.subr.bf16.mxu0 0
      %1766 = vmatpush1.bf16.msra.mxu0 %v1753
      %1767 = vmatprep.subr.bf16.mxu0 0
      %1768 = vmatpush1.bf16.msra.mxu0 %v1750
      %1769 = vmatprep.subr.bf16.mxu0 0
      %1770 = vmatpush1.bf16.msra.mxu0 %v1749
      %1771 = vmatprep.subr.bf16.mxu0 0
      %1772 = vmatpush2.bf16.msra.mxu0 0
      %1773 = vmatprep.subr.bf16.mxu0 0
      %1774 = vmatpush2.bf16.msra.mxu0 0
      %1775 = vmatprep.subr.bf16.mxu0 0
      %1776 = vmatpush2.bf16.msra.mxu0 0
      %1777 = vmatprep.subr.bf16.mxu0 0
      %1778 = vmatpush2.bf16.msra.mxu0 0
      %1779 = vmatprep.subr.bf16.mxu0 0
      %1780 = vmatpush2.bf16.msra.mxu0 0
      %1781 = vmatprep.subr.bf16.mxu0 0
      %1782 = vmatpush2.bf16.msra.mxu0 0
      %1783 = vmatprep.subr.bf16.mxu0 0
      %1784 = vmatpush2.bf16.msra.mxu0 0
      %1785 = vmatprep.subr.bf16.mxu0 0
      %1786 = vmatpush2.bf16.msra.mxu0 0
      %1787 = vmatprep.mubr.bf16.mxu0 0
      %1788 = vmatmul.mubr.bf16.gmra.mxu0 %v971
      %v1789 = vpop.f32.mrf.mxu0
      %v1790 = vadd.f32 0.0, %v1789
      %v1791 = vpop.f32.mrf.mxu0
      %v1792 = vpop.f32.mrf.mxu0
      %v1793 = vpop.f32.mrf.mxu0
      %1794 = vdwg.mxu0
      %v1795 = vadd.f32 %v1739, %v1790
      %s1796 = scalar_lea.vmem %s146, 40
      %1797 = vst [vmem:[%s1796] sm:$0xff] %v1795
      %v1798 = vld [vmem:[%s598] sm:$0xff]
      %v1799 = vld [vmem:[%s598 + $0x8] sm:$0xff]
      %v1800 = vld [vmem:[%s598 + $0x10] sm:$0xff]
      %v1801 = vld [vmem:[%s598 + $0x18] sm:$0xff]
      %v1802 = vld [vmem:[%s598 + $0x20] sm:$0xf]
      %v1803 = vpack.c.bf16 %v1799, %v1798
      %v1804 = vpack.c.bf16 %v1801, %v1800
      %v1805 = vpack.c.bf16 %v1802, %v1802
      %v1806 = vld [vmem:[%s661] sm:$0xff]
      %v1807 = vld [vmem:[%s661 + $0x8] sm:$0xff]
      %v1808 = vld [vmem:[%s661 + $0x10] sm:$0xff]
      %v1809 = vld [vmem:[%s661 + $0x18] sm:$0xff]
      %v1810 = vld [vmem:[%s661 + $0x20] sm:$0xf]
      %v1811 = vpack.c.bf16 %v1807, %v1806
      %v1812 = vpack.c.bf16 %v1809, %v1808
      %v1813 = vpack.c.bf16 %v1810, %v1810
      %v1815 = vsel %vm872, %v1813, 0
      %1817 = vmatprep.subr.bf16.mxu0 0
      %1818 = vmatpush1.bf16.msra.mxu0 0
      %1819 = vmatprep.subr.bf16.mxu0 0
      %1820 = vmatpush1.bf16.msra.mxu0 0
      %1821 = vmatprep.subr.bf16.mxu0 0
      %1822 = vmatpush1.bf16.msra.mxu0 0
      %1823 = vmatprep.subr.bf16.mxu0 0
      %1824 = vmatpush1.bf16.msra.mxu0 0
      %1825 = vmatprep.subr.bf16.mxu0 0
      %1826 = vmatpush1.bf16.msra.mxu0 0
      %1827 = vmatprep.subr.bf16.mxu0 0
      %1828 = vmatpush1.bf16.msra.mxu0 %v1815
      %1829 = vmatprep.subr.bf16.mxu0 0
      %1830 = vmatpush1.bf16.msra.mxu0 %v1812
      %1831 = vmatprep.subr.bf16.mxu0 0
      %1832 = vmatpush1.bf16.msra.mxu0 %v1811
      %1833 = vmatprep.subr.bf16.mxu0 0
      %1834 = vmatpush2.bf16.msra.mxu0 0
      %1835 = vmatprep.subr.bf16.mxu0 0
      %1836 = vmatpush2.bf16.msra.mxu0 0
      %1837 = vmatprep.subr.bf16.mxu0 0
      %1838 = vmatpush2.bf16.msra.mxu0 0
      %1839 = vmatprep.subr.bf16.mxu0 0
      %1840 = vmatpush2.bf16.msra.mxu0 0
      %1841 = vmatprep.subr.bf16.mxu0 0
      %1842 = vmatpush2.bf16.msra.mxu0 0
      %1843 = vmatprep.subr.bf16.mxu0 0
      %1844 = vmatpush2.bf16.msra.mxu0 0
      %1845 = vmatprep.subr.bf16.mxu0 0
      %1846 = vmatpush2.bf16.msra.mxu0 0
      %1847 = vmatprep.subr.bf16.mxu0 0
      %1848 = vmatpush2.bf16.msra.mxu0 0
      %1849 = vmatprep.mubr.bf16.mxu0 0
      %1850 = vmatmul.mubr.bf16.gmra.mxu0 %v870
      %v1851 = vpop.f32.mrf.mxu0
      %v1852 = vadd.f32 0.0, %v1851
      %v1853 = vpop.f32.mrf.mxu0
      %v1854 = vpop.f32.mrf.mxu0
      %v1855 = vpop.f32.mrf.mxu0
      %1856 = vdwg.mxu0
      %v1858 = vsel %vm872, %v1805, 0
      %1860 = vmatprep.subr.bf16.mxu0 0
      %1861 = vmatpush1.bf16.msra.mxu0 0
      %1862 = vmatprep.subr.bf16.mxu0 0
      %1863 = vmatpush1.bf16.msra.mxu0 0
      %1864 = vmatprep.subr.bf16.mxu0 0
      %1865 = vmatpush1.bf16.msra.mxu0 0
      %1866 = vmatprep.subr.bf16.mxu0 0
      %1867 = vmatpush1.bf16.msra.mxu0 0
      %1868 = vmatprep.subr.bf16.mxu0 0
      %1869 = vmatpush1.bf16.msra.mxu0 0
      %1870 = vmatprep.subr.bf16.mxu0 0
      %1871 = vmatpush1.bf16.msra.mxu0 %v1858
      %1872 = vmatprep.subr.bf16.mxu0 0
      %1873 = vmatpush1.bf16.msra.mxu0 %v1804
      %1874 = vmatprep.subr.bf16.mxu0 0
      %1875 = vmatpush1.bf16.msra.mxu0 %v1803
      %1876 = vmatprep.subr.bf16.mxu0 0
      %1877 = vmatpush2.bf16.msra.mxu0 0
      %1878 = vmatprep.subr.bf16.mxu0 0
      %1879 = vmatpush2.bf16.msra.mxu0 0
      %1880 = vmatprep.subr.bf16.mxu0 0
      %1881 = vmatpush2.bf16.msra.mxu0 0
      %1882 = vmatprep.subr.bf16.mxu0 0
      %1883 = vmatpush2.bf16.msra.mxu0 0
      %1884 = vmatprep.subr.bf16.mxu0 0
      %1885 = vmatpush2.bf16.msra.mxu0 0
      %1886 = vmatprep.subr.bf16.mxu0 0
      %1887 = vmatpush2.bf16.msra.mxu0 0
      %1888 = vmatprep.subr.bf16.mxu0 0
      %1889 = vmatpush2.bf16.msra.mxu0 0
      %1890 = vmatprep.subr.bf16.mxu0 0
      %1891 = vmatpush2.bf16.msra.mxu0 0
      %1892 = vmatprep.mubr.bf16.mxu0 0
      %1893 = vmatmul.mubr.bf16.gmra.mxu0 %v917
      %v1894 = vpop.f32.mrf.mxu0
      %v1895 = vadd.f32 %v1852, %v1894
      %v1896 = vpop.f32.mrf.mxu0
      %v1897 = vpop.f32.mrf.mxu0
      %v1898 = vpop.f32.mrf.mxu0
      %1899 = vdwg.mxu0
      %v1900 = vld [vmem:[%s724] sm:$0xff]
      %v1901 = vld [vmem:[%s724 + $0x8] sm:$0xff]
      %v1902 = vld [vmem:[%s724 + $0x10] sm:$0xff]
      %v1903 = vld [vmem:[%s724 + $0x18] sm:$0xff]
      %v1904 = vld [vmem:[%s724 + $0x20] sm:$0xf]
      %v1905 = vpack.c.bf16 %v1901, %v1900
      %v1906 = vpack.c.bf16 %v1903, %v1902
      %v1907 = vpack.c.bf16 %v1904, %v1904
      %v1909 = vsel %vm872, %v1907, 0
      %1911 = vmatprep.subr.bf16.mxu0 0
      %1912 = vmatpush1.bf16.msra.mxu0 0
      %1913 = vmatprep.subr.bf16.mxu0 0
      %1914 = vmatpush1.bf16.msra.mxu0 0
      %1915 = vmatprep.subr.bf16.mxu0 0
      %1916 = vmatpush1.bf16.msra.mxu0 0
      %1917 = vmatprep.subr.bf16.mxu0 0
      %1918 = vmatpush1.bf16.msra.mxu0 0
      %1919 = vmatprep.subr.bf16.mxu0 0
      %1920 = vmatpush1.bf16.msra.mxu0 0
      %1921 = vmatprep.subr.bf16.mxu0 0
      %1922 = vmatpush1.bf16.msra.mxu0 %v1909
      %1923 = vmatprep.subr.bf16.mxu0 0
      %1924 = vmatpush1.bf16.msra.mxu0 %v1906
      %1925 = vmatprep.subr.bf16.mxu0 0
      %1926 = vmatpush1.bf16.msra.mxu0 %v1905
      %1927 = vmatprep.subr.bf16.mxu0 0
      %1928 = vmatpush2.bf16.msra.mxu0 0
      %1929 = vmatprep.subr.bf16.mxu0 0
      %1930 = vmatpush2.bf16.msra.mxu0 0
      %1931 = vmatprep.subr.bf16.mxu0 0
      %1932 = vmatpush2.bf16.msra.mxu0 0
      %1933 = vmatprep.subr.bf16.mxu0 0
      %1934 = vmatpush2.bf16.msra.mxu0 0
      %1935 = vmatprep.subr.bf16.mxu0 0
      %1936 = vmatpush2.bf16.msra.mxu0 0
      %1937 = vmatprep.subr.bf16.mxu0 0
      %1938 = vmatpush2.bf16.msra.mxu0 0
      %1939 = vmatprep.subr.bf16.mxu0 0
      %1940 = vmatpush2.bf16.msra.mxu0 0
      %1941 = vmatprep.subr.bf16.mxu0 0
      %1942 = vmatpush2.bf16.msra.mxu0 0
      %1943 = vmatprep.mubr.bf16.mxu0 0
      %1944 = vmatmul.mubr.bf16.gmra.mxu0 %v971
      %v1945 = vpop.f32.mrf.mxu0
      %v1946 = vadd.f32 0.0, %v1945
      %v1947 = vpop.f32.mrf.mxu0
      %v1948 = vpop.f32.mrf.mxu0
      %v1949 = vpop.f32.mrf.mxu0
      %1950 = vdwg.mxu0
      %v1951 = vadd.f32 %v1895, %v1946
      %s1952 = scalar_lea.vmem %s146, 48
      %1953 = vst [vmem:[%s1952] sm:$0xff] %v1951
      %v1954 = vld [vmem:[%s661] sm:$0xff]
      %v1955 = vld [vmem:[%s661 + $0x8] sm:$0xff]
      %v1956 = vld [vmem:[%s661 + $0x10] sm:$0xff]
      %v1957 = vld [vmem:[%s661 + $0x18] sm:$0xff]
      %v1958 = vld [vmem:[%s661 + $0x20] sm:$0xf]
      %v1959 = vpack.c.bf16 %v1955, %v1954
      %v1960 = vpack.c.bf16 %v1957, %v1956
      %v1961 = vpack.c.bf16 %v1958, %v1958
      %v1962 = vld [vmem:[%s724] sm:$0xff]
      %v1963 = vld [vmem:[%s724 + $0x8] sm:$0xff]
      %v1964 = vld [vmem:[%s724 + $0x10] sm:$0xff]
      %v1965 = vld [vmem:[%s724 + $0x18] sm:$0xff]
      %v1966 = vld [vmem:[%s724 + $0x20] sm:$0xf]
      %v1967 = vpack.c.bf16 %v1963, %v1962
      %v1968 = vpack.c.bf16 %v1965, %v1964
      %v1969 = vpack.c.bf16 %v1966, %v1966
      %v1971 = vsel %vm872, %v1969, 0
      %1973 = vmatprep.subr.bf16.mxu0 0
      %1974 = vmatpush1.bf16.msra.mxu0 0
      %1975 = vmatprep.subr.bf16.mxu0 0
      %1976 = vmatpush1.bf16.msra.mxu0 0
      %1977 = vmatprep.subr.bf16.mxu0 0
      %1978 = vmatpush1.bf16.msra.mxu0 0
      %1979 = vmatprep.subr.bf16.mxu0 0
      %1980 = vmatpush1.bf16.msra.mxu0 0
      %1981 = vmatprep.subr.bf16.mxu0 0
      %1982 = vmatpush1.bf16.msra.mxu0 0
      %1983 = vmatprep.subr.bf16.mxu0 0
      %1984 = vmatpush1.bf16.msra.mxu0 %v1971
      %1985 = vmatprep.subr.bf16.mxu0 0
      %1986 = vmatpush1.bf16.msra.mxu0 %v1968
      %1987 = vmatprep.subr.bf16.mxu0 0
      %1988 = vmatpush1.bf16.msra.mxu0 %v1967
      %1989 = vmatprep.subr.bf16.mxu0 0
      %1990 = vmatpush2.bf16.msra.mxu0 0
      %1991 = vmatprep.subr.bf16.mxu0 0
      %1992 = vmatpush2.bf16.msra.mxu0 0
      %1993 = vmatprep.subr.bf16.mxu0 0
      %1994 = vmatpush2.bf16.msra.mxu0 0
      %1995 = vmatprep.subr.bf16.mxu0 0
      %1996 = vmatpush2.bf16.msra.mxu0 0
      %1997 = vmatprep.subr.bf16.mxu0 0
      %1998 = vmatpush2.bf16.msra.mxu0 0
      %1999 = vmatprep.subr.bf16.mxu0 0
      %2000 = vmatpush2.bf16.msra.mxu0 0
      %2001 = vmatprep.subr.bf16.mxu0 0
      %2002 = vmatpush2.bf16.msra.mxu0 0
      %2003 = vmatprep.subr.bf16.mxu0 0
      %2004 = vmatpush2.bf16.msra.mxu0 0
      %2005 = vmatprep.mubr.bf16.mxu0 0
      %2006 = vmatmul.mubr.bf16.gmra.mxu0 %v870
      %v2007 = vpop.f32.mrf.mxu0
      %v2008 = vadd.f32 0.0, %v2007
      %v2009 = vpop.f32.mrf.mxu0
      %v2010 = vpop.f32.mrf.mxu0
      %v2011 = vpop.f32.mrf.mxu0
      %2012 = vdwg.mxu0
      %v2014 = vsel %vm872, %v1961, 0
      %2016 = vmatprep.subr.bf16.mxu0 0
      %2017 = vmatpush1.bf16.msra.mxu0 0
      %2018 = vmatprep.subr.bf16.mxu0 0
      %2019 = vmatpush1.bf16.msra.mxu0 0
      %2020 = vmatprep.subr.bf16.mxu0 0
      %2021 = vmatpush1.bf16.msra.mxu0 0
      %2022 = vmatprep.subr.bf16.mxu0 0
      %2023 = vmatpush1.bf16.msra.mxu0 0
      %2024 = vmatprep.subr.bf16.mxu0 0
      %2025 = vmatpush1.bf16.msra.mxu0 0
      %2026 = vmatprep.subr.bf16.mxu0 0
      %2027 = vmatpush1.bf16.msra.mxu0 %v2014
      %2028 = vmatprep.subr.bf16.mxu0 0
      %2029 = vmatpush1.bf16.msra.mxu0 %v1960
      %2030 = vmatprep.subr.bf16.mxu0 0
      %2031 = vmatpush1.bf16.msra.mxu0 %v1959
      %2032 = vmatprep.subr.bf16.mxu0 0
      %2033 = vmatpush2.bf16.msra.mxu0 0
      %2034 = vmatprep.subr.bf16.mxu0 0
      %2035 = vmatpush2.bf16.msra.mxu0 0
      %2036 = vmatprep.subr.bf16.mxu0 0
      %2037 = vmatpush2.bf16.msra.mxu0 0
      %2038 = vmatprep.subr.bf16.mxu0 0
      %2039 = vmatpush2.bf16.msra.mxu0 0
      %2040 = vmatprep.subr.bf16.mxu0 0
      %2041 = vmatpush2.bf16.msra.mxu0 0
      %2042 = vmatprep.subr.bf16.mxu0 0
      %2043 = vmatpush2.bf16.msra.mxu0 0
      %2044 = vmatprep.subr.bf16.mxu0 0
      %2045 = vmatpush2.bf16.msra.mxu0 0
      %2046 = vmatprep.subr.bf16.mxu0 0
      %2047 = vmatpush2.bf16.msra.mxu0 0
      %2048 = vmatprep.mubr.bf16.mxu0 0
      %2049 = vmatmul.mubr.bf16.gmra.mxu0 %v917
      %v2050 = vpop.f32.mrf.mxu0
      %v2051 = vadd.f32 %v2008, %v2050
      %v2052 = vpop.f32.mrf.mxu0
      %v2053 = vpop.f32.mrf.mxu0
      %v2054 = vpop.f32.mrf.mxu0
      %2055 = vdwg.mxu0
      %v2056 = vld [vmem:[%s787] sm:$0xff]
      %v2057 = vld [vmem:[%s787 + $0x8] sm:$0xff]
      %v2058 = vld [vmem:[%s787 + $0x10] sm:$0xff]
      %v2059 = vld [vmem:[%s787 + $0x18] sm:$0xff]
      %v2060 = vld [vmem:[%s787 + $0x20] sm:$0xf]
      %v2061 = vpack.c.bf16 %v2057, %v2056
      %v2062 = vpack.c.bf16 %v2059, %v2058
      %v2063 = vpack.c.bf16 %v2060, %v2060
      %v2065 = vsel %vm872, %v2063, 0
      %2067 = vmatprep.subr.bf16.mxu0 0
      %2068 = vmatpush1.bf16.msra.mxu0 0
      %2069 = vmatprep.subr.bf16.mxu0 0
      %2070 = vmatpush1.bf16.msra.mxu0 0
      %2071 = vmatprep.subr.bf16.mxu0 0
      %2072 = vmatpush1.bf16.msra.mxu0 0
      %2073 = vmatprep.subr.bf16.mxu0 0
      %2074 = vmatpush1.bf16.msra.mxu0 0
      %2075 = vmatprep.subr.bf16.mxu0 0
      %2076 = vmatpush1.bf16.msra.mxu0 0
      %2077 = vmatprep.subr.bf16.mxu0 0
      %2078 = vmatpush1.bf16.msra.mxu0 %v2065
      %2079 = vmatprep.subr.bf16.mxu0 0
      %2080 = vmatpush1.bf16.msra.mxu0 %v2062
      %2081 = vmatprep.subr.bf16.mxu0 0
      %2082 = vmatpush1.bf16.msra.mxu0 %v2061
      %2083 = vmatprep.subr.bf16.mxu0 0
      %2084 = vmatpush2.bf16.msra.mxu0 0
      %2085 = vmatprep.subr.bf16.mxu0 0
      %2086 = vmatpush2.bf16.msra.mxu0 0
      %2087 = vmatprep.subr.bf16.mxu0 0
      %2088 = vmatpush2.bf16.msra.mxu0 0
      %2089 = vmatprep.subr.bf16.mxu0 0
      %2090 = vmatpush2.bf16.msra.mxu0 0
      %2091 = vmatprep.subr.bf16.mxu0 0
      %2092 = vmatpush2.bf16.msra.mxu0 0
      %2093 = vmatprep.subr.bf16.mxu0 0
      %2094 = vmatpush2.bf16.msra.mxu0 0
      %2095 = vmatprep.subr.bf16.mxu0 0
      %2096 = vmatpush2.bf16.msra.mxu0 0
      %2097 = vmatprep.subr.bf16.mxu0 0
      %2098 = vmatpush2.bf16.msra.mxu0 0
      %2099 = vmatprep.mubr.bf16.mxu0 0
      %2100 = vmatmul.mubr.bf16.gmra.mxu0 %v971
      %v2101 = vpop.f32.mrf.mxu0
      %v2102 = vadd.f32 0.0, %v2101
      %v2103 = vpop.f32.mrf.mxu0
      %v2104 = vpop.f32.mrf.mxu0
      %v2105 = vpop.f32.mrf.mxu0
      %2106 = vdwg.mxu0
      %v2107 = vadd.f32 %v2051, %v2102
      %s2108 = scalar_lea.vmem %s146, 56
      %2109 = vst [vmem:[%s2108] sm:$0xff] %v2107
      %v2110 = vld [vmem:[%s146] sm:$0xff]
      %v2111 = vld [vmem:[%s146 + $0x8] sm:$0xff]
      %v2112 = vld [vmem:[%s146 + $0x10] sm:$0xff]
      %v2113 = vld [vmem:[%s146 + $0x18] sm:$0xff]
      %v2114 = vld [vmem:[%s146 + $0x20] sm:$0xff]
      %v2115 = vld [vmem:[%s146 + $0x28] sm:$0xff]
      %v2116 = vld [vmem:[%s146 + $0x30] sm:$0xff]
      %v2117 = vld [vmem:[%s146 + $0x38] sm:$0xff]
      %v2118 = vld [vmem:[%s2] sm:$0xff]
      %2120 = vset.pattern.permute.xlu0 0
      %2121 = vperm.xlu0 %2120, %v2118
      %v2122 = vpop.permute.xlu0 %2121
      %v2124 = vadd.f32 %v2110, %v2122
      %v2125 = vadd.f32 %v2111, %v2122
      %v2126 = vadd.f32 %v2112, %v2122
      %v2127 = vadd.f32 %v2113, %v2122
      %v2128 = vadd.f32 %v2114, %v2122
      %v2129 = vadd.f32 %v2115, %v2122
      %v2130 = vadd.f32 %v2116, %v2122
      %v2131 = vadd.f32 %v2117, %v2122
      %v2132 = vmul.f32 %v2124, 0.70710677
      %v2133 = vmul.f32 %v2125, 0.70710677
      %v2134 = vmul.f32 %v2126, 0.70710677
      %v2135 = vmul.f32 %v2127, 0.70710677
      %v2136 = vmul.f32 %v2128, 0.70710677
      %v2137 = vmul.f32 %v2129, 0.70710677
      %v2138 = vmul.f32 %v2130, 0.70710677
      %v2139 = vmul.f32 %v2131, 0.70710677
      %vm2140 = vcmp.ge.f32.partialorder %v2132, 0.0
      %vm2141 = vcmp.ge.f32.partialorder %v2133, 0.0
      %vm2142 = vcmp.ge.f32.partialorder %v2134, 0.0
      %vm2143 = vcmp.ge.f32.partialorder %v2135, 0.0
      %vm2144 = vcmp.ge.f32.partialorder %v2136, 0.0
      %vm2145 = vcmp.ge.f32.partialorder %v2137, 0.0
      %vm2146 = vcmp.ge.f32.partialorder %v2138, 0.0
      %vm2147 = vcmp.ge.f32.partialorder %v2139, 0.0
      %v2148 = vsel %vm2140, 1.0, -1.0
      %v2149 = vsel %vm2141, 1.0, -1.0
      %v2150 = vsel %vm2142, 1.0, -1.0
      %v2151 = vsel %vm2143, 1.0, -1.0
      %v2152 = vsel %vm2144, 1.0, -1.0
      %v2153 = vsel %vm2145, 1.0, -1.0
      %v2154 = vsel %vm2146, 1.0, -1.0
      %v2155 = vsel %vm2147, 1.0, -1.0
      %v2156 = vand.u32 2147483647, %v2132
      %v2157 = vand.u32 2147483647, %v2133
      %v2158 = vand.u32 2147483647, %v2134
      %v2159 = vand.u32 2147483647, %v2135
      %v2160 = vand.u32 2147483647, %v2136
      %v2161 = vand.u32 2147483647, %v2137
      %v2162 = vand.u32 2147483647, %v2138
      %v2163 = vand.u32 2147483647, %v2139
      %v2164 = vmul.f32 %v2156, 0.3275911
      %v2165 = vmul.f32 %v2157, 0.3275911
      %v2166 = vmul.f32 %v2158, 0.3275911
      %v2167 = vmul.f32 %v2159, 0.3275911
      %v2168 = vmul.f32 %v2160, 0.3275911
      %v2169 = vmul.f32 %v2161, 0.3275911
      %v2170 = vmul.f32 %v2162, 0.3275911
      %v2171 = vmul.f32 %v2163, 0.3275911
      %v2172 = vadd.f32 %v2164, 1.0
      %v2173 = vadd.f32 %v2165, 1.0
      %v2174 = vadd.f32 %v2166, 1.0
      %v2175 = vadd.f32 %v2167, 1.0
      %v2176 = vadd.f32 %v2168, 1.0
      %v2177 = vadd.f32 %v2169, 1.0
      %v2178 = vadd.f32 %v2170, 1.0
      %v2179 = vadd.f32 %v2171, 1.0
      %v2180 = vrcp.pop %v2172
      %v2181 = vrcp.pop %v2173
      %v2182 = vrcp.pop %v2174
      %v2183 = vrcp.pop %v2175
      %v2184 = vrcp.pop %v2176
      %v2185 = vrcp.pop %v2177
      %v2186 = vrcp.pop %v2178
      %v2187 = vrcp.pop %v2179
      %v2188 = vmul.f32 %v2172, %v2180
      %v2189 = vmul.f32 %v2173, %v2181
      %v2190 = vmul.f32 %v2174, %v2182
      %v2191 = vmul.f32 %v2175, %v2183
      %v2192 = vmul.f32 %v2176, %v2184
      %v2193 = vmul.f32 %v2177, %v2185
      %v2194 = vmul.f32 %v2178, %v2186
      %v2195 = vmul.f32 %v2179, %v2187
      %v2196 = vsub.f32 2.0, %v2188
      %v2197 = vsub.f32 2.0, %v2189
      %v2198 = vsub.f32 2.0, %v2190
      %v2199 = vsub.f32 2.0, %v2191
      %v2200 = vsub.f32 2.0, %v2192
      %v2201 = vsub.f32 2.0, %v2193
      %v2202 = vsub.f32 2.0, %v2194
      %v2203 = vsub.f32 2.0, %v2195
      %v2204 = vmul.f32 %v2180, %v2196
      %v2205 = vmul.f32 %v2181, %v2197
      %v2206 = vmul.f32 %v2182, %v2198
      %v2207 = vmul.f32 %v2183, %v2199
      %v2208 = vmul.f32 %v2184, %v2200
      %v2209 = vmul.f32 %v2185, %v2201
      %v2210 = vmul.f32 %v2186, %v2202
      %v2211 = vmul.f32 %v2187, %v2203
      %v2212 = vmul.f32 %v2204, 1.0614054
      %v2213 = vmul.f32 %v2205, 1.0614054
      %v2214 = vmul.f32 %v2206, 1.0614054
      %v2215 = vmul.f32 %v2207, 1.0614054
      %v2216 = vmul.f32 %v2208, 1.0614054
      %v2217 = vmul.f32 %v2209, 1.0614054
      %v2218 = vmul.f32 %v2210, 1.0614054
      %v2219 = vmul.f32 %v2211, 1.0614054
      %v2220 = vadd.f32 %v2212, -1.4531521
      %v2221 = vadd.f32 %v2213, -1.4531521
      %v2222 = vadd.f32 %v2214, -1.4531521
      %v2223 = vadd.f32 %v2215, -1.4531521
      %v2224 = vadd.f32 %v2216, -1.4531521
      %v2225 = vadd.f32 %v2217, -1.4531521
      %v2226 = vadd.f32 %v2218, -1.4531521
      %v2227 = vadd.f32 %v2219, -1.4531521
      %v2228 = vmul.f32 %v2220, %v2204
      %v2229 = vmul.f32 %v2221, %v2205
      %v2230 = vmul.f32 %v2222, %v2206
      %v2231 = vmul.f32 %v2223, %v2207
      %v2232 = vmul.f32 %v2224, %v2208
      %v2233 = vmul.f32 %v2225, %v2209
      %v2234 = vmul.f32 %v2226, %v2210
      %v2235 = vmul.f32 %v2227, %v2211
      %v2236 = vadd.f32 %v2228, 1.4214138
      %v2237 = vadd.f32 %v2229, 1.4214138
      %v2238 = vadd.f32 %v2230, 1.4214138
      %v2239 = vadd.f32 %v2231, 1.4214138
      %v2240 = vadd.f32 %v2232, 1.4214138
      %v2241 = vadd.f32 %v2233, 1.4214138
      %v2242 = vadd.f32 %v2234, 1.4214138
      %v2243 = vadd.f32 %v2235, 1.4214138
      %v2244 = vmul.f32 %v2236, %v2204
      %v2245 = vmul.f32 %v2237, %v2205
      %v2246 = vmul.f32 %v2238, %v2206
      %v2247 = vmul.f32 %v2239, %v2207
      %v2248 = vmul.f32 %v2240, %v2208
      %v2249 = vmul.f32 %v2241, %v2209
      %v2250 = vmul.f32 %v2242, %v2210
      %v2251 = vmul.f32 %v2243, %v2211
      %v2252 = vadd.f32 %v2244, -0.28449672
      %v2253 = vadd.f32 %v2245, -0.28449672
      %v2254 = vadd.f32 %v2246, -0.28449672
      %v2255 = vadd.f32 %v2247, -0.28449672
      %v2256 = vadd.f32 %v2248, -0.28449672
      %v2257 = vadd.f32 %v2249, -0.28449672
      %v2258 = vadd.f32 %v2250, -0.28449672
      %v2259 = vadd.f32 %v2251, -0.28449672
      %v2260 = vmul.f32 %v2252, %v2204
      %v2261 = vmul.f32 %v2253, %v2205
      %v2262 = vmul.f32 %v2254, %v2206
      %v2263 = vmul.f32 %v2255, %v2207
      %v2264 = vmul.f32 %v2256, %v2208
      %v2265 = vmul.f32 %v2257, %v2209
      %v2266 = vmul.f32 %v2258, %v2210
      %v2267 = vmul.f32 %v2259, %v2211
      %v2268 = vadd.f32 %v2260, 0.2548296
      %v2269 = vadd.f32 %v2261, 0.2548296
      %v2270 = vadd.f32 %v2262, 0.2548296
      %v2271 = vadd.f32 %v2263, 0.2548296
      %v2272 = vadd.f32 %v2264, 0.2548296
      %v2273 = vadd.f32 %v2265, 0.2548296
      %v2274 = vadd.f32 %v2266, 0.2548296
      %v2275 = vadd.f32 %v2267, 0.2548296
      %v2276 = vmul.f32 %v2268, %v2204
      %v2277 = vmul.f32 %v2269, %v2205
      %v2278 = vmul.f32 %v2270, %v2206
      %v2279 = vmul.f32 %v2271, %v2207
      %v2280 = vmul.f32 %v2272, %v2208
      %v2281 = vmul.f32 %v2273, %v2209
      %v2282 = vmul.f32 %v2274, %v2210
      %v2283 = vmul.f32 %v2275, %v2211
      %v2284 = vsub.f32 0.0, %v2156
      %v2285 = vsub.f32 0.0, %v2157
      %v2286 = vsub.f32 0.0, %v2158
      %v2287 = vsub.f32 0.0, %v2159
      %v2288 = vsub.f32 0.0, %v2160
      %v2289 = vsub.f32 0.0, %v2161
      %v2290 = vsub.f32 0.0, %v2162
      %v2291 = vsub.f32 0.0, %v2163
      %v2292 = vmul.f32 %v2284, %v2156
      %v2293 = vmul.f32 %v2285, %v2157
      %v2294 = vmul.f32 %v2286, %v2158
      %v2295 = vmul.f32 %v2287, %v2159
      %v2296 = vmul.f32 %v2288, %v2160
      %v2297 = vmul.f32 %v2289, %v2161
      %v2298 = vmul.f32 %v2290, %v2162
      %v2299 = vmul.f32 %v2291, %v2163
      %v2300 = vmul.f32 %v2292, 1.442695
      %v2301 = vpow.pop %v2300
      %v2302 = vmul.f32 %v2293, 1.442695
      %v2303 = vpow.pop %v2302
      %v2304 = vmul.f32 %v2294, 1.442695
      %v2305 = vpow.pop %v2304
      %v2306 = vmul.f32 %v2295, 1.442695
      %v2307 = vpow.pop %v2306
      %v2308 = vmul.f32 %v2296, 1.442695
      %v2309 = vpow.pop %v2308
      %v2310 = vmul.f32 %v2297, 1.442695
      %v2311 = vpow.pop %v2310
      %v2312 = vmul.f32 %v2298, 1.442695
      %v2313 = vpow.pop %v2312
      %v2314 = vmul.f32 %v2299, 1.442695
      %v2315 = vpow.pop %v2314
      %v2316 = vmul.f32 %v2276, %v2301
      %v2317 = vmul.f32 %v2277, %v2303
      %v2318 = vmul.f32 %v2278, %v2305
      %v2319 = vmul.f32 %v2279, %v2307
      %v2320 = vmul.f32 %v2280, %v2309
      %v2321 = vmul.f32 %v2281, %v2311
      %v2322 = vmul.f32 %v2282, %v2313
      %v2323 = vmul.f32 %v2283, %v2315
      %v2324 = vsub.f32 1.0, %v2316
      %v2325 = vsub.f32 1.0, %v2317
      %v2326 = vsub.f32 1.0, %v2318
      %v2327 = vsub.f32 1.0, %v2319
      %v2328 = vsub.f32 1.0, %v2320
      %v2329 = vsub.f32 1.0, %v2321
      %v2330 = vsub.f32 1.0, %v2322
      %v2331 = vsub.f32 1.0, %v2323
      %v2332 = vmul.f32 %v2148, %v2324
      %v2333 = vmul.f32 %v2149, %v2325
      %v2334 = vmul.f32 %v2150, %v2326
      %v2335 = vmul.f32 %v2151, %v2327
      %v2336 = vmul.f32 %v2152, %v2328
      %v2337 = vmul.f32 %v2153, %v2329
      %v2338 = vmul.f32 %v2154, %v2330
      %v2339 = vmul.f32 %v2155, %v2331
      %v2340 = vmul.f32 %v2124, 0.5
      %v2341 = vmul.f32 %v2125, 0.5
      %v2342 = vmul.f32 %v2126, 0.5
      %v2343 = vmul.f32 %v2127, 0.5
      %v2344 = vmul.f32 %v2128, 0.5
      %v2345 = vmul.f32 %v2129, 0.5
      %v2346 = vmul.f32 %v2130, 0.5
      %v2347 = vmul.f32 %v2131, 0.5
      %v2348 = vadd.f32 %v2332, 1.0
      %v2349 = vadd.f32 %v2333, 1.0
      %v2350 = vadd.f32 %v2334, 1.0
      %v2351 = vadd.f32 %v2335, 1.0
      %v2352 = vadd.f32 %v2336, 1.0
      %v2353 = vadd.f32 %v2337, 1.0
      %v2354 = vadd.f32 %v2338, 1.0
      %v2355 = vadd.f32 %v2339, 1.0
      %v2356 = vmul.f32 %v2340, %v2348
      %v2357 = vmul.f32 %v2341, %v2349
      %v2358 = vmul.f32 %v2342, %v2350
      %v2359 = vmul.f32 %v2343, %v2351
      %v2360 = vmul.f32 %v2344, %v2352
      %v2361 = vmul.f32 %v2345, %v2353
      %v2362 = vmul.f32 %v2346, %v2354
      %v2363 = vmul.f32 %v2347, %v2355
      %2364 = vst [vmem:[%s146] sm:$0xff] %v2356
      %2365 = vst [vmem:[%s146 + $0x8] sm:$0xff] %v2357
      %2366 = vst [vmem:[%s146 + $0x10] sm:$0xff] %v2358
      %2367 = vst [vmem:[%s146 + $0x18] sm:$0xff] %v2359
      %2368 = vst [vmem:[%s146 + $0x20] sm:$0xff] %v2360
      %2369 = vst [vmem:[%s146 + $0x28] sm:$0xff] %v2361
      %2370 = vst [vmem:[%s146 + $0x30] sm:$0xff] %v2362
      %2371 = vst [vmem:[%s146 + $0x38] sm:$0xff] %v2363
      %s2372 = smul.u32 8, %s19
      %p2373 = scmp.lt.s32.totalorder %s18, 1
      %s2374 = scalar_select %p2373, %s18, 1
      %p2375 = scmp.lt.s32.totalorder %s2372, 7
      %s2376 = scalar_select %p2375, %s2372, 7
      %s2377 = smul.addr %s2374, 8
      %s2378 = sadd.s32 %s2376, %s2377
      %s2379 = smul.addr %s2378, 8
      %s2380 = scalar_lea.vmem %s3, %s2379
      // Predicated region
      $region63: #{_lambda_.1} parent=27 // pred_check
        %p2381 = pneg %p88
      $region64: #{_lambda_.1} parent=27 // pred_check_branch
        %2383 = sbr.rel (%p2381) target = $region66
      $region65: #{_lambda_.1} parent=27 // pred_region
        %s2384 = smul.u32 8, %s19
      $region66: #{_lambda_.1} parent=27 // pred_fallthru
        _
    $region28: #{_lambda_.1} parent=5 // pred_fallthru
      _
    %p2385 = scmp.le.s32.totalorder 2, %s9
    // Predicated region
    $region67: #{_lambda_.1} parent=5 // pred_check
      %p2386 = pneg %p2385
    $region68: #{_lambda_.1} parent=5 // pred_check_branch
      %2388 = sbr.rel (%p2386) target = $region70
    $region69: #{_lambda_.1} parent=5 // pred_region
      %s2389 = ssub.s32 %s9, 2
      // Predicated region
      $region71: #{_lambda_.1} parent=69 // pred_check
        %p2390 = pneg %p94
      $region72: #{_lambda_.1} parent=69 // pred_check_branch
        %2392 = sbr.rel (%p2390) target = $region74
      $region73: #{_lambda_.1} parent=69 // pred_region
        %s2393 = smul.u32 8, %s21
        %p2394 = scmp.lt.s32.totalorder %s20, 1
        %s2395 = scalar_select %p2394, %s20, 1
        %p2396 = scmp.lt.s32.totalorder %s2393, 7
        %s2397 = scalar_select %p2396, %s2393, 7
        %s2398 = smul.addr %s2395, 8
        %s2399 = sadd.s32 %s2397, %s2398
        %s2400 = smul.addr %s2399, 8
        %s2401 = scalar_lea.vmem %s3, %s2400
      $region74: #{_lambda_.1} parent=69 // pred_fallthru
        _
    $region70: #{_lambda_.1} parent=5 // pred_fallthru
      _
  $region6: #{_lambda_.1} parent=0 // loop_footer
    %s13 = sadd.s32 1, %s9
  $region7: #{_lambda_.1} parent=0 // loop_footer_branch
    %8 = sbr.rel target = $region3
  $region8: #{_lambda_.1} parent=0 // loop_exit
    _
  %2402 = vsyncmov [#allocation4]
  %s2403 = vpop.sfrf %2402
  %p2404 = scmp.eq.s32.totalorder %s2403, 0
  %p2405 = pneg %p2404
  %2407 = shalt.err (%p2405)

</llo_original>
